<compile_context>
chip_gen: v6e
topology: v6e:2x2x1
jax: 0.10.0
libtpu: 0.0.40
codegen_flags: <defaults>
</compile_context>

<pallas_src>
import functools

import jax
import jax.numpy as jnp
from jax.experimental import pallas as pl
from jax.experimental.pallas import tpu as pltpu

EPS = 1e-20
ENC = 32      # encoder hidden dim
HEAD = 64     # selfsim_fc output dim
TEMP = 0.07
KPAD = 32     # im2col contraction dim, zero-padded 27 -> 32 (lane aligned)


# ----------------------------------------------------------------------------
# Kernel 1 (fused encoder head), tiled over frames:
#   im2col patches (rows, 32) -> conv matmul + bias + ReLU -> spatial mean pool
#   -> selfsim_fc -> L2 normalize (rsqrt on EUP).
# ----------------------------------------------------------------------------
def _encode_kernel(x_ref, cw_ref, cb_ref, fw_ref, fb_ref, o_ref, *, hw):
    x = x_ref[...]                                             # (tf*hw, KPAD) bf16
    feat = jnp.dot(x, cw_ref[...], preferred_element_type=jnp.float32)
    feat = jnp.maximum(feat + cb_ref[...], 0.0)                # (tf*hw, ENC) f32
    tf = x.shape[0] // hw
    pooled = jnp.mean(feat.reshape(tf, hw, feat.shape[-1]), axis=1)   # (tf, ENC)
    y = jnp.dot(pooled.astype(jnp.bfloat16), fw_ref[...],
                preferred_element_type=jnp.float32)
    y = y + fb_ref[...]                                        # (tf, HEAD) f32
    ss = jnp.sum(y * y, axis=-1, keepdims=True)
    # F.normalize(p=2, dim=1) (eps=1e-12); rsqrt runs on the otherwise-idle EUP.
    o_ref[...] = y * jax.lax.rsqrt(jnp.maximum(ss, 1e-24))


def _pick_frame_tile(n_frames, hw, target_rows=2048):
    # ~512-2048 patch rows per tile keeps the HBM pipe full while staying tiny
    # in VMEM (rows x 128 lanes x 2B x 2 buffers ~ 1 MiB), safe on v7x's 64 MiB.
    tf = min(n_frames, max(1, target_rows // hw))
    if tf >= n_frames:
        return n_frames
    tf = (tf // 8) * 8                       # keep (tf, HEAD) output blocks legal
    if tf == 0 or (tf * hw) % 8 != 0:
        return n_frames
    return tf


def encode(patches, conv_w, conv_b, fc_w, fc_b, *, hw, n_frames):
    MR, K = patches.shape
    assert MR == n_frames * hw
    enc = conv_w.shape[1]
    head = fc_w.shape[1]
    tile_f = _pick_frame_tile(n_frames, hw)
    kernel = functools.partial(_encode_kernel, hw=hw)
    return pl.pallas_call(
        kernel,
        out_shape=jax.ShapeDtypeStruct((n_frames, head), jnp.float32),
        grid=(pl.cdiv(n_frames, tile_f),),
        in_specs=[
            pl.BlockSpec((tile_f * hw, K), lambda i: (i, 0)),
            pl.BlockSpec((K, enc), lambda i: (0, 0)),
            pl.BlockSpec((1, enc), lambda i: (0, 0)),
            pl.BlockSpec((enc, head), lambda i: (0, 0)),
            pl.BlockSpec((1, head), lambda i: (0, 0)),
        ],
        out_specs=pl.BlockSpec((tile_f, head), lambda i: (i, 0)),
        compiler_params=pltpu.CompilerParams(
            dimension_semantics=("parallel",),
            vmem_limit_bytes=32 * 1024 * 1024),
    )(patches, conv_w, conv_b, fc_w, fc_b)


# ----------------------------------------------------------------------------
# Kernel 2 (fused affinity + cycle walk), blocked over the batch dimension:
#   per batch element b (batched einsums over a b_tile block):
#     A[i]   = q_i q_{i+1}^T / temp
#     A12[i] = row-softmax(A[i]);  A21[i]^T = col-softmax(A[i])
#     AA_i   = (A12_0 ... A12_i) (A21_i ... A21_0)  via running prefix P and
#              transposed suffix Sg  (AA_i = P_i @ Sg_i^T)
#     CE of log(AA_i + EPS) vs identity targets; first-argmax accuracy.
#   ce/acc are summed over N in-kernel; one (b_tile, 1, 2*(T-2)) store.
# ----------------------------------------------------------------------------
def _walk_kernel(q_ref, o_ref, *, inv_temp):
    q = q_ref[...]                                             # (bt, T, N, C) f32
    bt, T, N, _ = q.shape

    def row_softmax(z):                                        # softmax over lanes
        m = jnp.max(z, axis=-1, keepdims=True)
        e = jnp.exp(z - m)
        return e * pl.reciprocal(jnp.sum(e, axis=-1, keepdims=True), approx=True)

    def col_softmax(z):                                        # softmax over axis 1
        m = jnp.max(z, axis=1, keepdims=True)
        e = jnp.exp(z - m)
        return e * pl.reciprocal(jnp.sum(e, axis=1, keepdims=True), approx=True)

    def affinity(i):                                           # (bt, N, N) f32
        return jnp.einsum('bnc,bmc->bnm', q[:, i], q[:, i + 1],
                          preferred_element_type=jnp.float32) * inv_temp

    s0 = affinity(0)
    P = row_softmax(s0)            # prefix product of A12
    Sg = col_softmax(s0)           # transposed suffix product of A21 (= A21_0^T)

    row_ids = jax.lax.broadcasted_iota(jnp.int32, (bt, N, N), 1)
    col_ids = jax.lax.broadcasted_iota(jnp.int32, (bt, N, N), 2)
    row_idx = jax.lax.broadcasted_iota(jnp.int32, (bt, N, 1), 1)

    ce_cols, acc_cols = [], []
    for i in range(1, T - 1):
        s = affinity(i)
        P = jnp.einsum('bnk,bkm->bnm', P, row_softmax(s),
                       preferred_element_type=jnp.float32)
        Sg = jnp.einsum('bnk,bkm->bnm', Sg, col_softmax(s),
                        preferred_element_type=jnp.float32)
        AA = jnp.einsum('bnk,bmk->bnm', P, Sg,                 # P @ Sg^T, f32
                        preferred_element_type=jnp.float32)

        logits = jnp.log(AA + EPS)
        m = jnp.max(logits, axis=-1, keepdims=True)
        lse = m + jnp.log(jnp.sum(jnp.exp(logits - m), axis=-1, keepdims=True))
        diag = jnp.sum(jnp.where(row_ids == col_ids, logits, 0.0),
                       axis=-1, keepdims=True)
        ce_cols.append(jnp.sum(lse - diag, axis=1))            # (bt, 1) sum over N

        # accuracy: first argmax index == row index (torch.argmax tie-breaking)
        is_max = logits >= m
        first_idx = jnp.min(jnp.where(is_max, col_ids, N), axis=-1, keepdims=True)
        acc_cols.append(jnp.sum((first_idx == row_idx).astype(jnp.float32), axis=1))

    stats = jnp.concatenate(ce_cols + acc_cols, axis=-1)       # (bt, 2*(T-2))
    o_ref[...] = stats[:, None, :]


def _pick_b_tile(B):
    if B <= 2:
        return 1                 # >=2 grid blocks when B >= 2 (v7x megacore)
    return min(8, max(1, B // 2))


def walk_loss(qT, temperature):
    B, T, N, C = qT.shape
    assert T >= 3
    n_out = T - 2
    b_tile = _pick_b_tile(B)
    kernel = functools.partial(_walk_kernel, inv_temp=1.0 / temperature)
    out = pl.pallas_call(
        kernel,
        out_shape=jax.ShapeDtypeStruct((B, 1, 2 * n_out), jnp.float32),
        grid=(pl.cdiv(B, b_tile),),
        in_specs=[pl.BlockSpec((b_tile, T, N, C), lambda b: (b, 0, 0, 0))],
        out_specs=pl.BlockSpec((b_tile, 1, 2 * n_out), lambda b: (b, 0, 0)),
        compiler_params=pltpu.CompilerParams(
            dimension_semantics=("parallel",)),
    )(qT)
    return out[:, 0, :]                                        # (B, 2*(T-2))


# ----------------------------------------------------------------------------
# Glue: im2col for the 3x3 / stride-2 / pad-1 encoder conv (host-side XLA ops),
# with the contraction dim zero-padded 27 -> 32 for aligned lane loads.
# TODO(synk): the im2col patch slab is still materialized in HBM by XLA; fully
#             fusing the patch extraction into the encoder kernel (in-kernel
#             strided phase slicing) is left out to keep the lowering robust.
# ----------------------------------------------------------------------------
def im2col(x, k=3, s=2, p=1, k_pad=KPAD):
    M, C, H, W = x.shape
    xp = jnp.pad(x, ((0, 0), (0, 0), (p, p), (p, p)))
    Ho = (H + 2 * p - k) // s + 1
    Wo = (W + 2 * p - k) // s + 1
    cols = []
    for ki in range(k):
        for kj in range(k):
            cols.append(xp[:, :, ki:ki + s * Ho:s, kj:kj + s * Wo:s])
    patches = jnp.stack(cols, axis=2)                       # (M, C, k*k, Ho, Wo)
    patches = patches.transpose(0, 3, 4, 1, 2).reshape(M * Ho * Wo, C * k * k)
    if k_pad > C * k * k:
        patches = jnp.pad(patches, ((0, 0), (0, k_pad - C * k * k)))
    return patches, Ho, Wo


# ----------------------------------------------------------------------------
# Full CRW forward (flip=False, sk_targets=False, dropout rates = 0)
# ----------------------------------------------------------------------------
def crw_forward(x, params, temperature=TEMP):
    B, T, CC, H, W = x.shape
    N, C = CC // 3, 3

    # x: B x T x N*C x H x W  ->  B x N x C x T x H x W  (module layout)
    x6 = x.transpose(0, 2, 1, 3, 4).reshape(B, N, C, T, H, W)

    # ----- pixels_to_nodes: fused conv + pool + fc + normalize (Pallas) ------
    frames = x6.transpose(0, 1, 3, 2, 4, 5).reshape(B * N * T, C, H, W)
    patches, Ho, Wo = im2col(frames)                          # (B*N*T*Ho*Wo, 32)

    conv_w = params['conv_w'].reshape(ENC, C * 9).T           # (27, ENC)
    conv_w = jnp.pad(conv_w, ((0, KPAD - C * 9), (0, 0))).astype(jnp.bfloat16)
    fc_w = params['fc_w'].T.astype(jnp.bfloat16)              # (ENC, HEAD)
    feats = encode(patches.astype(jnp.bfloat16), conv_w,
                   params['conv_b'][None, :], fc_w,
                   params['fc_b'][None, :],
                   hw=Ho * Wo, n_frames=B * N * T)            # (B*N*T, HEAD) f32

    Cq = feats.shape[-1]
    q = feats.reshape(B, N, T, Cq).transpose(0, 3, 2, 1)      # (B, C, T, N)
    qT = feats.reshape(B, N, T, Cq).transpose(0, 2, 1, 3)     # (B, T, N, C) f32

    # ----- affinity + stochastic matrices + cycle walks + CE/acc (Pallas) ----
    n_out = T - 2
    stats = walk_loss(qT, temperature)                        # (B, 2*(T-2)) sums
    sums = jnp.sum(stats, axis=0)                             # (2*(T-2),)
    losses = sums[:n_out] / (B * N)                           # per-step CE means
    accs = sums[n_out:] / (B * N)                             # per-step accuracies
    loss = jnp.reshape(jnp.sum(losses) / max(1, n_out), (1,))

    diags = {}
    for i in range(1, T - 1):
        diags[f'{H} xent cyc r{i}'] = losses[i - 1]
        diags[f'{H} acc cyc r{i}'] = accs[i - 1]
    return q, loss, diags


if __name__ == "__main__":
    key = jax.random.PRNGKey(0)
    kx, kw1, kb1, kw2, kb2 = jax.random.split(key, 5)

    B, T, N, H, W = 2, 4, 8, 16, 16                          # N patches, C=3 each
    x = jax.random.normal(kx, (B, T, N * 3, H, W), jnp.float32)

    params = {
        'conv_w': jax.random.normal(kw1, (ENC, 3, 3, 3), jnp.float32) * 0.2,
        'conv_b': jax.random.normal(kb1, (ENC,), jnp.float32) * 0.05,
        'fc_w': jax.random.normal(kw2, (HEAD, ENC), jnp.float32) * 0.2,
        'fc_b': jax.random.normal(kb2, (HEAD,), jnp.float32) * 0.05,
    }

    q, loss, diags = jax.jit(crw_forward)(x, params)
    jax.block_until_ready((q, loss, diags))
    assert q.shape == (B, HEAD, T, N)
    assert loss.shape == (1,)
    print("KERNEL_OK")
</pallas_src>

<mosaic_0001>
module attributes {stable_mosaic.version = 11 : i64} {
  func.func @_encode_kernel(%arg0: i32, %arg1: memref<2048x32xbf16, #tpu.memory_space<vmem>>, %arg2: memref<32x32xbf16, #tpu.memory_space<vmem>>, %arg3: memref<1x32xf32, #tpu.memory_space<vmem>>, %arg4: memref<32x64xbf16, #tpu.memory_space<vmem>>, %arg5: memref<1x64xf32, #tpu.memory_space<vmem>>, %arg6: memref<32x64xf32, #tpu.memory_space<vmem>>) attributes {dimension_semantics = [#tpu.dimension_semantics<parallel>], iteration_bounds = array<i64: 2>, scalar_prefetch = 0 : i64, scratch_operands = 0 : i64, tpu.core_type = #tpu.core_type<tc>, window_params = [{transform_indices = @transform_0, window_bounds = array<i64: 2048, 32>}, {pipeline_mode = #tpu.pipeline_mode<synchronous>, transform_indices = @transform_1, window_bounds = array<i64: 32, 32>}, {pipeline_mode = #tpu.pipeline_mode<synchronous>, transform_indices = @transform_2, window_bounds = array<i64: 1, 32>}, {pipeline_mode = #tpu.pipeline_mode<synchronous>, transform_indices = @transform_3, window_bounds = array<i64: 32, 64>}, {pipeline_mode = #tpu.pipeline_mode<synchronous>, transform_indices = @transform_4, window_bounds = array<i64: 1, 64>}, {transform_indices = @transform_5, window_bounds = array<i64: 32, 64>}]} {
    %c0 = arith.constant 0 : index
    %c0_0 = arith.constant 0 : index
    %0 = vector.load %arg1[%c0, %c0_0] : memref<2048x32xbf16, #tpu.memory_space<vmem>>, vector<2048x32xbf16>
    %c0_1 = arith.constant 0 : index
    %c0_2 = arith.constant 0 : index
    %1 = vector.load %arg2[%c0_1, %c0_2] : memref<32x32xbf16, #tpu.memory_space<vmem>>, vector<32x32xbf16>
    %cst = arith.constant dense<0.000000e+00> : vector<2048x32xf32>
    %2 = tpu.matmul %0, %1, %cst {dimension_numbers = #tpu.dot_dimension_numbers<[1], [0], [0], [1], [0, 0, 1, 1], [], []>} : vector<2048x32xbf16>, vector<32x32xbf16>, vector<2048x32xf32> -> vector<2048x32xf32>
    %c0_3 = arith.constant 0 : index
    %c0_4 = arith.constant 0 : index
    %3 = vector.load %arg3[%c0_3, %c0_4] : memref<1x32xf32, #tpu.memory_space<vmem>>, vector<1x32xf32>
    %4 = vector.broadcast %3 : vector<1x32xf32> to vector<2048x32xf32>
    %5 = arith.addf %2, %4 : vector<2048x32xf32>
    %cst_5 = arith.constant 0.000000e+00 : f32
    %6 = vector.broadcast %cst_5 : f32 to vector<2048x32xf32>
    %7 = arith.maximumf %5, %6 : vector<2048x32xf32>
    %8 = vector.shape_cast %7 : vector<2048x32xf32> to vector<32x64x32xf32>
    %cst_6 = arith.constant dense<0.000000e+00> : vector<32x32xf32>
    %9 = vector.multi_reduction <add>, %8, %cst_6 [1] : vector<32x64x32xf32> to vector<32x32xf32>
    %cst_7 = arith.constant 6.400000e+01 : f32
    %10 = vector.broadcast %cst_7 : f32 to vector<32x32xf32>
    %11 = arith.divf %9, %10 : vector<32x32xf32>
    %12 = arith.truncf %11 : vector<32x32xf32> to vector<32x32xbf16>
    %c0_8 = arith.constant 0 : index
    %c0_9 = arith.constant 0 : index
    %13 = vector.load %arg4[%c0_8, %c0_9] : memref<32x64xbf16, #tpu.memory_space<vmem>>, vector<32x64xbf16>
    %cst_10 = arith.constant dense<0.000000e+00> : vector<32x64xf32>
    %14 = tpu.matmul %12, %13, %cst_10 {dimension_numbers = #tpu.dot_dimension_numbers<[1], [0], [0], [1], [0, 0, 1, 1], [], []>} : vector<32x32xbf16>, vector<32x64xbf16>, vector<32x64xf32> -> vector<32x64xf32>
    %c0_11 = arith.constant 0 : index
    %c0_12 = arith.constant 0 : index
    %15 = vector.load %arg5[%c0_11, %c0_12] : memref<1x64xf32, #tpu.memory_space<vmem>>, vector<1x64xf32>
    %16 = vector.broadcast %15 : vector<1x64xf32> to vector<32x64xf32>
    %17 = arith.addf %14, %16 : vector<32x64xf32>
    %18 = arith.mulf %17, %17 : vector<32x64xf32>
    %cst_13 = arith.constant dense<0.000000e+00> : vector<32xf32>
    %19 = vector.multi_reduction <add>, %18, %cst_13 [1] : vector<32x64xf32> to vector<32xf32>
    %20 = vector.shape_cast %19 : vector<32xf32> to vector<32x1xf32>
    %cst_14 = arith.constant 1.000000e-24 : f32
    %21 = vector.broadcast %cst_14 : f32 to vector<32x1xf32>
    %22 = arith.maximumf %20, %21 : vector<32x1xf32>
    %23 = math.rsqrt %22 : vector<32x1xf32>
    %24 = vector.broadcast %23 : vector<32x1xf32> to vector<32x64xf32>
    %25 = arith.mulf %17, %24 : vector<32x64xf32>
    %c0_15 = arith.constant 0 : index
    %c0_16 = arith.constant 0 : index
    %26 = vector.load %arg6[%c0_15, %c0_16] : memref<32x64xf32, #tpu.memory_space<vmem>>, vector<32x64xf32>
    tpu.vector_store %arg6[%c0_15, %c0_16], %25 {strides = array<i32>} : memref<32x64xf32, #tpu.memory_space<vmem>>, vector<32x64xf32>,
    return
  }
  func.func @transform_0(%arg0: i32) -> (i32, i32) {
    %c0_i32 = arith.constant 0 : i32
    %c0_i32_0 = arith.constant 0 : i32
    return %arg0, %c0_i32 : i32, i32
  }
  func.func @transform_1(%arg0: i32) -> (i32, i32) {
    %c0_i32 = arith.constant 0 : i32
    %c0_i32_0 = arith.constant 0 : i32
    %c0_i32_1 = arith.constant 0 : i32
    return %c0_i32, %c0_i32_0 : i32, i32
  }
  func.func @transform_2(%arg0: i32) -> (i32, i32) {
    %c0_i32 = arith.constant 0 : i32
    %c0_i32_0 = arith.constant 0 : i32
    %c0_i32_1 = arith.constant 0 : i32
    return %c0_i32, %c0_i32_0 : i32, i32
  }
  func.func @transform_3(%arg0: i32) -> (i32, i32) {
    %c0_i32 = arith.constant 0 : i32
    %c0_i32_0 = arith.constant 0 : i32
    %c0_i32_1 = arith.constant 0 : i32
    return %c0_i32, %c0_i32_0 : i32, i32
  }
  func.func @transform_4(%arg0: i32) -> (i32, i32) {
    %c0_i32 = arith.constant 0 : i32
    %c0_i32_0 = arith.constant 0 : i32
    %c0_i32_1 = arith.constant 0 : i32
    return %c0_i32, %c0_i32_0 : i32, i32
  }
  func.func @transform_5(%arg0: i32) -> (i32, i32) {
    %c0_i32 = arith.constant 0 : i32
    %c0_i32_0 = arith.constant 0 : i32
    return %arg0, %c0_i32 : i32, i32
  }
}

module attributes {stable_mosaic.version = 11 : i64} {
  func.func @_walk_kernel(%arg0: i32, %arg1: memref<1x4x8x64xf32, #tpu.memory_space<vmem>>, %arg2: memref<1x1x4xf32, #tpu.memory_space<vmem>>) attributes {dimension_semantics = [#tpu.dimension_semantics<parallel>], iteration_bounds = array<i64: 2>, scalar_prefetch = 0 : i64, scratch_operands = 0 : i64, tpu.core_type = #tpu.core_type<tc>, window_params = [{transform_indices = @transform_0, window_bounds = array<i64: 1, 4, 8, 64>}, {transform_indices = @transform_1, window_bounds = array<i64: 1, 1, 4>}]} {
    %c0 = arith.constant 0 : index
    %c0_0 = arith.constant 0 : index
    %c0_1 = arith.constant 0 : index
    %c0_2 = arith.constant 0 : index
    %0 = vector.load %arg1[%c0, %c0_0, %c0_1, %c0_2] : memref<1x4x8x64xf32, #tpu.memory_space<vmem>>, vector<1x4x8x64xf32>
    %1 = vector.extract_strided_slice %0 {offsets = [0, 0, 0, 0], sizes = [1, 1, 8, 64], strides = [1, 1, 1, 1]} : vector<1x4x8x64xf32> to vector<1x1x8x64xf32>
    %2 = vector.shape_cast %1 : vector<1x1x8x64xf32> to vector<1x8x64xf32>
    %3 = vector.extract_strided_slice %0 {offsets = [0, 1, 0, 0], sizes = [1, 1, 8, 64], strides = [1, 1, 1, 1]} : vector<1x4x8x64xf32> to vector<1x1x8x64xf32>
    %4 = vector.shape_cast %3 : vector<1x1x8x64xf32> to vector<1x8x64xf32>
    "tpu.trace_start"() <{level = 10 : i32, message = "bnc,bmc->bnm"}> : () -> ()
    %cst = arith.constant dense<0.000000e+00> : vector<1x8x8xf32>
    %5 = tpu.matmul %2, %4, %cst {dimension_numbers = #tpu.dot_dimension_numbers<[2], [2], [1], [1], [0, 0, 0, 1, 1, 1], [0], [0]>} : vector<1x8x64xf32>, vector<1x8x64xf32>, vector<1x8x8xf32> -> vector<1x8x8xf32>
    "tpu.trace_stop"() : () -> ()
    %cst_3 = arith.constant 14.2857141 : f32
    %6 = vector.broadcast %cst_3 : f32 to vector<1x8x8xf32>
    %7 = arith.mulf %5, %6 : vector<1x8x8xf32>
    %cst_4 = arith.constant dense<0xFF800000> : vector<1x8xf32>
    %8 = vector.multi_reduction <maximumf>, %7, %cst_4 [2] : vector<1x8x8xf32> to vector<1x8xf32>
    %9 = vector.shape_cast %8 : vector<1x8xf32> to vector<1x8x1xf32>
    %10 = vector.broadcast %9 : vector<1x8x1xf32> to vector<1x8x8xf32>
    %11 = arith.subf %7, %10 : vector<1x8x8xf32>
    %12 = math.exp %11 : vector<1x8x8xf32>
    %cst_5 = arith.constant dense<0.000000e+00> : vector<1x8xf32>
    %13 = vector.multi_reduction <add>, %12, %cst_5 [2] : vector<1x8x8xf32> to vector<1x8xf32>
    %14 = vector.shape_cast %13 : vector<1x8xf32> to vector<1x8x1xf32>
    %15 = tpu.reciprocal %14 {approx = true} : vector<1x8x1xf32> -> vector<1x8x1xf32>
    %16 = vector.broadcast %15 : vector<1x8x1xf32> to vector<1x8x8xf32>
    %17 = arith.mulf %12, %16 : vector<1x8x8xf32>
    %cst_6 = arith.constant dense<0xFF800000> : vector<1x8xf32>
    %18 = vector.multi_reduction <maximumf>, %7, %cst_6 [1] : vector<1x8x8xf32> to vector<1x8xf32>
    %19 = vector.shape_cast %18 : vector<1x8xf32> to vector<1x1x8xf32>
    %20 = vector.broadcast %19 : vector<1x1x8xf32> to vector<1x8x8xf32>
    %21 = arith.subf %7, %20 : vector<1x8x8xf32>
    %22 = math.exp %21 : vector<1x8x8xf32>
    %cst_7 = arith.constant dense<0.000000e+00> : vector<1x8xf32>
    %23 = vector.multi_reduction <add>, %22, %cst_7 [1] : vector<1x8x8xf32> to vector<1x8xf32>
    %24 = vector.shape_cast %23 : vector<1x8xf32> to vector<1x1x8xf32>
    %25 = tpu.reciprocal %24 {approx = true} : vector<1x1x8xf32> -> vector<1x1x8xf32>
    %26 = vector.broadcast %25 : vector<1x1x8xf32> to vector<1x8x8xf32>
    %27 = arith.mulf %22, %26 : vector<1x8x8xf32>
    %28 = tpu.iota {dimensions = array<i32: 1>} : vector<1x8x8xi32>
    %29 = tpu.iota {dimensions = array<i32: 2>} : vector<1x8x8xi32>
    %30 = tpu.iota {dimensions = array<i32: 1>} : vector<1x8x1xi32>
    %31 = vector.extract_strided_slice %0 {offsets = [0, 1, 0, 0], sizes = [1, 1, 8, 64], strides = [1, 1, 1, 1]} : vector<1x4x8x64xf32> to vector<1x1x8x64xf32>
    %32 = vector.shape_cast %31 : vector<1x1x8x64xf32> to vector<1x8x64xf32>
    %33 = vector.extract_strided_slice %0 {offsets = [0, 2, 0, 0], sizes = [1, 1, 8, 64], strides = [1, 1, 1, 1]} : vector<1x4x8x64xf32> to vector<1x1x8x64xf32>
    %34 = vector.shape_cast %33 : vector<1x1x8x64xf32> to vector<1x8x64xf32>
    "tpu.trace_start"() <{level = 10 : i32, message = "bnc,bmc->bnm"}> : () -> ()
    %cst_8 = arith.constant dense<0.000000e+00> : vector<1x8x8xf32>
    %35 = tpu.matmul %32, %34, %cst_8 {dimension_numbers = #tpu.dot_dimension_numbers<[2], [2], [1], [1], [0, 0, 0, 1, 1, 1], [0], [0]>} : vector<1x8x64xf32>, vector<1x8x64xf32>, vector<1x8x8xf32> -> vector<1x8x8xf32>
    "tpu.trace_stop"() : () -> ()
    %cst_9 = arith.constant 14.2857141 : f32
    %36 = vector.broadcast %cst_9 : f32 to vector<1x8x8xf32>
    %37 = arith.mulf %35, %36 : vector<1x8x8xf32>
    %cst_10 = arith.constant dense<0xFF800000> : vector<1x8xf32>
    %38 = vector.multi_reduction <maximumf>, %37, %cst_10 [2] : vector<1x8x8xf32> to vector<1x8xf32>
    %39 = vector.shape_cast %38 : vector<1x8xf32> to vector<1x8x1xf32>
    %40 = vector.broadcast %39 : vector<1x8x1xf32> to vector<1x8x8xf32>
    %41 = arith.subf %37, %40 : vector<1x8x8xf32>
    %42 = math.exp %41 : vector<1x8x8xf32>
    %cst_11 = arith.constant dense<0.000000e+00> : vector<1x8xf32>
    %43 = vector.multi_reduction <add>, %42, %cst_11 [2] : vector<1x8x8xf32> to vector<1x8xf32>
    %44 = vector.shape_cast %43 : vector<1x8xf32> to vector<1x8x1xf32>
    %45 = tpu.reciprocal %44 {approx = true} : vector<1x8x1xf32> -> vector<1x8x1xf32>
    %46 = vector.broadcast %45 : vector<1x8x1xf32> to vector<1x8x8xf32>
    %47 = arith.mulf %42, %46 : vector<1x8x8xf32>
    "tpu.trace_start"() <{level = 10 : i32, message = "bnk,bkm->bnm"}> : () -> ()
    %cst_12 = arith.constant dense<0.000000e+00> : vector<1x8x8xf32>
    %48 = tpu.matmul %17, %47, %cst_12 {dimension_numbers = #tpu.dot_dimension_numbers<[2], [1], [1], [2], [0, 0, 0, 1, 1, 2], [0], [0]>} : vector<1x8x8xf32>, vector<1x8x8xf32>, vector<1x8x8xf32> -> vector<1x8x8xf32>
    "tpu.trace_stop"() : () -> ()
    %cst_13 = arith.constant dense<0xFF800000> : vector<1x8xf32>
    %49 = vector.multi_reduction <maximumf>, %37, %cst_13 [1] : vector<1x8x8xf32> to vector<1x8xf32>
    %50 = vector.shape_cast %49 : vector<1x8xf32> to vector<1x1x8xf32>
    %51 = vector.broadcast %50 : vector<1x1x8xf32> to vector<1x8x8xf32>
    %52 = arith.subf %37, %51 : vector<1x8x8xf32>
    %53 = math.exp %52 : vector<1x8x8xf32>
    %cst_14 = arith.constant dense<0.000000e+00> : vector<1x8xf32>
    %54 = vector.multi_reduction <add>, %53, %cst_14 [1] : vector<1x8x8xf32> to vector<1x8xf32>
    %55 = vector.shape_cast %54 : vector<1x8xf32> to vector<1x1x8xf32>
    %56 = tpu.reciprocal %55 {approx = true} : vector<1x1x8xf32> -> vector<1x1x8xf32>
    %57 = vector.broadcast %56 : vector<1x1x8xf32> to vector<1x8x8xf32>
    %58 = arith.mulf %53, %57 : vector<1x8x8xf32>
    "tpu.trace_start"() <{level = 10 : i32, message = "bnk,bkm->bnm"}> : () -> ()
    %cst_15 = arith.constant dense<0.000000e+00> : vector<1x8x8xf32>
    %59 = tpu.matmul %27, %58, %cst_15 {dimension_numbers = #tpu.dot_dimension_numbers<[2], [1], [1], [2], [0, 0, 0, 1, 1, 2], [0], [0]>} : vector<1x8x8xf32>, vector<1x8x8xf32>, vector<1x8x8xf32> -> vector<1x8x8xf32>
    "tpu.trace_stop"() : () -> ()
    "tpu.trace_start"() <{level = 10 : i32, message = "bnk,bmk->bnm"}> : () -> ()
    %cst_16 = arith.constant dense<0.000000e+00> : vector<1x8x8xf32>
    %60 = tpu.matmul %48, %59, %cst_16 {dimension_numbers = #tpu.dot_dimension_numbers<[2], [2], [1], [1], [0, 0, 0, 1, 1, 1], [0], [0]>} : vector<1x8x8xf32>, vector<1x8x8xf32>, vector<1x8x8xf32> -> vector<1x8x8xf32>
    "tpu.trace_stop"() : () -> ()
    %cst_17 = arith.constant 9.99999968E-21 : f32
    %61 = vector.broadcast %cst_17 : f32 to vector<1x8x8xf32>
    %62 = arith.addf %60, %61 : vector<1x8x8xf32>
    %63 = math.log %62 : vector<1x8x8xf32>
    %cst_18 = arith.constant dense<0xFF800000> : vector<1x8xf32>
    %64 = vector.multi_reduction <maximumf>, %63, %cst_18 [2] : vector<1x8x8xf32> to vector<1x8xf32>
    %65 = vector.shape_cast %64 : vector<1x8xf32> to vector<1x8x1xf32>
    %66 = vector.broadcast %65 : vector<1x8x1xf32> to vector<1x8x8xf32>
    %67 = arith.subf %63, %66 : vector<1x8x8xf32>
    %68 = math.exp %67 : vector<1x8x8xf32>
    %cst_19 = arith.constant dense<0.000000e+00> : vector<1x8xf32>
    %69 = vector.multi_reduction <add>, %68, %cst_19 [2] : vector<1x8x8xf32> to vector<1x8xf32>
    %70 = vector.shape_cast %69 : vector<1x8xf32> to vector<1x8x1xf32>
    %71 = math.log %70 : vector<1x8x1xf32>
    %72 = arith.addf %65, %71 : vector<1x8x1xf32>
    %73 = arith.cmpi eq, %28, %29 : vector<1x8x8xi32>
    %cst_20 = arith.constant 0.000000e+00 : f32
    %74 = vector.broadcast %cst_20 : f32 to vector<1x8x8xf32>
    %75 = arith.select %73, %63, %74 : vector<1x8x8xi1>, vector<1x8x8xf32>
    %cst_21 = arith.constant dense<0.000000e+00> : vector<1x8xf32>
    %76 = vector.multi_reduction <add>, %75, %cst_21 [2] : vector<1x8x8xf32> to vector<1x8xf32>
    %77 = vector.shape_cast %76 : vector<1x8xf32> to vector<1x8x1xf32>
    %78 = arith.subf %72, %77 : vector<1x8x1xf32>
    %cst_22 = arith.constant dense<0.000000e+00> : vector<1x1xf32>
    %79 = vector.multi_reduction <add>, %78, %cst_22 [1] : vector<1x8x1xf32> to vector<1x1xf32>
    %80 = vector.broadcast %65 : vector<1x8x1xf32> to vector<1x8x8xf32>
    %81 = arith.cmpf oge, %63, %80 : vector<1x8x8xf32>
    %c8_i32 = arith.constant 8 : i32
    %82 = vector.broadcast %c8_i32 : i32 to vector<1x8x8xi32>
    %83 = arith.select %81, %29, %82 : vector<1x8x8xi1>, vector<1x8x8xi32>
    %cst_23 = arith.constant dense<2147483647> : vector<1x8xi32>
    %84 = vector.multi_reduction <minsi>, %83, %cst_23 [2] : vector<1x8x8xi32> to vector<1x8xi32>
    %85 = vector.shape_cast %84 : vector<1x8xi32> to vector<1x8x1xi32>
    %86 = arith.cmpi eq, %85, %30 : vector<1x8x1xi32>
    %87 = arith.extui %86 : vector<1x8x1xi1> to vector<1x8x1xi32>
    %88 = arith.sitofp %87 : vector<1x8x1xi32> to vector<1x8x1xf32>
    %cst_24 = arith.constant dense<0.000000e+00> : vector<1x1xf32>
    %89 = vector.multi_reduction <add>, %88, %cst_24 [1] : vector<1x8x1xf32> to vector<1x1xf32>
    %90 = vector.extract_strided_slice %0 {offsets = [0, 2, 0, 0], sizes = [1, 1, 8, 64], strides = [1, 1, 1, 1]} : vector<1x4x8x64xf32> to vector<1x1x8x64xf32>
    %91 = vector.shape_cast %90 : vector<1x1x8x64xf32> to vector<1x8x64xf32>
    %92 = vector.extract_strided_slice %0 {offsets = [0, 3, 0, 0], sizes = [1, 1, 8, 64], strides = [1, 1, 1, 1]} : vector<1x4x8x64xf32> to vector<1x1x8x64xf32>
    %93 = vector.shape_cast %92 : vector<1x1x8x64xf32> to vector<1x8x64xf32>
    "tpu.trace_start"() <{level = 10 : i32, message = "bnc,bmc->bnm"}> : () -> ()
    %cst_25 = arith.constant dense<0.000000e+00> : vector<1x8x8xf32>
    %94 = tpu.matmul %91, %93, %cst_25 {dimension_numbers = #tpu.dot_dimension_numbers<[2], [2], [1], [1], [0, 0, 0, 1, 1, 1], [0], [0]>} : vector<1x8x64xf32>, vector<1x8x64xf32>, vector<1x8x8xf32> -> vector<1x8x8xf32>
    "tpu.trace_stop"() : () -> ()
    %cst_26 = arith.constant 14.2857141 : f32
    %95 = vector.broadcast %cst_26 : f32 to vector<1x8x8xf32>
    %96 = arith.mulf %94, %95 : vector<1x8x8xf32>
    %cst_27 = arith.constant dense<0xFF800000> : vector<1x8xf32>
    %97 = vector.multi_reduction <maximumf>, %96, %cst_27 [2] : vector<1x8x8xf32> to vector<1x8xf32>
    %98 = vector.shape_cast %97 : vector<1x8xf32> to vector<1x8x1xf32>
    %99 = vector.broadcast %98 : vector<1x8x1xf32> to vector<1x8x8xf32>
    %100 = arith.subf %96, %99 : vector<1x8x8xf32>
    %101 = math.exp %100 : vector<1x8x8xf32>
    %cst_28 = arith.constant dense<0.000000e+00> : vector<1x8xf32>
    %102 = vector.multi_reduction <add>, %101, %cst_28 [2] : vector<1x8x8xf32> to vector<1x8xf32>
    %103 = vector.shape_cast %102 : vector<1x8xf32> to vector<1x8x1xf32>
    %104 = tpu.reciprocal %103 {approx = true} : vector<1x8x1xf32> -> vector<1x8x1xf32>
    %105 = vector.broadcast %104 : vector<1x8x1xf32> to vector<1x8x8xf32>
    %106 = arith.mulf %101, %105 : vector<1x8x8xf32>
    "tpu.trace_start"() <{level = 10 : i32, message = "bnk,bkm->bnm"}> : () -> ()
    %cst_29 = arith.constant dense<0.000000e+00> : vector<1x8x8xf32>
    %107 = tpu.matmul %48, %106, %cst_29 {dimension_numbers = #tpu.dot_dimension_numbers<[2], [1], [1], [2], [0, 0, 0, 1, 1, 2], [0], [0]>} : vector<1x8x8xf32>, vector<1x8x8xf32>, vector<1x8x8xf32> -> vector<1x8x8xf32>
    "tpu.trace_stop"() : () -> ()
    %cst_30 = arith.constant dense<0xFF800000> : vector<1x8xf32>
    %108 = vector.multi_reduction <maximumf>, %96, %cst_30 [1] : vector<1x8x8xf32> to vector<1x8xf32>
    %109 = vector.shape_cast %108 : vector<1x8xf32> to vector<1x1x8xf32>
    %110 = vector.broadcast %109 : vector<1x1x8xf32> to vector<1x8x8xf32>
    %111 = arith.subf %96, %110 : vector<1x8x8xf32>
    %112 = math.exp %111 : vector<1x8x8xf32>
    %cst_31 = arith.constant dense<0.000000e+00> : vector<1x8xf32>
    %113 = vector.multi_reduction <add>, %112, %cst_31 [1] : vector<1x8x8xf32> to vector<1x8xf32>
    %114 = vector.shape_cast %113 : vector<1x8xf32> to vector<1x1x8xf32>
    %115 = tpu.reciprocal %114 {approx = true} : vector<1x1x8xf32> -> vector<1x1x8xf32>
    %116 = vector.broadcast %115 : vector<1x1x8xf32> to vector<1x8x8xf32>
    %117 = arith.mulf %112, %116 : vector<1x8x8xf32>
    "tpu.trace_start"() <{level = 10 : i32, message = "bnk,bkm->bnm"}> : () -> ()
    %cst_32 = arith.constant dense<0.000000e+00> : vector<1x8x8xf32>
    %118 = tpu.matmul %59, %117, %cst_32 {dimension_numbers = #tpu.dot_dimension_numbers<[2], [1], [1], [2], [0, 0, 0, 1, 1, 2], [0], [0]>} : vector<1x8x8xf32>, vector<1x8x8xf32>, vector<1x8x8xf32> -> vector<1x8x8xf32>
    "tpu.trace_stop"() : () -> ()
    "tpu.trace_start"() <{level = 10 : i32, message = "bnk,bmk->bnm"}> : () -> ()
    %cst_33 = arith.constant dense<0.000000e+00> : vector<1x8x8xf32>
    %119 = tpu.matmul %107, %118, %cst_33 {dimension_numbers = #tpu.dot_dimension_numbers<[2], [2], [1], [1], [0, 0, 0, 1, 1, 1], [0], [0]>} : vector<1x8x8xf32>, vector<1x8x8xf32>, vector<1x8x8xf32> -> vector<1x8x8xf32>
    "tpu.trace_stop"() : () -> ()
    %cst_34 = arith.constant 9.99999968E-21 : f32
    %120 = vector.broadcast %cst_34 : f32 to vector<1x8x8xf32>
    %121 = arith.addf %119, %120 : vector<1x8x8xf32>
    %122 = math.log %121 : vector<1x8x8xf32>
    %cst_35 = arith.constant dense<0xFF800000> : vector<1x8xf32>
    %123 = vector.multi_reduction <maximumf>, %122, %cst_35 [2] : vector<1x8x8xf32> to vector<1x8xf32>
    %124 = vector.shape_cast %123 : vector<1x8xf32> to vector<1x8x1xf32>
    %125 = vector.broadcast %124 : vector<1x8x1xf32> to vector<1x8x8xf32>
    %126 = arith.subf %122, %125 : vector<1x8x8xf32>
    %127 = math.exp %126 : vector<1x8x8xf32>
    %cst_36 = arith.constant dense<0.000000e+00> : vector<1x8xf32>
    %128 = vector.multi_reduction <add>, %127, %cst_36 [2] : vector<1x8x8xf32> to vector<1x8xf32>
    %129 = vector.shape_cast %128 : vector<1x8xf32> to vector<1x8x1xf32>
    %130 = math.log %129 : vector<1x8x1xf32>
    %131 = arith.addf %124, %130 : vector<1x8x1xf32>
    %132 = arith.cmpi eq, %28, %29 : vector<1x8x8xi32>
    %cst_37 = arith.constant 0.000000e+00 : f32
    %133 = vector.broadcast %cst_37 : f32 to vector<1x8x8xf32>
    %134 = arith.select %132, %122, %133 : vector<1x8x8xi1>, vector<1x8x8xf32>
    %cst_38 = arith.constant dense<0.000000e+00> : vector<1x8xf32>
    %135 = vector.multi_reduction <add>, %134, %cst_38 [2] : vector<1x8x8xf32> to vector<1x8xf32>
    %136 = vector.shape_cast %135 : vector<1x8xf32> to vector<1x8x1xf32>
    %137 = arith.subf %131, %136 : vector<1x8x1xf32>
    %cst_39 = arith.constant dense<0.000000e+00> : vector<1x1xf32>
    %138 = vector.multi_reduction <add>, %137, %cst_39 [1] : vector<1x8x1xf32> to vector<1x1xf32>
    %139 = vector.broadcast %124 : vector<1x8x1xf32> to vector<1x8x8xf32>
    %140 = arith.cmpf oge, %122, %139 : vector<1x8x8xf32>
    %c8_i32_40 = arith.constant 8 : i32
    %141 = vector.broadcast %c8_i32_40 : i32 to vector<1x8x8xi32>
    %142 = arith.select %140, %29, %141 : vector<1x8x8xi1>, vector<1x8x8xi32>
    %cst_41 = arith.constant dense<2147483647> : vector<1x8xi32>
    %143 = vector.multi_reduction <minsi>, %142, %cst_41 [2] : vector<1x8x8xi32> to vector<1x8xi32>
    %144 = vector.shape_cast %143 : vector<1x8xi32> to vector<1x8x1xi32>
    %145 = arith.cmpi eq, %144, %30 : vector<1x8x1xi32>
    %146 = arith.extui %145 : vector<1x8x1xi1> to vector<1x8x1xi32>
    %147 = arith.sitofp %146 : vector<1x8x1xi32> to vector<1x8x1xf32>
    %cst_42 = arith.constant dense<0.000000e+00> : vector<1x1xf32>
    %148 = vector.multi_reduction <add>, %147, %cst_42 [1] : vector<1x8x1xf32> to vector<1x1xf32>
    %149 = tpu.concatenate %79, %138, %89, %148 in 1 : vector<1x1xf32>, vector<1x1xf32>, vector<1x1xf32>, vector<1x1xf32> -> vector<1x4xf32>
    %150 = vector.shape_cast %149 : vector<1x4xf32> to vector<1x1x4xf32>
    %c0_43 = arith.constant 0 : index
    %c0_44 = arith.constant 0 : index
    %c0_45 = arith.constant 0 : index
    %151 = vector.load %arg2[%c0_43, %c0_44, %c0_45] : memref<1x1x4xf32, #tpu.memory_space<vmem>>, vector<1x1x4xf32>
    tpu.vector_store %arg2[%c0_43, %c0_44, %c0_45], %150 {strides = array<i32>} : memref<1x1x4xf32, #tpu.memory_space<vmem>>, vector<1x1x4xf32>,
    return
  }
  func.func @transform_0(%arg0: i32) -> (i32, i32, i32, i32) {
    %c0_i32 = arith.constant 0 : i32
    %c0_i32_0 = arith.constant 0 : i32
    %c0_i32_1 = arith.constant 0 : i32
    %c0_i32_2 = arith.constant 0 : i32
    return %arg0, %c0_i32, %c0_i32_0, %c0_i32_1 : i32, i32, i32, i32
  }
  func.func @transform_1(%arg0: i32) -> (i32, i32, i32) {
    %c0_i32 = arith.constant 0 : i32
    %c0_i32_0 = arith.constant 0 : i32
    %c0_i32_1 = arith.constant 0 : i32
    return %arg0, %c0_i32, %c0_i32_0 : i32, i32, i32
  }
}

</mosaic_0001>

<llo_original>
// kernel: crw_forward.3
$region0: #{crw_forward.3}
  #allocation0 [shape = 'u32[]', space=smem, size = 0x4, offset = 0x4, fixed_abs, tag = 'smem constant byte address 0x4 - core index']
  #allocation1 [shape = 'u32[144,128]{1,0:T(1,128)}', space=vmem, size = 0x12000, scoped, tag = 'internal scratch']
  %s0 = inlined_call_operand.vmem [shape: f32[2,4,8,64], index: 0, kind: input, shape index: {}]
  %s1 = inlined_call_operand.vmem [shape: f32[2,1,4], index: 1, kind: output, shape index: {}]
  %s2 = sld [smem:[#allocation0]]
  $region37: #{crw_forward.3} parent=0
    _
  %s4 = ssub.s32 1, %s2
  %s5 = scalar_select 0, %s4, %s2
  loop: start=0, step=1, limit=4
  $region2: #{crw_forward.3} parent=0 // loop_pre_header
    _
  $region3: #{crw_forward.3} parent=0 // loop_header
    %s7 = sphi 0, %s11
    %p8 = scmp.ge.s32.totalorder %s7, 4
    %s17 = sphi 0, %s19
    %s20 = sphi 0, %s17
    %s21 = sphi 0, %s20
    %s37 = sphi 0, %s21
    %s43 = sphi 0, %s45
    %s46 = sphi 0, %s43
    %s47 = sphi 0, %s46
    %s63 = sphi 0, %s47
  $region4: #{crw_forward.3} parent=0 // loop_header_branch
    %10 = sbr.rel (%p8) target = $region8
  $region5: #{crw_forward.3} parent=0 // loop_body
    %s12 = ssub.s32 %s7, 1
    %s13 = ssub.s32 %s7, 2
    %s14 = sadd.s32 %s7, 1
    %s15 = ssub.s32 %s7, %s14
    %p16 = scmp.eq.s32.totalorder %s15, 0
    %s18 = sadd.s32 %s17, 1
    %s19 = scalar_select %p16, %s17, %s18
    %p22 = pneg %p16
    %p23 = scmp.eq.s32.totalorder %s7, 1
    %p24 = por %p22, %p23
    %p25 = scmp.ne.s32.totalorder %s17, %s20
    %p26 = scmp.eq.s32.totalorder %s7, 0
    %p27 = por %p25, %p26
    %p28 = scmp.ne.s32.totalorder %s17, %s20
    %p29 = scmp.eq.s32.totalorder %s12, 1
    %p30 = por %p28, %p29
    %p31 = scmp.ne.s32.totalorder %s20, %s21
    %p32 = scmp.eq.s32.totalorder %s12, 0
    %p33 = por %p31, %p32
    %p34 = scmp.ne.s32.totalorder %s20, %s21
    %p35 = scmp.eq.s32.totalorder %s13, 1
    %p36 = por %p34, %p35
    %p38 = scmp.ne.s32.totalorder %s21, %s37
    %p39 = scmp.eq.s32.totalorder %s13, 0
    %p40 = por %p38, %p39
    %s41 = ssub.s32 %s7, %s14
    %p42 = scmp.eq.s32.totalorder %s41, 0
    %s44 = sadd.s32 %s43, 1
    %s45 = scalar_select %p42, %s43, %s44
    %p48 = pneg %p42
    %p49 = scmp.eq.s32.totalorder %s7, 1
    %p50 = por %p48, %p49
    %p51 = scmp.ne.s32.totalorder %s43, %s46
    %p52 = scmp.eq.s32.totalorder %s7, 0
    %p53 = por %p51, %p52
    %p54 = scmp.ne.s32.totalorder %s43, %s46
    %p55 = scmp.eq.s32.totalorder %s12, 1
    %p56 = por %p54, %p55
    %p57 = scmp.ne.s32.totalorder %s46, %s47
    %p58 = scmp.eq.s32.totalorder %s12, 0
    %p59 = por %p57, %p58
    %p60 = scmp.ne.s32.totalorder %s46, %s47
    %p61 = scmp.eq.s32.totalorder %s13, 1
    %p62 = por %p60, %p61
    %p64 = scmp.ne.s32.totalorder %s47, %s63
    %p65 = scmp.eq.s32.totalorder %s13, 0
    %p66 = por %p64, %p65
    %p67 = scmp.le.s32.totalorder 1, %s7
    %p68 = scmp.lt.s32.totalorder %s7, 3
    %p69 = pnand %p67, %p68
    %p70 = pneg %p69
    // Predicated region
    $region9: #{crw_forward.3} parent=5 // pred_check
      _
    $region10: #{crw_forward.3} parent=5 // pred_check_branch
      %72 = sbr.rel (%p69) target = $region12
    $region11: #{crw_forward.3} parent=5 // pred_region
      %s73 = ssub.s32 %s7, 1
    $region12: #{crw_forward.3} parent=5 // pred_fallthru
      _
    %p74 = scmp.lt.s32.totalorder %s7, 2
    // Predicated region
    $region13: #{crw_forward.3} parent=5 // pred_check
      %p75 = pneg %p74
    $region14: #{crw_forward.3} parent=5 // pred_check_branch
      %77 = sbr.rel (%p75) target = $region16
    $region15: #{crw_forward.3} parent=5 // pred_region
      // Predicated region
      $region17: #{crw_forward.3} parent=15 // pred_check
        %p78 = pneg %p27
      $region18: #{crw_forward.3} parent=15 // pred_check_branch
        %80 = sbr.rel (%p78) target = $region20
      $region19: #{crw_forward.3} parent=15 // pred_region
        %p81 = scmp.lt.s32.totalorder %s7, 1
        %s82 = scalar_select %p81, %s7, 1
        %s83 = smul.addr %s82, 4
        %s84 = smul.addr %s83, 8
        %s85 = scalar_lea.vmem %s0, %s84
      $region20: #{crw_forward.3} parent=15 // pred_fallthru
        _
    $region16: #{crw_forward.3} parent=5 // pred_fallthru
      _
    %p86 = scmp.le.s32.totalorder 1, %s7
    %p87 = scmp.lt.s32.totalorder %s7, 3
    %p88 = pnand %p86, %p87
    %p89 = pneg %p88
    // Predicated region
    $region21: #{crw_forward.3} parent=5 // pred_check
      _
    $region22: #{crw_forward.3} parent=5 // pred_check_branch
      %91 = sbr.rel (%p88) target = $region24
    $region23: #{crw_forward.3} parent=5 // pred_region
      %s92 = ssub.s32 %s7, 1
      %p93 = scmp.lt.s32.totalorder %s12, 1
      %s94 = scalar_select %p93, %s12, 1
      %s95 = smul.addr %s94, 4
      %s96 = smul.addr %s95, 8
      %s97 = scalar_lea.vmem %s0, %s96
      %p98 = pneg %p33
      %p99 = pneg %p30
      %p100 = pneg %p59
      %p101 = pneg %p56
      %p102 = scmp.lt.s32.totalorder %s12, 1
      %s103 = scalar_select %p102, %s12, 1
      %s104 = scalar_lea.vmem %s1, %s103
      %p105 = scmp.lt.s32.totalorder %s12, 1
      %s106 = scalar_select %p105, %s12, 1
      %s107 = smul.addr %s106, 4
      %s108 = smul.addr %s107, 8
      %s109 = scalar_lea.vmem %s0, %s108
      %p110 = scmp.lt.s32.totalorder %s12, 1
      %s111 = scalar_select %p110, %s12, 1
      %s112 = scalar_lea.vmem %s1, %s111
      %v113 = vld [vmem:[%s109] sm:$0xff]
      %v114 = vld [vmem:[%s109 + $0x8] sm:$0xff]
      %v115 = vld [vmem:[%s109 + $0x10] sm:$0xff]
      %v116 = vld [vmem:[%s109 + $0x18] sm:$0xff]
      %vm117 = vcmask 523264
      %v119 = vsel %vm117, %v113, 0
      %v122 = vsel %vm117, %v114, 0
      %124 = vmatprep.subr.mxu0 0.0
      %125 = vmatpush1.xpose.msra.mxu0 0.0
      %126 = vmatprep.subr.mxu0 0.0
      %127 = vmatpush1.xpose.msra.mxu0 0.0
      %128 = vmatprep.subr.mxu0 0.0
      %129 = vmatpush1.xpose.msra.mxu0 0.0
      %130 = vmatprep.subr.mxu0 0.0
      %131 = vmatpush1.xpose.msra.mxu0 0.0
      %132 = vmatprep.subr.mxu0 0.0
      %133 = vmatpush1.xpose.msra.mxu0 0.0
      %134 = vmatprep.subr.mxu0 0.0
      %135 = vmatpush1.xpose.msra.mxu0 0.0
      %136 = vmatprep.subr.mxu0 0.0
      %137 = vmatpush1.xpose.msra.mxu0 0.0
      %138 = vmatprep.subr.mxu0 0.0
      %139 = vmatpush1.xpose.msra.mxu0 0.0
      %140 = vmatprep.subr.mxu0 0.0
      %141 = vmatpush1.xpose.msra.mxu0 0.0
      %142 = vmatprep.subr.mxu0 0.0
      %143 = vmatpush1.xpose.msra.mxu0 0.0
      %144 = vmatprep.subr.mxu0 0.0
      %145 = vmatpush1.xpose.msra.mxu0 0.0
      %146 = vmatprep.subr.mxu0 0.0
      %147 = vmatpush1.xpose.msra.mxu0 0.0
      %148 = vmatprep.subr.mxu0 0.0
      %149 = vmatpush1.xpose.msra.mxu0 0.0
      %150 = vmatprep.subr.mxu0 0.0
      %151 = vmatpush1.xpose.msra.mxu0 0.0
      %152 = vmatprep.subr.mxu0 0.0
      %153 = vmatpush1.xpose.msra.mxu0 0.0
      %154 = vmatprep.subr.mxu0 0.0
      %155 = vmatpush1.xpose.msra.mxu0 %v122
      %156 = vmatprep.subr.mxu0 0.0
      %157 = vmatpush2.xpose.msra.mxu0 0.0
      %158 = vmatprep.subr.mxu0 0.0
      %159 = vmatpush2.xpose.msra.mxu0 0.0
      %160 = vmatprep.subr.mxu0 0.0
      %161 = vmatpush2.xpose.msra.mxu0 0.0
      %162 = vmatprep.subr.mxu0 0.0
      %163 = vmatpush2.xpose.msra.mxu0 0.0
      %164 = vmatprep.subr.mxu0 0.0
      %165 = vmatpush2.xpose.msra.mxu0 0.0
      %166 = vmatprep.subr.mxu0 0.0
      %167 = vmatpush2.xpose.msra.mxu0 0.0
      %168 = vmatprep.subr.mxu0 0.0
      %169 = vmatpush2.xpose.msra.mxu0 0.0
      %170 = vmatprep.subr.mxu0 0.0
      %171 = vmatpush2.xpose.msra.mxu0 0.0
      %172 = vmatprep.subr.mxu0 0.0
      %173 = vmatpush2.xpose.msra.mxu0 0.0
      %174 = vmatprep.subr.mxu0 0.0
      %175 = vmatpush2.xpose.msra.mxu0 0.0
      %176 = vmatprep.subr.mxu0 0.0
      %177 = vmatpush2.xpose.msra.mxu0 0.0
      %178 = vmatprep.subr.mxu0 0.0
      %179 = vmatpush2.xpose.msra.mxu0 0.0
      %180 = vmatprep.subr.mxu0 0.0
      %181 = vmatpush2.xpose.msra.mxu0 0.0
      %182 = vmatprep.subr.mxu0 0.0
      %183 = vmatpush2.xpose.msra.mxu0 0.0
      %184 = vmatprep.subr.mxu0 0.0
      %185 = vmatpush2.xpose.msra.mxu0 0.0
      %186 = vmatprep.subr.mxu0 0.0
      %187 = vmatpush2.xpose.msra.mxu0 0.0
      %188 = vmatprep.mubr.f32.mxu0 0.0
      %189 = vmatmul.mubr.f32.gmra.mxu0 %v119
      %v190 = vpop.f32.mrf.mxu0
      %v191 = vadd.f32 0.0, %v190
      %v192 = vpop.f32.mrf.mxu0
      %193 = vdwg.mxu0
      %v194 = vmul.f32 %v191, 14.285714
      %vm195 = vcmask 64512
      %v196 = vsel %vm195, %v194, -inf
      %197 = vmax.xlane.f32.xlu0 %v196
      %v198 = vpop.xlane.xlu0 %197
      %v199 = vsub.f32 %v194, %v198
      %v200 = vmul.f32 %v199, 1.442695
      %v201 = vpow.pop %v200
      %v202 = vsel %vm195, %v201, 0.0
      %203 = vadd.xlane.f32.xlu0 %v202
      %v204 = vpop.xlane.xlu0 %203
      %v205 = vrcp.pop %v204
      %v206 = vmul.f32 %v201, %v205
      %v207 = vrot.slane %v196, 4
      %v208 = vmax.f32 %v196, %v207
      %v209 = vrot.slane %v208, 2
      %v210 = vmax.f32 %v208, %v209
      %v211 = vrot.slane %v210, 1
      %v212 = vmax.f32 %v210, %v211
      %v213 = vsub.f32 %v194, %v212
      %v214 = vmul.f32 %v213, 1.442695
      %v215 = vpow.pop %v214
      %v216 = vsel %vm195, %v215, 0.0
      %v217 = vrot.slane %v216, 4
      %v218 = vadd.f32 %v216, %v217
      %v219 = vrot.slane %v218, 2
      %v220 = vadd.f32 %v218, %v219
      %v221 = vrot.slane %v220, 1
      %v222 = vadd.f32 %v220, %v221
      %v223 = vrcp.pop %v222
      %v224 = vmul.f32 %v215, %v223
      %v225 = vlaneseq
      %v226 = vshrl.u32 %v225, 7
      %v227 = vlaneseq
      %v228 = vand.u32 %v227, 127
      %v230 = vsel %vm117, %v115, 0
      %232 = vmatprep.subr.mxu0 0.0
      %233 = vmatpush1.xpose.msra.mxu0 0.0
      %234 = vmatprep.subr.mxu0 0.0
      %235 = vmatpush1.xpose.msra.mxu0 0.0
      %236 = vmatprep.subr.mxu0 0.0
      %237 = vmatpush1.xpose.msra.mxu0 0.0
      %238 = vmatprep.subr.mxu0 0.0
      %239 = vmatpush1.xpose.msra.mxu0 0.0
      %240 = vmatprep.subr.mxu0 0.0
      %241 = vmatpush1.xpose.msra.mxu0 0.0
      %242 = vmatprep.subr.mxu0 0.0
      %243 = vmatpush1.xpose.msra.mxu0 0.0
      %244 = vmatprep.subr.mxu0 0.0
      %245 = vmatpush1.xpose.msra.mxu0 0.0
      %246 = vmatprep.subr.mxu0 0.0
      %247 = vmatpush1.xpose.msra.mxu0 0.0
      %248 = vmatprep.subr.mxu0 0.0
      %249 = vmatpush1.xpose.msra.mxu0 0.0
      %250 = vmatprep.subr.mxu0 0.0
      %251 = vmatpush1.xpose.msra.mxu0 0.0
      %252 = vmatprep.subr.mxu0 0.0
      %253 = vmatpush1.xpose.msra.mxu0 0.0
      %254 = vmatprep.subr.mxu0 0.0
      %255 = vmatpush1.xpose.msra.mxu0 0.0
      %256 = vmatprep.subr.mxu0 0.0
      %257 = vmatpush1.xpose.msra.mxu0 0.0
      %258 = vmatprep.subr.mxu0 0.0
      %259 = vmatpush1.xpose.msra.mxu0 0.0
      %260 = vmatprep.subr.mxu0 0.0
      %261 = vmatpush1.xpose.msra.mxu0 0.0
      %262 = vmatprep.subr.mxu0 0.0
      %263 = vmatpush1.xpose.msra.mxu0 %v230
      %264 = vmatprep.subr.mxu0 0.0
      %265 = vmatpush2.xpose.msra.mxu0 0.0
      %266 = vmatprep.subr.mxu0 0.0
      %267 = vmatpush2.xpose.msra.mxu0 0.0
      %268 = vmatprep.subr.mxu0 0.0
      %269 = vmatpush2.xpose.msra.mxu0 0.0
      %270 = vmatprep.subr.mxu0 0.0
      %271 = vmatpush2.xpose.msra.mxu0 0.0
      %272 = vmatprep.subr.mxu0 0.0
      %273 = vmatpush2.xpose.msra.mxu0 0.0
      %274 = vmatprep.subr.mxu0 0.0
      %275 = vmatpush2.xpose.msra.mxu0 0.0
      %276 = vmatprep.subr.mxu0 0.0
      %277 = vmatpush2.xpose.msra.mxu0 0.0
      %278 = vmatprep.subr.mxu0 0.0
      %279 = vmatpush2.xpose.msra.mxu0 0.0
      %280 = vmatprep.subr.mxu0 0.0
      %281 = vmatpush2.xpose.msra.mxu0 0.0
      %282 = vmatprep.subr.mxu0 0.0
      %283 = vmatpush2.xpose.msra.mxu0 0.0
      %284 = vmatprep.subr.mxu0 0.0
      %285 = vmatpush2.xpose.msra.mxu0 0.0
      %286 = vmatprep.subr.mxu0 0.0
      %287 = vmatpush2.xpose.msra.mxu0 0.0
      %288 = vmatprep.subr.mxu0 0.0
      %289 = vmatpush2.xpose.msra.mxu0 0.0
      %290 = vmatprep.subr.mxu0 0.0
      %291 = vmatpush2.xpose.msra.mxu0 0.0
      %292 = vmatprep.subr.mxu0 0.0
      %293 = vmatpush2.xpose.msra.mxu0 0.0
      %294 = vmatprep.subr.mxu0 0.0
      %295 = vmatpush2.xpose.msra.mxu0 0.0
      %296 = vmatprep.mubr.f32.mxu0 0.0
      %297 = vmatmul.mubr.f32.gmra.mxu0 %v122
      %v298 = vpop.f32.mrf.mxu0
      %v299 = vadd.f32 0.0, %v298
      %v300 = vpop.f32.mrf.mxu0
      %301 = vdwg.mxu0
      %v302 = vmul.f32 %v299, 14.285714
      %v303 = vsel %vm195, %v302, -inf
      %304 = vmax.xlane.f32.xlu0 %v303
      %v305 = vpop.xlane.xlu0 %304
      %v306 = vsub.f32 %v302, %v305
      %v307 = vmul.f32 %v306, 1.442695
      %v308 = vpow.pop %v307
      %v309 = vsel %vm195, %v308, 0.0
      %310 = vadd.xlane.f32.xlu0 %v309
      %v311 = vpop.xlane.xlu0 %310
      %v312 = vrcp.pop %v311
      %v313 = vmul.f32 %v308, %v312
      %v315 = vsel %vm195, %v206, 0
      %317 = vmatprep.subr.mxu0 0.0
      %318 = vmatpush1.msra.mxu0 0.0
      %319 = vmatprep.subr.mxu0 0.0
      %320 = vmatpush1.msra.mxu0 0.0
      %321 = vmatprep.subr.mxu0 0.0
      %322 = vmatpush1.msra.mxu0 0.0
      %323 = vmatprep.subr.mxu0 0.0
      %324 = vmatpush1.msra.mxu0 0.0
      %325 = vmatprep.subr.mxu0 0.0
      %326 = vmatpush1.msra.mxu0 0.0
      %327 = vmatprep.subr.mxu0 0.0
      %328 = vmatpush1.msra.mxu0 0.0
      %329 = vmatprep.subr.mxu0 0.0
      %330 = vmatpush1.msra.mxu0 0.0
      %331 = vmatprep.subr.mxu0 0.0
      %332 = vmatpush1.msra.mxu0 0.0
      %333 = vmatprep.subr.mxu0 0.0
      %334 = vmatpush1.msra.mxu0 0.0
      %335 = vmatprep.subr.mxu0 0.0
      %336 = vmatpush1.msra.mxu0 0.0
      %337 = vmatprep.subr.mxu0 0.0
      %338 = vmatpush1.msra.mxu0 0.0
      %339 = vmatprep.subr.mxu0 0.0
      %340 = vmatpush1.msra.mxu0 0.0
      %341 = vmatprep.subr.mxu0 0.0
      %342 = vmatpush1.msra.mxu0 0.0
      %343 = vmatprep.subr.mxu0 0.0
      %344 = vmatpush1.msra.mxu0 0.0
      %345 = vmatprep.subr.mxu0 0.0
      %346 = vmatpush1.msra.mxu0 0.0
      %347 = vmatprep.subr.mxu0 0.0
      %348 = vmatpush1.msra.mxu0 %v313
      %349 = vmatprep.subr.mxu0 0.0
      %350 = vmatpush2.msra.mxu0 0.0
      %351 = vmatprep.subr.mxu0 0.0
      %352 = vmatpush2.msra.mxu0 0.0
      %353 = vmatprep.subr.mxu0 0.0
      %354 = vmatpush2.msra.mxu0 0.0
      %355 = vmatprep.subr.mxu0 0.0
      %356 = vmatpush2.msra.mxu0 0.0
      %357 = vmatprep.subr.mxu0 0.0
      %358 = vmatpush2.msra.mxu0 0.0
      %359 = vmatprep.subr.mxu0 0.0
      %360 = vmatpush2.msra.mxu0 0.0
      %361 = vmatprep.subr.mxu0 0.0
      %362 = vmatpush2.msra.mxu0 0.0
      %363 = vmatprep.subr.mxu0 0.0
      %364 = vmatpush2.msra.mxu0 0.0
      %365 = vmatprep.subr.mxu0 0.0
      %366 = vmatpush2.msra.mxu0 0.0
      %367 = vmatprep.subr.mxu0 0.0
      %368 = vmatpush2.msra.mxu0 0.0
      %369 = vmatprep.subr.mxu0 0.0
      %370 = vmatpush2.msra.mxu0 0.0
      %371 = vmatprep.subr.mxu0 0.0
      %372 = vmatpush2.msra.mxu0 0.0
      %373 = vmatprep.subr.mxu0 0.0
      %374 = vmatpush2.msra.mxu0 0.0
      %375 = vmatprep.subr.mxu0 0.0
      %376 = vmatpush2.msra.mxu0 0.0
      %377 = vmatprep.subr.mxu0 0.0
      %378 = vmatpush2.msra.mxu0 0.0
      %379 = vmatprep.subr.mxu0 0.0
      %380 = vmatpush2.msra.mxu0 0.0
      %381 = vmatprep.mubr.f32.mxu0 0.0
      %382 = vmatmul.mubr.f32.gmra.mxu0 %v315
      %v383 = vpop.f32.mrf.mxu0
      %v384 = vadd.f32 0.0, %v383
      %v385 = vpop.f32.mrf.mxu0
      %386 = vdwg.mxu0
      %v387 = vrot.slane %v303, 4
      %v388 = vmax.f32 %v303, %v387
      %v389 = vrot.slane %v388, 2
      %v390 = vmax.f32 %v388, %v389
      %v391 = vrot.slane %v390, 1
      %v392 = vmax.f32 %v390, %v391
      %v393 = vsub.f32 %v302, %v392
      %v394 = vmul.f32 %v393, 1.442695
      %v395 = vpow.pop %v394
      %v396 = vsel %vm195, %v395, 0.0
      %v397 = vrot.slane %v396, 4
      %v398 = vadd.f32 %v396, %v397
      %v399 = vrot.slane %v398, 2
      %v400 = vadd.f32 %v398, %v399
      %v401 = vrot.slane %v400, 1
      %v402 = vadd.f32 %v400, %v401
      %v403 = vrcp.pop %v402
      %v404 = vmul.f32 %v395, %v403
      %v406 = vsel %vm195, %v224, 0
      %408 = vmatprep.subr.mxu0 0.0
      %409 = vmatpush1.msra.mxu0 0.0
      %410 = vmatprep.subr.mxu0 0.0
      %411 = vmatpush1.msra.mxu0 0.0
      %412 = vmatprep.subr.mxu0 0.0
      %413 = vmatpush1.msra.mxu0 0.0
      %414 = vmatprep.subr.mxu0 0.0
      %415 = vmatpush1.msra.mxu0 0.0
      %416 = vmatprep.subr.mxu0 0.0
      %417 = vmatpush1.msra.mxu0 0.0
      %418 = vmatprep.subr.mxu0 0.0
      %419 = vmatpush1.msra.mxu0 0.0
      %420 = vmatprep.subr.mxu0 0.0
      %421 = vmatpush1.msra.mxu0 0.0
      %422 = vmatprep.subr.mxu0 0.0
      %423 = vmatpush1.msra.mxu0 0.0
      %424 = vmatprep.subr.mxu0 0.0
      %425 = vmatpush1.msra.mxu0 0.0
      %426 = vmatprep.subr.mxu0 0.0
      %427 = vmatpush1.msra.mxu0 0.0
      %428 = vmatprep.subr.mxu0 0.0
      %429 = vmatpush1.msra.mxu0 0.0
      %430 = vmatprep.subr.mxu0 0.0
      %431 = vmatpush1.msra.mxu0 0.0
      %432 = vmatprep.subr.mxu0 0.0
      %433 = vmatpush1.msra.mxu0 0.0
      %434 = vmatprep.subr.mxu0 0.0
      %435 = vmatpush1.msra.mxu0 0.0
      %436 = vmatprep.subr.mxu0 0.0
      %437 = vmatpush1.msra.mxu0 0.0
      %438 = vmatprep.subr.mxu0 0.0
      %439 = vmatpush1.msra.mxu0 %v404
      %440 = vmatprep.subr.mxu0 0.0
      %441 = vmatpush2.msra.mxu0 0.0
      %442 = vmatprep.subr.mxu0 0.0
      %443 = vmatpush2.msra.mxu0 0.0
      %444 = vmatprep.subr.mxu0 0.0
      %445 = vmatpush2.msra.mxu0 0.0
      %446 = vmatprep.subr.mxu0 0.0
      %447 = vmatpush2.msra.mxu0 0.0
      %448 = vmatprep.subr.mxu0 0.0
      %449 = vmatpush2.msra.mxu0 0.0
      %450 = vmatprep.subr.mxu0 0.0
      %451 = vmatpush2.msra.mxu0 0.0
      %452 = vmatprep.subr.mxu0 0.0
      %453 = vmatpush2.msra.mxu0 0.0
      %454 = vmatprep.subr.mxu0 0.0
      %455 = vmatpush2.msra.mxu0 0.0
      %456 = vmatprep.subr.mxu0 0.0
      %457 = vmatpush2.msra.mxu0 0.0
      %458 = vmatprep.subr.mxu0 0.0
      %459 = vmatpush2.msra.mxu0 0.0
      %460 = vmatprep.subr.mxu0 0.0
      %461 = vmatpush2.msra.mxu0 0.0
      %462 = vmatprep.subr.mxu0 0.0
      %463 = vmatpush2.msra.mxu0 0.0
      %464 = vmatprep.subr.mxu0 0.0
      %465 = vmatpush2.msra.mxu0 0.0
      %466 = vmatprep.subr.mxu0 0.0
      %467 = vmatpush2.msra.mxu0 0.0
      %468 = vmatprep.subr.mxu0 0.0
      %469 = vmatpush2.msra.mxu0 0.0
      %470 = vmatprep.subr.mxu0 0.0
      %471 = vmatpush2.msra.mxu0 0.0
      %472 = vmatprep.mubr.f32.mxu0 0.0
      %473 = vmatmul.mubr.f32.gmra.mxu0 %v406
      %v474 = vpop.f32.mrf.mxu0
      %v475 = vadd.f32 0.0, %v474
      %v476 = vpop.f32.mrf.mxu0
      %477 = vdwg.mxu0
      %v479 = vsel %vm195, %v384, 0
      %v482 = vsel %vm195, %v475, 0
      %484 = vmatprep.subr.mxu0 0.0
      %485 = vmatpush1.xpose.msra.mxu0 0.0
      %486 = vmatprep.subr.mxu0 0.0
      %487 = vmatpush1.xpose.msra.mxu0 0.0
      %488 = vmatprep.subr.mxu0 0.0
      %489 = vmatpush1.xpose.msra.mxu0 0.0
      %490 = vmatprep.subr.mxu0 0.0
      %491 = vmatpush1.xpose.msra.mxu0 0.0
      %492 = vmatprep.subr.mxu0 0.0
      %493 = vmatpush1.xpose.msra.mxu0 0.0
      %494 = vmatprep.subr.mxu0 0.0
      %495 = vmatpush1.xpose.msra.mxu0 0.0
      %496 = vmatprep.subr.mxu0 0.0
      %497 = vmatpush1.xpose.msra.mxu0 0.0
      %498 = vmatprep.subr.mxu0 0.0
      %499 = vmatpush1.xpose.msra.mxu0 0.0
      %500 = vmatprep.subr.mxu0 0.0
      %501 = vmatpush1.xpose.msra.mxu0 0.0
      %502 = vmatprep.subr.mxu0 0.0
      %503 = vmatpush1.xpose.msra.mxu0 0.0
      %504 = vmatprep.subr.mxu0 0.0
      %505 = vmatpush1.xpose.msra.mxu0 0.0
      %506 = vmatprep.subr.mxu0 0.0
      %507 = vmatpush1.xpose.msra.mxu0 0.0
      %508 = vmatprep.subr.mxu0 0.0
      %509 = vmatpush1.xpose.msra.mxu0 0.0
      %510 = vmatprep.subr.mxu0 0.0
      %511 = vmatpush1.xpose.msra.mxu0 0.0
      %512 = vmatprep.subr.mxu0 0.0
      %513 = vmatpush1.xpose.msra.mxu0 0.0
      %514 = vmatprep.subr.mxu0 0.0
      %515 = vmatpush1.xpose.msra.mxu0 %v482
      %516 = vmatprep.subr.mxu0 0.0
      %517 = vmatpush2.xpose.msra.mxu0 0.0
      %518 = vmatprep.subr.mxu0 0.0
      %519 = vmatpush2.xpose.msra.mxu0 0.0
      %520 = vmatprep.subr.mxu0 0.0
      %521 = vmatpush2.xpose.msra.mxu0 0.0
      %522 = vmatprep.subr.mxu0 0.0
      %523 = vmatpush2.xpose.msra.mxu0 0.0
      %524 = vmatprep.subr.mxu0 0.0
      %525 = vmatpush2.xpose.msra.mxu0 0.0
      %526 = vmatprep.subr.mxu0 0.0
      %527 = vmatpush2.xpose.msra.mxu0 0.0
      %528 = vmatprep.subr.mxu0 0.0
      %529 = vmatpush2.xpose.msra.mxu0 0.0
      %530 = vmatprep.subr.mxu0 0.0
      %531 = vmatpush2.xpose.msra.mxu0 0.0
      %532 = vmatprep.subr.mxu0 0.0
      %533 = vmatpush2.xpose.msra.mxu0 0.0
      %534 = vmatprep.subr.mxu0 0.0
      %535 = vmatpush2.xpose.msra.mxu0 0.0
      %536 = vmatprep.subr.mxu0 0.0
      %537 = vmatpush2.xpose.msra.mxu0 0.0
      %538 = vmatprep.subr.mxu0 0.0
      %539 = vmatpush2.xpose.msra.mxu0 0.0
      %540 = vmatprep.subr.mxu0 0.0
      %541 = vmatpush2.xpose.msra.mxu0 0.0
      %542 = vmatprep.subr.mxu0 0.0
      %543 = vmatpush2.xpose.msra.mxu0 0.0
      %544 = vmatprep.subr.mxu0 0.0
      %545 = vmatpush2.xpose.msra.mxu0 0.0
      %546 = vmatprep.subr.mxu0 0.0
      %547 = vmatpush2.xpose.msra.mxu0 0.0
      %548 = vmatprep.mubr.f32.mxu0 0.0
      %549 = vmatmul.mubr.f32.gmra.mxu0 %v479
      %v550 = vpop.f32.mrf.mxu0
      %v551 = vadd.f32 1e-20, %v550
      %v552 = vpop.f32.mrf.mxu0
      %553 = vdwg.mxu0
      %v554 = vlog2.pop %v551
      %v555 = vmul.f32 %v554, 0.6931472
      %v556 = vsel %vm195, %v555, -inf
      %557 = vmax.xlane.f32.xlu0 %v556
      %v558 = vpop.xlane.xlu0 %557
      %v559 = vsub.f32 %v555, %v558
      %v560 = vmul.f32 %v559, 1.442695
      %v561 = vpow.pop %v560
      %v562 = vsel %vm195, %v561, 0.0
      %563 = vadd.xlane.f32.xlu0 %v562
      %v564 = vpop.xlane.xlu0 %563
      %v565 = vlog2.pop %v564
      %v566 = vmul.f32 %v565, 0.6931472
      %v567 = vadd.f32 %v558, %v566
      %vm568 = vcmp.eq.s32.totalorder %v226, %v228
      %v569 = vsel %vm568, %v555, 0.0
      %v570 = vsel %vm195, %v569, 0.0
      %571 = vadd.xlane.f32.xlu0 %v570
      %v572 = vpop.xlane.xlu0 %571
      %v573 = vsub.f32 %v567, %v572
      %v574 = vrot.slane %v573, 4
      %v575 = vadd.f32 %v573, %v574
      %v576 = vrot.slane %v575, 2
      %v577 = vadd.f32 %v575, %v576
      %v578 = vrot.slane %v577, 1
      %v579 = vadd.f32 %v577, %v578
      %vm580 = vcmp.ge.f32.partialorder %v555, %v558
      %v581 = vsel %vm580, %v228, 8
      %v582 = vsel %vm195, %v581, 2147483647
      %v583 = vand.u32 %v582, 65535
      %v584 = vshra.s32 %v582, 16
      %v585 = vcvt.s32.f32 %v583
      %v586 = vcvt.s32.f32 %v584
      %587 = vmin.xlane.f32.xlu0 %v586
      %v588 = vpop.xlane.xlu0 %587
      %vm589 = vcmp.eq.f32.partialorder %v586, %v588
      %v590 = vsel %vm589, %v585, inf
      %591 = vmin.xlane.f32.xlu0 %v590
      %v592 = vpop.xlane.xlu0 %591
      %v593 = vcvt.f32.s32 %v592
      %v594 = vcvt.f32.s32 %v588
      %v595 = vshll.u32 %v594, 16
      %v596 = vadd.s32 %v595, %v593
      %vm597 = vcmp.eq.s32.totalorder %v596, %v226
      %v598 = vsel %vm597, 1, 0
      %v599 = vcvt.s32.f32 %v598
      %v600 = vrot.slane %v599, 4
      %v601 = vadd.f32 %v599, %v600
      %v602 = vrot.slane %v601, 2
      %v603 = vadd.f32 %v601, %v602
      %v604 = vrot.slane %v603, 1
      %v605 = vadd.f32 %v603, %v604
      %v607 = vsel %vm117, %v116, 0
      %609 = vmatprep.subr.mxu0 0.0
      %610 = vmatpush1.xpose.msra.mxu0 0.0
      %611 = vmatprep.subr.mxu0 0.0
      %612 = vmatpush1.xpose.msra.mxu0 0.0
      %613 = vmatprep.subr.mxu0 0.0
      %614 = vmatpush1.xpose.msra.mxu0 0.0
      %615 = vmatprep.subr.mxu0 0.0
      %616 = vmatpush1.xpose.msra.mxu0 0.0
      %617 = vmatprep.subr.mxu0 0.0
      %618 = vmatpush1.xpose.msra.mxu0 0.0
      %619 = vmatprep.subr.mxu0 0.0
      %620 = vmatpush1.xpose.msra.mxu0 0.0
      %621 = vmatprep.subr.mxu0 0.0
      %622 = vmatpush1.xpose.msra.mxu0 0.0
      %623 = vmatprep.subr.mxu0 0.0
      %624 = vmatpush1.xpose.msra.mxu0 0.0
      %625 = vmatprep.subr.mxu0 0.0
      %626 = vmatpush1.xpose.msra.mxu0 0.0
      %627 = vmatprep.subr.mxu0 0.0
      %628 = vmatpush1.xpose.msra.mxu0 0.0
      %629 = vmatprep.subr.mxu0 0.0
      %630 = vmatpush1.xpose.msra.mxu0 0.0
      %631 = vmatprep.subr.mxu0 0.0
      %632 = vmatpush1.xpose.msra.mxu0 0.0
      %633 = vmatprep.subr.mxu0 0.0
      %634 = vmatpush1.xpose.msra.mxu0 0.0
      %635 = vmatprep.subr.mxu0 0.0
      %636 = vmatpush1.xpose.msra.mxu0 0.0
      %637 = vmatprep.subr.mxu0 0.0
      %638 = vmatpush1.xpose.msra.mxu0 0.0
      %639 = vmatprep.subr.mxu0 0.0
      %640 = vmatpush1.xpose.msra.mxu0 %v607
      %641 = vmatprep.subr.mxu0 0.0
      %642 = vmatpush2.xpose.msra.mxu0 0.0
      %643 = vmatprep.subr.mxu0 0.0
      %644 = vmatpush2.xpose.msra.mxu0 0.0
      %645 = vmatprep.subr.mxu0 0.0
      %646 = vmatpush2.xpose.msra.mxu0 0.0
      %647 = vmatprep.subr.mxu0 0.0
      %648 = vmatpush2.xpose.msra.mxu0 0.0
      %649 = vmatprep.subr.mxu0 0.0
      %650 = vmatpush2.xpose.msra.mxu0 0.0
      %651 = vmatprep.subr.mxu0 0.0
      %652 = vmatpush2.xpose.msra.mxu0 0.0
      %653 = vmatprep.subr.mxu0 0.0
      %654 = vmatpush2.xpose.msra.mxu0 0.0
      %655 = vmatprep.subr.mxu0 0.0
      %656 = vmatpush2.xpose.msra.mxu0 0.0
      %657 = vmatprep.subr.mxu0 0.0
      %658 = vmatpush2.xpose.msra.mxu0 0.0
      %659 = vmatprep.subr.mxu0 0.0
      %660 = vmatpush2.xpose.msra.mxu0 0.0
      %661 = vmatprep.subr.mxu0 0.0
      %662 = vmatpush2.xpose.msra.mxu0 0.0
      %663 = vmatprep.subr.mxu0 0.0
      %664 = vmatpush2.xpose.msra.mxu0 0.0
      %665 = vmatprep.subr.mxu0 0.0
      %666 = vmatpush2.xpose.msra.mxu0 0.0
      %667 = vmatprep.subr.mxu0 0.0
      %668 = vmatpush2.xpose.msra.mxu0 0.0
      %669 = vmatprep.subr.mxu0 0.0
      %670 = vmatpush2.xpose.msra.mxu0 0.0
      %671 = vmatprep.subr.mxu0 0.0
      %672 = vmatpush2.xpose.msra.mxu0 0.0
      %673 = vmatprep.mubr.f32.mxu0 0.0
      %674 = vmatmul.mubr.f32.gmra.mxu0 %v230
      %v675 = vpop.f32.mrf.mxu0
      %v676 = vadd.f32 0.0, %v675
      %v677 = vpop.f32.mrf.mxu0
      %678 = vdwg.mxu0
      %v679 = vmul.f32 %v676, 14.285714
      %v680 = vsel %vm195, %v679, -inf
      %681 = vmax.xlane.f32.xlu0 %v680
      %v682 = vpop.xlane.xlu0 %681
      %v683 = vsub.f32 %v679, %v682
      %v684 = vmul.f32 %v683, 1.442695
      %v685 = vpow.pop %v684
      %v686 = vsel %vm195, %v685, 0.0
      %687 = vadd.xlane.f32.xlu0 %v686
      %v688 = vpop.xlane.xlu0 %687
      %v689 = vrcp.pop %v688
      %v690 = vmul.f32 %v685, %v689
      %691 = vmatprep.subr.mxu0 0.0
      %692 = vmatpush1.msra.mxu0 0.0
      %693 = vmatprep.subr.mxu0 0.0
      %694 = vmatpush1.msra.mxu0 0.0
      %695 = vmatprep.subr.mxu0 0.0
      %696 = vmatpush1.msra.mxu0 0.0
      %697 = vmatprep.subr.mxu0 0.0
      %698 = vmatpush1.msra.mxu0 0.0
      %699 = vmatprep.subr.mxu0 0.0
      %700 = vmatpush1.msra.mxu0 0.0
      %701 = vmatprep.subr.mxu0 0.0
      %702 = vmatpush1.msra.mxu0 0.0
      %703 = vmatprep.subr.mxu0 0.0
      %704 = vmatpush1.msra.mxu0 0.0
      %705 = vmatprep.subr.mxu0 0.0
      %706 = vmatpush1.msra.mxu0 0.0
      %707 = vmatprep.subr.mxu0 0.0
      %708 = vmatpush1.msra.mxu0 0.0
      %709 = vmatprep.subr.mxu0 0.0
      %710 = vmatpush1.msra.mxu0 0.0
      %711 = vmatprep.subr.mxu0 0.0
      %712 = vmatpush1.msra.mxu0 0.0
      %713 = vmatprep.subr.mxu0 0.0
      %714 = vmatpush1.msra.mxu0 0.0
      %715 = vmatprep.subr.mxu0 0.0
      %716 = vmatpush1.msra.mxu0 0.0
      %717 = vmatprep.subr.mxu0 0.0
      %718 = vmatpush1.msra.mxu0 0.0
      %719 = vmatprep.subr.mxu0 0.0
      %720 = vmatpush1.msra.mxu0 0.0
      %721 = vmatprep.subr.mxu0 0.0
      %722 = vmatpush1.msra.mxu0 %v690
      %723 = vmatprep.subr.mxu0 0.0
      %724 = vmatpush2.msra.mxu0 0.0
      %725 = vmatprep.subr.mxu0 0.0
      %726 = vmatpush2.msra.mxu0 0.0
      %727 = vmatprep.subr.mxu0 0.0
      %728 = vmatpush2.msra.mxu0 0.0
      %729 = vmatprep.subr.mxu0 0.0
      %730 = vmatpush2.msra.mxu0 0.0
      %731 = vmatprep.subr.mxu0 0.0
      %732 = vmatpush2.msra.mxu0 0.0
      %733 = vmatprep.subr.mxu0 0.0
      %734 = vmatpush2.msra.mxu0 0.0
      %735 = vmatprep.subr.mxu0 0.0
      %736 = vmatpush2.msra.mxu0 0.0
      %737 = vmatprep.subr.mxu0 0.0
      %738 = vmatpush2.msra.mxu0 0.0
      %739 = vmatprep.subr.mxu0 0.0
      %740 = vmatpush2.msra.mxu0 0.0
      %741 = vmatprep.subr.mxu0 0.0
      %742 = vmatpush2.msra.mxu0 0.0
      %743 = vmatprep.subr.mxu0 0.0
      %744 = vmatpush2.msra.mxu0 0.0
      %745 = vmatprep.subr.mxu0 0.0
      %746 = vmatpush2.msra.mxu0 0.0
      %747 = vmatprep.subr.mxu0 0.0
      %748 = vmatpush2.msra.mxu0 0.0
      %749 = vmatprep.subr.mxu0 0.0
      %750 = vmatpush2.msra.mxu0 0.0
      %751 = vmatprep.subr.mxu0 0.0
      %752 = vmatpush2.msra.mxu0 0.0
      %753 = vmatprep.subr.mxu0 0.0
      %754 = vmatpush2.msra.mxu0 0.0
      %755 = vmatprep.mubr.f32.mxu0 0.0
      %756 = vmatmul.mubr.f32.gmra.mxu0 %v479
      %v757 = vpop.f32.mrf.mxu0
      %v758 = vadd.f32 0.0, %v757
      %v759 = vpop.f32.mrf.mxu0
      %760 = vdwg.mxu0
      %v761 = vrot.slane %v680, 4
      %v762 = vmax.f32 %v680, %v761
      %v763 = vrot.slane %v762, 2
      %v764 = vmax.f32 %v762, %v763
      %v765 = vrot.slane %v764, 1
      %v766 = vmax.f32 %v764, %v765
      %v767 = vsub.f32 %v679, %v766
      %v768 = vmul.f32 %v767, 1.442695
      %v769 = vpow.pop %v768
      %v770 = vsel %vm195, %v769, 0.0
      %v771 = vrot.slane %v770, 4
      %v772 = vadd.f32 %v770, %v771
      %v773 = vrot.slane %v772, 2
      %v774 = vadd.f32 %v772, %v773
      %v775 = vrot.slane %v774, 1
      %v776 = vadd.f32 %v774, %v775
      %v777 = vrcp.pop %v776
      %v778 = vmul.f32 %v769, %v777
      %779 = vmatprep.subr.mxu0 0.0
      %780 = vmatpush1.msra.mxu0 0.0
      %781 = vmatprep.subr.mxu0 0.0
      %782 = vmatpush1.msra.mxu0 0.0
      %783 = vmatprep.subr.mxu0 0.0
      %784 = vmatpush1.msra.mxu0 0.0
      %785 = vmatprep.subr.mxu0 0.0
      %786 = vmatpush1.msra.mxu0 0.0
      %787 = vmatprep.subr.mxu0 0.0
      %788 = vmatpush1.msra.mxu0 0.0
      %789 = vmatprep.subr.mxu0 0.0
      %790 = vmatpush1.msra.mxu0 0.0
      %791 = vmatprep.subr.mxu0 0.0
      %792 = vmatpush1.msra.mxu0 0.0
      %793 = vmatprep.subr.mxu0 0.0
      %794 = vmatpush1.msra.mxu0 0.0
      %795 = vmatprep.subr.mxu0 0.0
      %796 = vmatpush1.msra.mxu0 0.0
      %797 = vmatprep.subr.mxu0 0.0
      %798 = vmatpush1.msra.mxu0 0.0
      %799 = vmatprep.subr.mxu0 0.0
      %800 = vmatpush1.msra.mxu0 0.0
      %801 = vmatprep.subr.mxu0 0.0
      %802 = vmatpush1.msra.mxu0 0.0
      %803 = vmatprep.subr.mxu0 0.0
      %804 = vmatpush1.msra.mxu0 0.0
      %805 = vmatprep.subr.mxu0 0.0
      %806 = vmatpush1.msra.mxu0 0.0
      %807 = vmatprep.subr.mxu0 0.0
      %808 = vmatpush1.msra.mxu0 0.0
      %809 = vmatprep.subr.mxu0 0.0
      %810 = vmatpush1.msra.mxu0 %v778
      %811 = vmatprep.subr.mxu0 0.0
      %812 = vmatpush2.msra.mxu0 0.0
      %813 = vmatprep.subr.mxu0 0.0
      %814 = vmatpush2.msra.mxu0 0.0
      %815 = vmatprep.subr.mxu0 0.0
      %816 = vmatpush2.msra.mxu0 0.0
      %817 = vmatprep.subr.mxu0 0.0
      %818 = vmatpush2.msra.mxu0 0.0
      %819 = vmatprep.subr.mxu0 0.0
      %820 = vmatpush2.msra.mxu0 0.0
      %821 = vmatprep.subr.mxu0 0.0
      %822 = vmatpush2.msra.mxu0 0.0
      %823 = vmatprep.subr.mxu0 0.0
      %824 = vmatpush2.msra.mxu0 0.0
      %825 = vmatprep.subr.mxu0 0.0
      %826 = vmatpush2.msra.mxu0 0.0
      %827 = vmatprep.subr.mxu0 0.0
      %828 = vmatpush2.msra.mxu0 0.0
      %829 = vmatprep.subr.mxu0 0.0
      %830 = vmatpush2.msra.mxu0 0.0
      %831 = vmatprep.subr.mxu0 0.0
      %832 = vmatpush2.msra.mxu0 0.0
      %833 = vmatprep.subr.mxu0 0.0
      %834 = vmatpush2.msra.mxu0 0.0
      %835 = vmatprep.subr.mxu0 0.0
      %836 = vmatpush2.msra.mxu0 0.0
      %837 = vmatprep.subr.mxu0 0.0
      %838 = vmatpush2.msra.mxu0 0.0
      %839 = vmatprep.subr.mxu0 0.0
      %840 = vmatpush2.msra.mxu0 0.0
      %841 = vmatprep.subr.mxu0 0.0
      %842 = vmatpush2.msra.mxu0 0.0
      %843 = vmatprep.mubr.f32.mxu0 0.0
      %844 = vmatmul.mubr.f32.gmra.mxu0 %v482
      %v845 = vpop.f32.mrf.mxu0
      %v846 = vadd.f32 0.0, %v845
      %v847 = vpop.f32.mrf.mxu0
      %848 = vdwg.mxu0
      %v850 = vsel %vm195, %v758, 0
      %v853 = vsel %vm195, %v846, 0
      %855 = vmatprep.subr.mxu0 0.0
      %856 = vmatpush1.xpose.msra.mxu0 0.0
      %857 = vmatprep.subr.mxu0 0.0
      %858 = vmatpush1.xpose.msra.mxu0 0.0
      %859 = vmatprep.subr.mxu0 0.0
      %860 = vmatpush1.xpose.msra.mxu0 0.0
      %861 = vmatprep.subr.mxu0 0.0
      %862 = vmatpush1.xpose.msra.mxu0 0.0
      %863 = vmatprep.subr.mxu0 0.0
      %864 = vmatpush1.xpose.msra.mxu0 0.0
      %865 = vmatprep.subr.mxu0 0.0
      %866 = vmatpush1.xpose.msra.mxu0 0.0
      %867 = vmatprep.subr.mxu0 0.0
      %868 = vmatpush1.xpose.msra.mxu0 0.0
      %869 = vmatprep.subr.mxu0 0.0
      %870 = vmatpush1.xpose.msra.mxu0 0.0
      %871 = vmatprep.subr.mxu0 0.0
      %872 = vmatpush1.xpose.msra.mxu0 0.0
      %873 = vmatprep.subr.mxu0 0.0
      %874 = vmatpush1.xpose.msra.mxu0 0.0
      %875 = vmatprep.subr.mxu0 0.0
      %876 = vmatpush1.xpose.msra.mxu0 0.0
      %877 = vmatprep.subr.mxu0 0.0
      %878 = vmatpush1.xpose.msra.mxu0 0.0
      %879 = vmatprep.subr.mxu0 0.0
      %880 = vmatpush1.xpose.msra.mxu0 0.0
      %881 = vmatprep.subr.mxu0 0.0
      %882 = vmatpush1.xpose.msra.mxu0 0.0
      %883 = vmatprep.subr.mxu0 0.0
      %884 = vmatpush1.xpose.msra.mxu0 0.0
      %885 = vmatprep.subr.mxu0 0.0
      %886 = vmatpush1.xpose.msra.mxu0 %v853
      %887 = vmatprep.subr.mxu0 0.0
      %888 = vmatpush2.xpose.msra.mxu0 0.0
      %889 = vmatprep.subr.mxu0 0.0
      %890 = vmatpush2.xpose.msra.mxu0 0.0
      %891 = vmatprep.subr.mxu0 0.0
      %892 = vmatpush2.xpose.msra.mxu0 0.0
      %893 = vmatprep.subr.mxu0 0.0
      %894 = vmatpush2.xpose.msra.mxu0 0.0
      %895 = vmatprep.subr.mxu0 0.0
      %896 = vmatpush2.xpose.msra.mxu0 0.0
      %897 = vmatprep.subr.mxu0 0.0
      %898 = vmatpush2.xpose.msra.mxu0 0.0
      %899 = vmatprep.subr.mxu0 0.0
      %900 = vmatpush2.xpose.msra.mxu0 0.0
      %901 = vmatprep.subr.mxu0 0.0
      %902 = vmatpush2.xpose.msra.mxu0 0.0
      %903 = vmatprep.subr.mxu0 0.0
      %904 = vmatpush2.xpose.msra.mxu0 0.0
      %905 = vmatprep.subr.mxu0 0.0
      %906 = vmatpush2.xpose.msra.mxu0 0.0
      %907 = vmatprep.subr.mxu0 0.0
      %908 = vmatpush2.xpose.msra.mxu0 0.0
      %909 = vmatprep.subr.mxu0 0.0
      %910 = vmatpush2.xpose.msra.mxu0 0.0
      %911 = vmatprep.subr.mxu0 0.0
      %912 = vmatpush2.xpose.msra.mxu0 0.0
      %913 = vmatprep.subr.mxu0 0.0
      %914 = vmatpush2.xpose.msra.mxu0 0.0
      %915 = vmatprep.subr.mxu0 0.0
      %916 = vmatpush2.xpose.msra.mxu0 0.0
      %917 = vmatprep.subr.mxu0 0.0
      %918 = vmatpush2.xpose.msra.mxu0 0.0
      %919 = vmatprep.mubr.f32.mxu0 0.0
      %920 = vmatmul.mubr.f32.gmra.mxu0 %v850
      %v921 = vpop.f32.mrf.mxu0
      %v922 = vadd.f32 1e-20, %v921
      %v923 = vpop.f32.mrf.mxu0
      %924 = vdwg.mxu0
      %v925 = vlog2.pop %v922
      %v926 = vmul.f32 %v925, 0.6931472
      %v927 = vsel %vm195, %v926, -inf
      %928 = vmax.xlane.f32.xlu0 %v927
      %v929 = vpop.xlane.xlu0 %928
      %v930 = vsub.f32 %v926, %v929
      %v931 = vmul.f32 %v930, 1.442695
      %v932 = vpow.pop %v931
      %v933 = vsel %vm195, %v932, 0.0
      %934 = vadd.xlane.f32.xlu0 %v933
      %v935 = vpop.xlane.xlu0 %934
      %v936 = vlog2.pop %v935
      %v937 = vmul.f32 %v936, 0.6931472
      %v938 = vadd.f32 %v929, %v937
      %v939 = vsel %vm568, %v926, 0.0
      %v940 = vsel %vm195, %v939, 0.0
      %941 = vadd.xlane.f32.xlu0 %v940
      %v942 = vpop.xlane.xlu0 %941
      %v943 = vsub.f32 %v938, %v942
      %v944 = vrot.slane %v943, 4
      %v945 = vadd.f32 %v943, %v944
      %v946 = vrot.slane %v945, 2
      %v947 = vadd.f32 %v945, %v946
      %v948 = vrot.slane %v947, 1
      %v949 = vadd.f32 %v947, %v948
      %vm950 = vcmp.ge.f32.partialorder %v926, %v929
      %v951 = vsel %vm950, %v228, 8
      %v952 = vsel %vm195, %v951, 2147483647
      %v953 = vand.u32 %v952, 65535
      %v954 = vshra.s32 %v952, 16
      %v955 = vcvt.s32.f32 %v953
      %v956 = vcvt.s32.f32 %v954
      %957 = vmin.xlane.f32.xlu0 %v956
      %v958 = vpop.xlane.xlu0 %957
      %vm959 = vcmp.eq.f32.partialorder %v956, %v958
      %v960 = vsel %vm959, %v955, inf
      %961 = vmin.xlane.f32.xlu0 %v960
      %v962 = vpop.xlane.xlu0 %961
      %v963 = vcvt.f32.s32 %v962
      %v964 = vcvt.f32.s32 %v958
      %v965 = vshll.u32 %v964, 16
      %v966 = vadd.s32 %v965, %v963
      %vm967 = vcmp.eq.s32.totalorder %v966, %v226
      %v968 = vsel %vm967, 1, 0
      %v969 = vcvt.s32.f32 %v968
      %v970 = vrot.slane %v969, 4
      %v971 = vadd.f32 %v969, %v970
      %v972 = vrot.slane %v971, 2
      %v973 = vadd.f32 %v971, %v972
      %v974 = vrot.slane %v973, 1
      %v975 = vadd.f32 %v973, %v974
      %vm976 = vcmask 7168
      %v977 = vsel %vm976, %v579, %v949
      %vm978 = vcmask 15360
      %v979 = vsel %vm978, %v977, %v605
      %vm980 = vcmask 23552
      %v981 = vsel %vm980, %v979, %v975
      %vm982 = vcmask 24576
      %983 = vst.msk [vmem:[%s112] sm:$0x1] %vm982, %v981
      %p984 = scmp.lt.s32.totalorder %s12, 1
      %s985 = scalar_select %p984, %s12, 1
      %s986 = scalar_lea.vmem %s1, %s985
      // Predicated region
      $region25: #{crw_forward.3} parent=23 // pred_check
        %p987 = pneg %p56
      $region26: #{crw_forward.3} parent=23 // pred_check_branch
        %989 = sbr.rel (%p987) target = $region28
      $region27: #{crw_forward.3} parent=23 // pred_region
        _
      $region28: #{crw_forward.3} parent=23 // pred_fallthru
        _
    $region24: #{crw_forward.3} parent=5 // pred_fallthru
      _
    %p990 = scmp.le.s32.totalorder 2, %s7
    // Predicated region
    $region29: #{crw_forward.3} parent=5 // pred_check
      %p991 = pneg %p990
    $region30: #{crw_forward.3} parent=5 // pred_check_branch
      %993 = sbr.rel (%p991) target = $region32
    $region31: #{crw_forward.3} parent=5 // pred_region
      %s994 = ssub.s32 %s7, 2
      // Predicated region
      $region33: #{crw_forward.3} parent=31 // pred_check
        %p995 = pneg %p62
      $region34: #{crw_forward.3} parent=31 // pred_check_branch
        %997 = sbr.rel (%p995) target = $region36
      $region35: #{crw_forward.3} parent=31 // pred_region
        %p998 = scmp.lt.s32.totalorder %s13, 1
        %s999 = scalar_select %p998, %s13, 1
        %s1000 = scalar_lea.vmem %s1, %s999
      $region36: #{crw_forward.3} parent=31 // pred_fallthru
        _
    $region32: #{crw_forward.3} parent=5 // pred_fallthru
      _
  $region6: #{crw_forward.3} parent=0 // loop_footer
    %s11 = sadd.s32 1, %s7
  $region7: #{crw_forward.3} parent=0 // loop_footer_branch
    %6 = sbr.rel target = $region3
  $region8: #{crw_forward.3} parent=0 // loop_exit
    _

// kernel: crw_forward.2
$region0: #{crw_forward.2}
  #allocation0 [shape = 'u32[]', space=smem, size = 0x4, offset = 0x4, fixed_abs, tag = 'smem constant byte address 0x4 - core index']
  #allocation1 [shape = 'u32[144,128]{1,0:T(1,128)}', space=vmem, size = 0x12000, scoped, tag = 'internal scratch']
  %s0 = inlined_call_operand.vmem [shape: bf16[4096,32], index: 0, kind: input, shape index: {}]
  %s1 = inlined_call_operand.vmem [shape: bf16[32,32], index: 1, kind: input, shape index: {}]
  %s2 = inlined_call_operand.vmem [shape: f32[1,32], index: 2, kind: input, shape index: {}]
  %s3 = inlined_call_operand.vmem [shape: bf16[32,64], index: 3, kind: input, shape index: {}]
  %s4 = inlined_call_operand.vmem [shape: f32[1,64], index: 4, kind: input, shape index: {}]
  %s5 = inlined_call_operand.vmem [shape: f32[64,64], index: 5, kind: output, shape index: {}]
  %s6 = sld [smem:[#allocation0]]
  $region53: #{crw_forward.2} parent=0
    _
  %s8 = ssub.s32 1, %s6
  %s9 = scalar_select 0, %s8, %s6
  loop: start=0, step=1, limit=4
  $region2: #{crw_forward.2} parent=0 // loop_pre_header
    _
  $region3: #{crw_forward.2} parent=0 // loop_header
    %s11 = sphi 0, %s15
    %p12 = scmp.ge.s32.totalorder %s11, 4
    %s21 = sphi 0, %s23
    %s24 = sphi 0, %s21
    %s25 = sphi 0, %s24
    %s41 = sphi 0, %s25
    %s45 = sphi 0, %s45
    %s47 = sphi 0, %s45
    %s48 = sphi 0, %s47
    %s62 = sphi 0, %s48
    %s66 = sphi 0, %s66
    %s68 = sphi 0, %s66
    %s69 = sphi 0, %s68
    %s83 = sphi 0, %s69
    %s87 = sphi 0, %s87
    %s89 = sphi 0, %s87
    %s90 = sphi 0, %s89
    %s104 = sphi 0, %s90
    %s108 = sphi 0, %s108
    %s110 = sphi 0, %s108
    %s111 = sphi 0, %s110
    %s125 = sphi 0, %s111
    %s131 = sphi 0, %s133
    %s134 = sphi 0, %s131
    %s135 = sphi 0, %s134
    %s151 = sphi 0, %s135
  $region4: #{crw_forward.2} parent=0 // loop_header_branch
    %14 = sbr.rel (%p12) target = $region8
  $region5: #{crw_forward.2} parent=0 // loop_body
    %s16 = ssub.s32 %s11, 1
    %s17 = ssub.s32 %s11, 2
    %s18 = sadd.s32 %s11, 1
    %s19 = ssub.s32 %s11, %s18
    %p20 = scmp.eq.s32.totalorder %s19, 0
    %s22 = sadd.s32 %s21, 1
    %s23 = scalar_select %p20, %s21, %s22
    %p26 = pneg %p20
    %p27 = scmp.eq.s32.totalorder %s11, 1
    %p28 = por %p26, %p27
    %p29 = scmp.ne.s32.totalorder %s21, %s24
    %p30 = scmp.eq.s32.totalorder %s11, 0
    %p31 = por %p29, %p30
    %p32 = scmp.ne.s32.totalorder %s21, %s24
    %p33 = scmp.eq.s32.totalorder %s16, 1
    %p34 = por %p32, %p33
    %p35 = scmp.ne.s32.totalorder %s24, %s25
    %p36 = scmp.eq.s32.totalorder %s16, 0
    %p37 = por %p35, %p36
    %p38 = scmp.ne.s32.totalorder %s24, %s25
    %p39 = scmp.eq.s32.totalorder %s17, 1
    %p40 = por %p38, %p39
    %p42 = scmp.ne.s32.totalorder %s25, %s41
    %p43 = scmp.eq.s32.totalorder %s17, 0
    %p44 = por %p42, %p43
    %s46 = sadd.s32 %s45, 1
    %p49 = scmp.eq.s32.totalorder %s11, 1
    %p50 = scmp.ne.s32.totalorder %s45, %s47
    %p51 = scmp.eq.s32.totalorder %s11, 0
    %p52 = por %p50, %p51
    %p53 = scmp.ne.s32.totalorder %s45, %s47
    %p54 = scmp.eq.s32.totalorder %s16, 1
    %p55 = por %p53, %p54
    %p56 = scmp.ne.s32.totalorder %s47, %s48
    %p57 = scmp.eq.s32.totalorder %s16, 0
    %p58 = por %p56, %p57
    %p59 = scmp.ne.s32.totalorder %s47, %s48
    %p60 = scmp.eq.s32.totalorder %s17, 1
    %p61 = por %p59, %p60
    %p63 = scmp.ne.s32.totalorder %s48, %s62
    %p64 = scmp.eq.s32.totalorder %s17, 0
    %p65 = por %p63, %p64
    %s67 = sadd.s32 %s66, 1
    %p70 = scmp.eq.s32.totalorder %s11, 1
    %p71 = scmp.ne.s32.totalorder %s66, %s68
    %p72 = scmp.eq.s32.totalorder %s11, 0
    %p73 = por %p71, %p72
    %p74 = scmp.ne.s32.totalorder %s66, %s68
    %p75 = scmp.eq.s32.totalorder %s16, 1
    %p76 = por %p74, %p75
    %p77 = scmp.ne.s32.totalorder %s68, %s69
    %p78 = scmp.eq.s32.totalorder %s16, 0
    %p79 = por %p77, %p78
    %p80 = scmp.ne.s32.totalorder %s68, %s69
    %p81 = scmp.eq.s32.totalorder %s17, 1
    %p82 = por %p80, %p81
    %p84 = scmp.ne.s32.totalorder %s69, %s83
    %p85 = scmp.eq.s32.totalorder %s17, 0
    %p86 = por %p84, %p85
    %s88 = sadd.s32 %s87, 1
    %p91 = scmp.eq.s32.totalorder %s11, 1
    %p92 = scmp.ne.s32.totalorder %s87, %s89
    %p93 = scmp.eq.s32.totalorder %s11, 0
    %p94 = por %p92, %p93
    %p95 = scmp.ne.s32.totalorder %s87, %s89
    %p96 = scmp.eq.s32.totalorder %s16, 1
    %p97 = por %p95, %p96
    %p98 = scmp.ne.s32.totalorder %s89, %s90
    %p99 = scmp.eq.s32.totalorder %s16, 0
    %p100 = por %p98, %p99
    %p101 = scmp.ne.s32.totalorder %s89, %s90
    %p102 = scmp.eq.s32.totalorder %s17, 1
    %p103 = por %p101, %p102
    %p105 = scmp.ne.s32.totalorder %s90, %s104
    %p106 = scmp.eq.s32.totalorder %s17, 0
    %p107 = por %p105, %p106
    %s109 = sadd.s32 %s108, 1
    %p112 = scmp.eq.s32.totalorder %s11, 1
    %p113 = scmp.ne.s32.totalorder %s108, %s110
    %p114 = scmp.eq.s32.totalorder %s11, 0
    %p115 = por %p113, %p114
    %p116 = scmp.ne.s32.totalorder %s108, %s110
    %p117 = scmp.eq.s32.totalorder %s16, 1
    %p118 = por %p116, %p117
    %p119 = scmp.ne.s32.totalorder %s110, %s111
    %p120 = scmp.eq.s32.totalorder %s16, 0
    %p121 = por %p119, %p120
    %p122 = scmp.ne.s32.totalorder %s110, %s111
    %p123 = scmp.eq.s32.totalorder %s17, 1
    %p124 = por %p122, %p123
    %p126 = scmp.ne.s32.totalorder %s111, %s125
    %p127 = scmp.eq.s32.totalorder %s17, 0
    %p128 = por %p126, %p127
    %s129 = ssub.s32 %s11, %s18
    %p130 = scmp.eq.s32.totalorder %s129, 0
    %s132 = sadd.s32 %s131, 1
    %s133 = scalar_select %p130, %s131, %s132
    %p136 = pneg %p130
    %p137 = scmp.eq.s32.totalorder %s11, 1
    %p138 = por %p136, %p137
    %p139 = scmp.ne.s32.totalorder %s131, %s134
    %p140 = scmp.eq.s32.totalorder %s11, 0
    %p141 = por %p139, %p140
    %p142 = scmp.ne.s32.totalorder %s131, %s134
    %p143 = scmp.eq.s32.totalorder %s16, 1
    %p144 = por %p142, %p143
    %p145 = scmp.ne.s32.totalorder %s134, %s135
    %p146 = scmp.eq.s32.totalorder %s16, 0
    %p147 = por %p145, %p146
    %p148 = scmp.ne.s32.totalorder %s134, %s135
    %p149 = scmp.eq.s32.totalorder %s17, 1
    %p150 = por %p148, %p149
    %p152 = scmp.ne.s32.totalorder %s135, %s151
    %p153 = scmp.eq.s32.totalorder %s17, 0
    %p154 = por %p152, %p153
    %p155 = scmp.le.s32.totalorder 1, %s11
    %p156 = scmp.lt.s32.totalorder %s11, 3
    %p157 = pnand %p155, %p156
    %p158 = pneg %p157
    // Predicated region
    $region9: #{crw_forward.2} parent=5 // pred_check
      _
    $region10: #{crw_forward.2} parent=5 // pred_check_branch
      %160 = sbr.rel (%p157) target = $region12
    $region11: #{crw_forward.2} parent=5 // pred_region
      %s161 = ssub.s32 %s11, 1
      // Predicated region
      $region13: #{crw_forward.2} parent=11 // pred_check
        %p162 = pneg %p58
      $region14: #{crw_forward.2} parent=11 // pred_check_branch
        %164 = sbr.rel (%p162) target = $region16
      $region15: #{crw_forward.2} parent=11 // pred_region
        _
      $region16: #{crw_forward.2} parent=11 // pred_fallthru
        _
      // Predicated region
      $region17: #{crw_forward.2} parent=11 // pred_check
        %p165 = pneg %p79
      $region18: #{crw_forward.2} parent=11 // pred_check_branch
        %167 = sbr.rel (%p165) target = $region20
      $region19: #{crw_forward.2} parent=11 // pred_region
        _
      $region20: #{crw_forward.2} parent=11 // pred_fallthru
        _
      // Predicated region
      $region21: #{crw_forward.2} parent=11 // pred_check
        %p168 = pneg %p100
      $region22: #{crw_forward.2} parent=11 // pred_check_branch
        %170 = sbr.rel (%p168) target = $region24
      $region23: #{crw_forward.2} parent=11 // pred_region
        _
      $region24: #{crw_forward.2} parent=11 // pred_fallthru
        _
      // Predicated region
      $region25: #{crw_forward.2} parent=11 // pred_check
        %p171 = pneg %p121
      $region26: #{crw_forward.2} parent=11 // pred_check_branch
        %173 = sbr.rel (%p171) target = $region28
      $region27: #{crw_forward.2} parent=11 // pred_region
        _
      $region28: #{crw_forward.2} parent=11 // pred_fallthru
        _
    $region12: #{crw_forward.2} parent=5 // pred_fallthru
      _
    %p174 = scmp.lt.s32.totalorder %s11, 2
    // Predicated region
    $region29: #{crw_forward.2} parent=5 // pred_check
      %p175 = pneg %p174
    $region30: #{crw_forward.2} parent=5 // pred_check_branch
      %177 = sbr.rel (%p175) target = $region32
    $region31: #{crw_forward.2} parent=5 // pred_region
      // Predicated region
      $region33: #{crw_forward.2} parent=31 // pred_check
        %p178 = pneg %p31
      $region34: #{crw_forward.2} parent=31 // pred_check_branch
        %180 = sbr.rel (%p178) target = $region36
      $region35: #{crw_forward.2} parent=31 // pred_region
        %s181 = smul.u32 256, %s11
        %p182 = scmp.lt.s32.totalorder %s181, 511
        %s183 = scalar_select %p182, %s181, 511
        %s184 = smul.addr %s183, 4
        %s185 = scalar_lea.vmem %s0, %s184
        %s186 = smul.u32 256, %s11
      $region36: #{crw_forward.2} parent=31 // pred_fallthru
        _
    $region32: #{crw_forward.2} parent=5 // pred_fallthru
      _
    %p187 = scmp.le.s32.totalorder 1, %s11
    %p188 = scmp.lt.s32.totalorder %s11, 3
    %p189 = pnand %p187, %p188
    %p190 = pneg %p189
    // Predicated region
    $region37: #{crw_forward.2} parent=5 // pred_check
      _
    $region38: #{crw_forward.2} parent=5 // pred_check_branch
      %192 = sbr.rel (%p189) target = $region40
    $region39: #{crw_forward.2} parent=5 // pred_region
      %s193 = ssub.s32 %s11, 1
      %s194 = smul.u32 256, %s16
      %p195 = scmp.lt.s32.totalorder %s194, 511
      %s196 = scalar_select %p195, %s194, 511
      %s197 = smul.addr %s196, 4
      %s198 = scalar_lea.vmem %s0, %s197
      %p199 = pneg %p37
      %p200 = pneg %p34
      %p201 = pneg %p58
      %p202 = pneg %p55
      %p203 = pneg %p79
      %p204 = pneg %p76
      %p205 = pneg %p100
      %p206 = pneg %p97
      %p207 = pneg %p121
      %p208 = pneg %p118
      %p209 = pneg %p147
      %p210 = pneg %p144
      %s211 = smul.u32 4, %s16
      %p212 = scmp.lt.s32.totalorder %s211, 7
      %s213 = scalar_select %p212, %s211, 7
      %s214 = smul.addr %s213, 8
      %s215 = scalar_lea.vmem %s5, %s214
      %s216 = smul.u32 256, %s16
      %p217 = scmp.lt.s32.totalorder %s216, 511
      %s218 = scalar_select %p217, %s216, 511
      %s219 = smul.addr %s218, 4
      %s220 = scalar_lea.vmem %s0, %s219
      %s221 = smul.u32 256, %s16
      %s222 = smul.u32 4, %s16
      %p223 = scmp.lt.s32.totalorder %s222, 7
      %s224 = scalar_select %p223, %s222, 7
      %s225 = smul.addr %s224, 8
      %s226 = scalar_lea.vmem %s5, %s225
      %s227 = smul.u32 4, %s16
      %v229 = vld [vmem:[%s220] sm:$0xf]
      %v230 = vld [vmem:[%s220 + $0x4] sm:$0xf]
      %v231 = vld [vmem:[%s220 + $0x8] sm:$0xf]
      %v232 = vld [vmem:[%s220 + $0xc] sm:$0xf]
      %v233 = vld [vmem:[%s220 + $0x10] sm:$0xf]
      %v234 = vld [vmem:[%s220 + $0x14] sm:$0xf]
      %v235 = vld [vmem:[%s220 + $0x18] sm:$0xf]
      %v236 = vld [vmem:[%s220 + $0x1c] sm:$0xf]
      %v237 = vld [vmem:[%s220 + $0x20] sm:$0xf]
      %v238 = vld [vmem:[%s220 + $0x24] sm:$0xf]
      %v239 = vld [vmem:[%s220 + $0x28] sm:$0xf]
      %v240 = vld [vmem:[%s220 + $0x2c] sm:$0xf]
      %v241 = vld [vmem:[%s220 + $0x30] sm:$0xf]
      %v242 = vld [vmem:[%s220 + $0x34] sm:$0xf]
      %v243 = vld [vmem:[%s220 + $0x38] sm:$0xf]
      %v244 = vld [vmem:[%s220 + $0x3c] sm:$0xf]
      %v245 = vld [vmem:[%s220 + $0x40] sm:$0xf]
      %v246 = vld [vmem:[%s220 + $0x44] sm:$0xf]
      %v247 = vld [vmem:[%s220 + $0x48] sm:$0xf]
      %v248 = vld [vmem:[%s220 + $0x4c] sm:$0xf]
      %v249 = vld [vmem:[%s220 + $0x50] sm:$0xf]
      %v250 = vld [vmem:[%s220 + $0x54] sm:$0xf]
      %v251 = vld [vmem:[%s220 + $0x58] sm:$0xf]
      %v252 = vld [vmem:[%s220 + $0x5c] sm:$0xf]
      %v253 = vld [vmem:[%s220 + $0x60] sm:$0xf]
      %v254 = vld [vmem:[%s220 + $0x64] sm:$0xf]
      %v255 = vld [vmem:[%s220 + $0x68] sm:$0xf]
      %v256 = vld [vmem:[%s220 + $0x6c] sm:$0xf]
      %v257 = vld [vmem:[%s220 + $0x70] sm:$0xf]
      %v258 = vld [vmem:[%s220 + $0x74] sm:$0xf]
      %v259 = vld [vmem:[%s220 + $0x78] sm:$0xf]
      %v260 = vld [vmem:[%s220 + $0x7c] sm:$0xf]
      %v261 = vld [vmem:[%s220 + $0x80] sm:$0xf]
      %v262 = vld [vmem:[%s220 + $0x84] sm:$0xf]
      %v263 = vld [vmem:[%s220 + $0x88] sm:$0xf]
      %v264 = vld [vmem:[%s220 + $0x8c] sm:$0xf]
      %v265 = vld [vmem:[%s220 + $0x90] sm:$0xf]
      %v266 = vld [vmem:[%s220 + $0x94] sm:$0xf]
      %v267 = vld [vmem:[%s220 + $0x98] sm:$0xf]
      %v268 = vld [vmem:[%s220 + $0x9c] sm:$0xf]
      %v269 = vld [vmem:[%s220 + $0xa0] sm:$0xf]
      %v270 = vld [vmem:[%s220 + $0xa4] sm:$0xf]
      %v271 = vld [vmem:[%s220 + $0xa8] sm:$0xf]
      %v272 = vld [vmem:[%s220 + $0xac] sm:$0xf]
      %v273 = vld [vmem:[%s220 + $0xb0] sm:$0xf]
      %v274 = vld [vmem:[%s220 + $0xb4] sm:$0xf]
      %v275 = vld [vmem:[%s220 + $0xb8] sm:$0xf]
      %v276 = vld [vmem:[%s220 + $0xbc] sm:$0xf]
      %v277 = vld [vmem:[%s220 + $0xc0] sm:$0xf]
      %v278 = vld [vmem:[%s220 + $0xc4] sm:$0xf]
      %v279 = vld [vmem:[%s220 + $0xc8] sm:$0xf]
      %v280 = vld [vmem:[%s220 + $0xcc] sm:$0xf]
      %v281 = vld [vmem:[%s220 + $0xd0] sm:$0xf]
      %v282 = vld [vmem:[%s220 + $0xd4] sm:$0xf]
      %v283 = vld [vmem:[%s220 + $0xd8] sm:$0xf]
      %v284 = vld [vmem:[%s220 + $0xdc] sm:$0xf]
      %v285 = vld [vmem:[%s220 + $0xe0] sm:$0xf]
      %v286 = vld [vmem:[%s220 + $0xe4] sm:$0xf]
      %v287 = vld [vmem:[%s220 + $0xe8] sm:$0xf]
      %v288 = vld [vmem:[%s220 + $0xec] sm:$0xf]
      %v289 = vld [vmem:[%s220 + $0xf0] sm:$0xf]
      %v290 = vld [vmem:[%s220 + $0xf4] sm:$0xf]
      %v291 = vld [vmem:[%s220 + $0xf8] sm:$0xf]
      %v292 = vld [vmem:[%s220 + $0xfc] sm:$0xf]
      %v293 = vld [vmem:[%s220 + $0x100] sm:$0xf]
      %v294 = vld [vmem:[%s220 + $0x104] sm:$0xf]
      %v295 = vld [vmem:[%s220 + $0x108] sm:$0xf]
      %v296 = vld [vmem:[%s220 + $0x10c] sm:$0xf]
      %v297 = vld [vmem:[%s220 + $0x110] sm:$0xf]
      %v298 = vld [vmem:[%s220 + $0x114] sm:$0xf]
      %v299 = vld [vmem:[%s220 + $0x118] sm:$0xf]
      %v300 = vld [vmem:[%s220 + $0x11c] sm:$0xf]
      %v301 = vld [vmem:[%s220 + $0x120] sm:$0xf]
      %v302 = vld [vmem:[%s220 + $0x124] sm:$0xf]
      %v303 = vld [vmem:[%s220 + $0x128] sm:$0xf]
      %v304 = vld [vmem:[%s220 + $0x12c] sm:$0xf]
      %v305 = vld [vmem:[%s220 + $0x130] sm:$0xf]
      %v306 = vld [vmem:[%s220 + $0x134] sm:$0xf]
      %v307 = vld [vmem:[%s220 + $0x138] sm:$0xf]
      %v308 = vld [vmem:[%s220 + $0x13c] sm:$0xf]
      %v309 = vld [vmem:[%s220 + $0x140] sm:$0xf]
      %v310 = vld [vmem:[%s220 + $0x144] sm:$0xf]
      %v311 = vld [vmem:[%s220 + $0x148] sm:$0xf]
      %v312 = vld [vmem:[%s220 + $0x14c] sm:$0xf]
      %v313 = vld [vmem:[%s220 + $0x150] sm:$0xf]
      %v314 = vld [vmem:[%s220 + $0x154] sm:$0xf]
      %v315 = vld [vmem:[%s220 + $0x158] sm:$0xf]
      %v316 = vld [vmem:[%s220 + $0x15c] sm:$0xf]
      %v317 = vld [vmem:[%s220 + $0x160] sm:$0xf]
      %v318 = vld [vmem:[%s220 + $0x164] sm:$0xf]
      %v319 = vld [vmem:[%s220 + $0x168] sm:$0xf]
      %v320 = vld [vmem:[%s220 + $0x16c] sm:$0xf]
      %v321 = vld [vmem:[%s220 + $0x170] sm:$0xf]
      %v322 = vld [vmem:[%s220 + $0x174] sm:$0xf]
      %v323 = vld [vmem:[%s220 + $0x178] sm:$0xf]
      %v324 = vld [vmem:[%s220 + $0x17c] sm:$0xf]
      %v325 = vld [vmem:[%s220 + $0x180] sm:$0xf]
      %v326 = vld [vmem:[%s220 + $0x184] sm:$0xf]
      %v327 = vld [vmem:[%s220 + $0x188] sm:$0xf]
      %v328 = vld [vmem:[%s220 + $0x18c] sm:$0xf]
      %v329 = vld [vmem:[%s220 + $0x190] sm:$0xf]
      %v330 = vld [vmem:[%s220 + $0x194] sm:$0xf]
      %v331 = vld [vmem:[%s220 + $0x198] sm:$0xf]
      %v332 = vld [vmem:[%s220 + $0x19c] sm:$0xf]
      %v333 = vld [vmem:[%s220 + $0x1a0] sm:$0xf]
      %v334 = vld [vmem:[%s220 + $0x1a4] sm:$0xf]
      %v335 = vld [vmem:[%s220 + $0x1a8] sm:$0xf]
      %v336 = vld [vmem:[%s220 + $0x1ac] sm:$0xf]
      %v337 = vld [vmem:[%s220 + $0x1b0] sm:$0xf]
      %v338 = vld [vmem:[%s220 + $0x1b4] sm:$0xf]
      %v339 = vld [vmem:[%s220 + $0x1b8] sm:$0xf]
      %v340 = vld [vmem:[%s220 + $0x1bc] sm:$0xf]
      %v341 = vld [vmem:[%s220 + $0x1c0] sm:$0xf]
      %v342 = vld [vmem:[%s220 + $0x1c4] sm:$0xf]
      %v343 = vld [vmem:[%s220 + $0x1c8] sm:$0xf]
      %v344 = vld [vmem:[%s220 + $0x1cc] sm:$0xf]
      %v345 = vld [vmem:[%s220 + $0x1d0] sm:$0xf]
      %v346 = vld [vmem:[%s220 + $0x1d4] sm:$0xf]
      %v347 = vld [vmem:[%s220 + $0x1d8] sm:$0xf]
      %v348 = vld [vmem:[%s220 + $0x1dc] sm:$0xf]
      %v349 = vld [vmem:[%s220 + $0x1e0] sm:$0xf]
      %v350 = vld [vmem:[%s220 + $0x1e4] sm:$0xf]
      %v351 = vld [vmem:[%s220 + $0x1e8] sm:$0xf]
      %v352 = vld [vmem:[%s220 + $0x1ec] sm:$0xf]
      %v353 = vld [vmem:[%s220 + $0x1f0] sm:$0xf]
      %v354 = vld [vmem:[%s220 + $0x1f4] sm:$0xf]
      %v355 = vld [vmem:[%s220 + $0x1f8] sm:$0xf]
      %v356 = vld [vmem:[%s220 + $0x1fc] sm:$0xf]
      %v357 = vld [vmem:[%s220 + $0x200] sm:$0xf]
      %v358 = vld [vmem:[%s220 + $0x204] sm:$0xf]
      %v359 = vld [vmem:[%s220 + $0x208] sm:$0xf]
      %v360 = vld [vmem:[%s220 + $0x20c] sm:$0xf]
      %v361 = vld [vmem:[%s220 + $0x210] sm:$0xf]
      %v362 = vld [vmem:[%s220 + $0x214] sm:$0xf]
      %v363 = vld [vmem:[%s220 + $0x218] sm:$0xf]
      %v364 = vld [vmem:[%s220 + $0x21c] sm:$0xf]
      %v365 = vld [vmem:[%s220 + $0x220] sm:$0xf]
      %v366 = vld [vmem:[%s220 + $0x224] sm:$0xf]
      %v367 = vld [vmem:[%s220 + $0x228] sm:$0xf]
      %v368 = vld [vmem:[%s220 + $0x22c] sm:$0xf]
      %v369 = vld [vmem:[%s220 + $0x230] sm:$0xf]
      %v370 = vld [vmem:[%s220 + $0x234] sm:$0xf]
      %v371 = vld [vmem:[%s220 + $0x238] sm:$0xf]
      %v372 = vld [vmem:[%s220 + $0x23c] sm:$0xf]
      %v373 = vld [vmem:[%s220 + $0x240] sm:$0xf]
      %v374 = vld [vmem:[%s220 + $0x244] sm:$0xf]
      %v375 = vld [vmem:[%s220 + $0x248] sm:$0xf]
      %v376 = vld [vmem:[%s220 + $0x24c] sm:$0xf]
      %v377 = vld [vmem:[%s220 + $0x250] sm:$0xf]
      %v378 = vld [vmem:[%s220 + $0x254] sm:$0xf]
      %v379 = vld [vmem:[%s220 + $0x258] sm:$0xf]
      %v380 = vld [vmem:[%s220 + $0x25c] sm:$0xf]
      %v381 = vld [vmem:[%s220 + $0x260] sm:$0xf]
      %v382 = vld [vmem:[%s220 + $0x264] sm:$0xf]
      %v383 = vld [vmem:[%s220 + $0x268] sm:$0xf]
      %v384 = vld [vmem:[%s220 + $0x26c] sm:$0xf]
      %v385 = vld [vmem:[%s220 + $0x270] sm:$0xf]
      %v386 = vld [vmem:[%s220 + $0x274] sm:$0xf]
      %v387 = vld [vmem:[%s220 + $0x278] sm:$0xf]
      %v388 = vld [vmem:[%s220 + $0x27c] sm:$0xf]
      %v389 = vld [vmem:[%s220 + $0x280] sm:$0xf]
      %v390 = vld [vmem:[%s220 + $0x284] sm:$0xf]
      %v391 = vld [vmem:[%s220 + $0x288] sm:$0xf]
      %v392 = vld [vmem:[%s220 + $0x28c] sm:$0xf]
      %v393 = vld [vmem:[%s220 + $0x290] sm:$0xf]
      %v394 = vld [vmem:[%s220 + $0x294] sm:$0xf]
      %v395 = vld [vmem:[%s220 + $0x298] sm:$0xf]
      %v396 = vld [vmem:[%s220 + $0x29c] sm:$0xf]
      %v397 = vld [vmem:[%s220 + $0x2a0] sm:$0xf]
      %v398 = vld [vmem:[%s220 + $0x2a4] sm:$0xf]
      %v399 = vld [vmem:[%s220 + $0x2a8] sm:$0xf]
      %v400 = vld [vmem:[%s220 + $0x2ac] sm:$0xf]
      %v401 = vld [vmem:[%s220 + $0x2b0] sm:$0xf]
      %v402 = vld [vmem:[%s220 + $0x2b4] sm:$0xf]
      %v403 = vld [vmem:[%s220 + $0x2b8] sm:$0xf]
      %v404 = vld [vmem:[%s220 + $0x2bc] sm:$0xf]
      %v405 = vld [vmem:[%s220 + $0x2c0] sm:$0xf]
      %v406 = vld [vmem:[%s220 + $0x2c4] sm:$0xf]
      %v407 = vld [vmem:[%s220 + $0x2c8] sm:$0xf]
      %v408 = vld [vmem:[%s220 + $0x2cc] sm:$0xf]
      %v409 = vld [vmem:[%s220 + $0x2d0] sm:$0xf]
      %v410 = vld [vmem:[%s220 + $0x2d4] sm:$0xf]
      %v411 = vld [vmem:[%s220 + $0x2d8] sm:$0xf]
      %v412 = vld [vmem:[%s220 + $0x2dc] sm:$0xf]
      %v413 = vld [vmem:[%s220 + $0x2e0] sm:$0xf]
      %v414 = vld [vmem:[%s220 + $0x2e4] sm:$0xf]
      %v415 = vld [vmem:[%s220 + $0x2e8] sm:$0xf]
      %v416 = vld [vmem:[%s220 + $0x2ec] sm:$0xf]
      %v417 = vld [vmem:[%s220 + $0x2f0] sm:$0xf]
      %v418 = vld [vmem:[%s220 + $0x2f4] sm:$0xf]
      %v419 = vld [vmem:[%s220 + $0x2f8] sm:$0xf]
      %v420 = vld [vmem:[%s220 + $0x2fc] sm:$0xf]
      %v421 = vld [vmem:[%s220 + $0x300] sm:$0xf]
      %v422 = vld [vmem:[%s220 + $0x304] sm:$0xf]
      %v423 = vld [vmem:[%s220 + $0x308] sm:$0xf]
      %v424 = vld [vmem:[%s220 + $0x30c] sm:$0xf]
      %v425 = vld [vmem:[%s220 + $0x310] sm:$0xf]
      %v426 = vld [vmem:[%s220 + $0x314] sm:$0xf]
      %v427 = vld [vmem:[%s220 + $0x318] sm:$0xf]
      %v428 = vld [vmem:[%s220 + $0x31c] sm:$0xf]
      %v429 = vld [vmem:[%s220 + $0x320] sm:$0xf]
      %v430 = vld [vmem:[%s220 + $0x324] sm:$0xf]
      %v431 = vld [vmem:[%s220 + $0x328] sm:$0xf]
      %v432 = vld [vmem:[%s220 + $0x32c] sm:$0xf]
      %v433 = vld [vmem:[%s220 + $0x330] sm:$0xf]
      %v434 = vld [vmem:[%s220 + $0x334] sm:$0xf]
      %v435 = vld [vmem:[%s220 + $0x338] sm:$0xf]
      %v436 = vld [vmem:[%s220 + $0x33c] sm:$0xf]
      %v437 = vld [vmem:[%s220 + $0x340] sm:$0xf]
      %v438 = vld [vmem:[%s220 + $0x344] sm:$0xf]
      %v439 = vld [vmem:[%s220 + $0x348] sm:$0xf]
      %v440 = vld [vmem:[%s220 + $0x34c] sm:$0xf]
      %v441 = vld [vmem:[%s220 + $0x350] sm:$0xf]
      %v442 = vld [vmem:[%s220 + $0x354] sm:$0xf]
      %v443 = vld [vmem:[%s220 + $0x358] sm:$0xf]
      %v444 = vld [vmem:[%s220 + $0x35c] sm:$0xf]
      %v445 = vld [vmem:[%s220 + $0x360] sm:$0xf]
      %v446 = vld [vmem:[%s220 + $0x364] sm:$0xf]
      %v447 = vld [vmem:[%s220 + $0x368] sm:$0xf]
      %v448 = vld [vmem:[%s220 + $0x36c] sm:$0xf]
      %v449 = vld [vmem:[%s220 + $0x370] sm:$0xf]
      %v450 = vld [vmem:[%s220 + $0x374] sm:$0xf]
      %v451 = vld [vmem:[%s220 + $0x378] sm:$0xf]
      %v452 = vld [vmem:[%s220 + $0x37c] sm:$0xf]
      %v453 = vld [vmem:[%s220 + $0x380] sm:$0xf]
      %v454 = vld [vmem:[%s220 + $0x384] sm:$0xf]
      %v455 = vld [vmem:[%s220 + $0x388] sm:$0xf]
      %v456 = vld [vmem:[%s220 + $0x38c] sm:$0xf]
      %v457 = vld [vmem:[%s220 + $0x390] sm:$0xf]
      %v458 = vld [vmem:[%s220 + $0x394] sm:$0xf]
      %v459 = vld [vmem:[%s220 + $0x398] sm:$0xf]
      %v460 = vld [vmem:[%s220 + $0x39c] sm:$0xf]
      %v461 = vld [vmem:[%s220 + $0x3a0] sm:$0xf]
      %v462 = vld [vmem:[%s220 + $0x3a4] sm:$0xf]
      %v463 = vld [vmem:[%s220 + $0x3a8] sm:$0xf]
      %v464 = vld [vmem:[%s220 + $0x3ac] sm:$0xf]
      %v465 = vld [vmem:[%s220 + $0x3b0] sm:$0xf]
      %v466 = vld [vmem:[%s220 + $0x3b4] sm:$0xf]
      %v467 = vld [vmem:[%s220 + $0x3b8] sm:$0xf]
      %v468 = vld [vmem:[%s220 + $0x3bc] sm:$0xf]
      %v469 = vld [vmem:[%s220 + $0x3c0] sm:$0xf]
      %v470 = vld [vmem:[%s220 + $0x3c4] sm:$0xf]
      %v471 = vld [vmem:[%s220 + $0x3c8] sm:$0xf]
      %v472 = vld [vmem:[%s220 + $0x3cc] sm:$0xf]
      %v473 = vld [vmem:[%s220 + $0x3d0] sm:$0xf]
      %v474 = vld [vmem:[%s220 + $0x3d4] sm:$0xf]
      %v475 = vld [vmem:[%s220 + $0x3d8] sm:$0xf]
      %v476 = vld [vmem:[%s220 + $0x3dc] sm:$0xf]
      %v477 = vld [vmem:[%s220 + $0x3e0] sm:$0xf]
      %v478 = vld [vmem:[%s220 + $0x3e4] sm:$0xf]
      %v479 = vld [vmem:[%s220 + $0x3e8] sm:$0xf]
      %v480 = vld [vmem:[%s220 + $0x3ec] sm:$0xf]
      %v481 = vld [vmem:[%s220 + $0x3f0] sm:$0xf]
      %v482 = vld [vmem:[%s220 + $0x3f4] sm:$0xf]
      %v483 = vld [vmem:[%s220 + $0x3f8] sm:$0xf]
      %v484 = vld [vmem:[%s220 + $0x3fc] sm:$0xf]
      %v485 = vld [vmem:[%s1] sm:$0xf]
      %v486 = vld [vmem:[%s1 + $0x4] sm:$0xf]
      %v487 = vld [vmem:[%s1 + $0x8] sm:$0xf]
      %v488 = vld [vmem:[%s1 + $0xc] sm:$0xf]
      %v489 = vld [vmem:[%s2] sm:$0x1]
      %v491 = vlaneseq
      %v492 = vshrl.u32 %v491, 7
      %v493 = vsub.s32 0, %v492
      %v494 = vrot.slane %v489, %v493
      %v752 = vunpack.c.l.b16 %v229
      %v753 = vunpack.c.l.b16 %v230
      %v754 = vunpack.c.l.b16 %v231
      %v755 = vunpack.c.l.b16 %v232
      %v756 = vunpack.c.l.b16 %v233
      %v757 = vunpack.c.l.b16 %v234
      %v758 = vunpack.c.l.b16 %v235
      %v759 = vunpack.c.l.b16 %v236
      %v760 = vunpack.c.l.b16 %v237
      %v761 = vunpack.c.l.b16 %v238
      %v762 = vunpack.c.l.b16 %v239
      %v763 = vunpack.c.l.b16 %v240
      %v764 = vunpack.c.l.b16 %v241
      %v765 = vunpack.c.l.b16 %v242
      %v766 = vunpack.c.l.b16 %v243
      %v767 = vunpack.c.l.b16 %v244
      %v768 = vunpack.c.l.b16 %v245
      %v769 = vunpack.c.l.b16 %v246
      %v770 = vunpack.c.l.b16 %v247
      %v771 = vunpack.c.l.b16 %v248
      %v772 = vunpack.c.l.b16 %v249
      %v773 = vunpack.c.l.b16 %v250
      %v774 = vunpack.c.l.b16 %v251
      %v775 = vunpack.c.l.b16 %v252
      %v776 = vunpack.c.l.b16 %v253
      %v777 = vunpack.c.l.b16 %v254
      %v778 = vunpack.c.l.b16 %v255
      %v779 = vunpack.c.l.b16 %v256
      %v780 = vunpack.c.l.b16 %v257
      %v781 = vunpack.c.l.b16 %v258
      %v782 = vunpack.c.l.b16 %v259
      %v783 = vunpack.c.l.b16 %v260
      %v784 = vunpack.c.l.b16 %v261
      %v785 = vunpack.c.l.b16 %v262
      %v786 = vunpack.c.l.b16 %v263
      %v787 = vunpack.c.l.b16 %v264
      %v788 = vunpack.c.l.b16 %v265
      %v789 = vunpack.c.l.b16 %v266
      %v790 = vunpack.c.l.b16 %v267
      %v791 = vunpack.c.l.b16 %v268
      %v792 = vunpack.c.l.b16 %v269
      %v793 = vunpack.c.l.b16 %v270
      %v794 = vunpack.c.l.b16 %v271
      %v795 = vunpack.c.l.b16 %v272
      %v796 = vunpack.c.l.b16 %v273
      %v797 = vunpack.c.l.b16 %v274
      %v798 = vunpack.c.l.b16 %v275
      %v799 = vunpack.c.l.b16 %v276
      %v800 = vunpack.c.l.b16 %v277
      %v801 = vunpack.c.l.b16 %v278
      %v802 = vunpack.c.l.b16 %v279
      %v803 = vunpack.c.l.b16 %v280
      %v804 = vunpack.c.l.b16 %v281
      %v805 = vunpack.c.l.b16 %v282
      %v806 = vunpack.c.l.b16 %v283
      %v807 = vunpack.c.l.b16 %v284
      %v808 = vunpack.c.l.b16 %v285
      %v809 = vunpack.c.l.b16 %v286
      %v810 = vunpack.c.l.b16 %v287
      %v811 = vunpack.c.l.b16 %v288
      %v812 = vunpack.c.l.b16 %v289
      %v813 = vunpack.c.l.b16 %v290
      %v814 = vunpack.c.l.b16 %v291
      %v815 = vunpack.c.l.b16 %v292
      %v816 = vunpack.c.l.b16 %v293
      %v817 = vunpack.c.l.b16 %v294
      %v818 = vunpack.c.l.b16 %v295
      %v819 = vunpack.c.l.b16 %v296
      %v820 = vunpack.c.l.b16 %v297
      %v821 = vunpack.c.l.b16 %v298
      %v822 = vunpack.c.l.b16 %v299
      %v823 = vunpack.c.l.b16 %v300
      %v824 = vunpack.c.l.b16 %v301
      %v825 = vunpack.c.l.b16 %v302
      %v826 = vunpack.c.l.b16 %v303
      %v827 = vunpack.c.l.b16 %v304
      %v828 = vunpack.c.l.b16 %v305
      %v829 = vunpack.c.l.b16 %v306
      %v830 = vunpack.c.l.b16 %v307
      %v831 = vunpack.c.l.b16 %v308
      %v832 = vunpack.c.l.b16 %v309
      %v833 = vunpack.c.l.b16 %v310
      %v834 = vunpack.c.l.b16 %v311
      %v835 = vunpack.c.l.b16 %v312
      %v836 = vunpack.c.l.b16 %v313
      %v837 = vunpack.c.l.b16 %v314
      %v838 = vunpack.c.l.b16 %v315
      %v839 = vunpack.c.l.b16 %v316
      %v840 = vunpack.c.l.b16 %v317
      %v841 = vunpack.c.l.b16 %v318
      %v842 = vunpack.c.l.b16 %v319
      %v843 = vunpack.c.l.b16 %v320
      %v844 = vunpack.c.l.b16 %v321
      %v845 = vunpack.c.l.b16 %v322
      %v846 = vunpack.c.l.b16 %v323
      %v847 = vunpack.c.l.b16 %v324
      %v848 = vunpack.c.l.b16 %v325
      %v849 = vunpack.c.l.b16 %v326
      %v850 = vunpack.c.l.b16 %v327
      %v851 = vunpack.c.l.b16 %v328
      %v852 = vunpack.c.l.b16 %v329
      %v853 = vunpack.c.l.b16 %v330
      %v854 = vunpack.c.l.b16 %v331
      %v855 = vunpack.c.l.b16 %v332
      %v856 = vunpack.c.l.b16 %v333
      %v857 = vunpack.c.l.b16 %v334
      %v858 = vunpack.c.l.b16 %v335
      %v859 = vunpack.c.l.b16 %v336
      %v860 = vunpack.c.l.b16 %v337
      %v861 = vunpack.c.l.b16 %v338
      %v862 = vunpack.c.l.b16 %v339
      %v863 = vunpack.c.l.b16 %v340
      %v864 = vunpack.c.l.b16 %v341
      %v865 = vunpack.c.l.b16 %v342
      %v866 = vunpack.c.l.b16 %v343
      %v867 = vunpack.c.l.b16 %v344
      %v868 = vunpack.c.l.b16 %v345
      %v869 = vunpack.c.l.b16 %v346
      %v870 = vunpack.c.l.b16 %v347
      %v871 = vunpack.c.l.b16 %v348
      %v872 = vunpack.c.l.b16 %v349
      %v873 = vunpack.c.l.b16 %v350
      %v874 = vunpack.c.l.b16 %v351
      %v875 = vunpack.c.l.b16 %v352
      %v876 = vunpack.c.l.b16 %v353
      %v877 = vunpack.c.l.b16 %v354
      %v878 = vunpack.c.l.b16 %v355
      %v879 = vunpack.c.l.b16 %v356
      %v880 = vunpack.c.l.b16 %v357
      %v881 = vunpack.c.l.b16 %v358
      %v882 = vunpack.c.l.b16 %v359
      %v883 = vunpack.c.l.b16 %v360
      %v884 = vunpack.c.l.b16 %v361
      %v885 = vunpack.c.l.b16 %v362
      %v886 = vunpack.c.l.b16 %v363
      %v887 = vunpack.c.l.b16 %v364
      %v888 = vunpack.c.l.b16 %v365
      %v889 = vunpack.c.l.b16 %v366
      %v890 = vunpack.c.l.b16 %v367
      %v891 = vunpack.c.l.b16 %v368
      %v892 = vunpack.c.l.b16 %v369
      %v893 = vunpack.c.l.b16 %v370
      %v894 = vunpack.c.l.b16 %v371
      %v895 = vunpack.c.l.b16 %v372
      %v896 = vunpack.c.l.b16 %v373
      %v897 = vunpack.c.l.b16 %v374
      %v898 = vunpack.c.l.b16 %v375
      %v899 = vunpack.c.l.b16 %v376
      %v900 = vunpack.c.l.b16 %v377
      %v901 = vunpack.c.l.b16 %v378
      %v902 = vunpack.c.l.b16 %v379
      %v903 = vunpack.c.l.b16 %v380
      %v904 = vunpack.c.l.b16 %v381
      %v905 = vunpack.c.l.b16 %v382
      %v906 = vunpack.c.l.b16 %v383
      %v907 = vunpack.c.l.b16 %v384
      %v908 = vunpack.c.l.b16 %v385
      %v909 = vunpack.c.l.b16 %v386
      %v910 = vunpack.c.l.b16 %v387
      %v911 = vunpack.c.l.b16 %v388
      %v912 = vunpack.c.l.b16 %v389
      %v913 = vunpack.c.l.b16 %v390
      %v914 = vunpack.c.l.b16 %v391
      %v915 = vunpack.c.l.b16 %v392
      %v916 = vunpack.c.l.b16 %v393
      %v917 = vunpack.c.l.b16 %v394
      %v918 = vunpack.c.l.b16 %v395
      %v919 = vunpack.c.l.b16 %v396
      %v920 = vunpack.c.l.b16 %v397
      %v921 = vunpack.c.l.b16 %v398
      %v922 = vunpack.c.l.b16 %v399
      %v923 = vunpack.c.l.b16 %v400
      %v924 = vunpack.c.l.b16 %v401
      %v925 = vunpack.c.l.b16 %v402
      %v926 = vunpack.c.l.b16 %v403
      %v927 = vunpack.c.l.b16 %v404
      %v928 = vunpack.c.l.b16 %v405
      %v929 = vunpack.c.l.b16 %v406
      %v930 = vunpack.c.l.b16 %v407
      %v931 = vunpack.c.l.b16 %v408
      %v932 = vunpack.c.l.b16 %v409
      %v933 = vunpack.c.l.b16 %v410
      %v934 = vunpack.c.l.b16 %v411
      %v935 = vunpack.c.l.b16 %v412
      %v936 = vunpack.c.l.b16 %v413
      %v937 = vunpack.c.l.b16 %v414
      %v938 = vunpack.c.l.b16 %v415
      %v939 = vunpack.c.l.b16 %v416
      %v940 = vunpack.c.l.b16 %v417
      %v941 = vunpack.c.l.b16 %v418
      %v942 = vunpack.c.l.b16 %v419
      %v943 = vunpack.c.l.b16 %v420
      %v944 = vunpack.c.l.b16 %v421
      %v945 = vunpack.c.l.b16 %v422
      %v946 = vunpack.c.l.b16 %v423
      %v947 = vunpack.c.l.b16 %v424
      %v948 = vunpack.c.l.b16 %v425
      %v949 = vunpack.c.l.b16 %v426
      %v950 = vunpack.c.l.b16 %v427
      %v951 = vunpack.c.l.b16 %v428
      %v952 = vunpack.c.l.b16 %v429
      %v953 = vunpack.c.l.b16 %v430
      %v954 = vunpack.c.l.b16 %v431
      %v955 = vunpack.c.l.b16 %v432
      %v956 = vunpack.c.l.b16 %v433
      %v957 = vunpack.c.l.b16 %v434
      %v958 = vunpack.c.l.b16 %v435
      %v959 = vunpack.c.l.b16 %v436
      %v960 = vunpack.c.l.b16 %v437
      %v961 = vunpack.c.l.b16 %v438
      %v962 = vunpack.c.l.b16 %v439
      %v963 = vunpack.c.l.b16 %v440
      %v964 = vunpack.c.l.b16 %v441
      %v965 = vunpack.c.l.b16 %v442
      %v966 = vunpack.c.l.b16 %v443
      %v967 = vunpack.c.l.b16 %v444
      %v968 = vunpack.c.l.b16 %v445
      %v969 = vunpack.c.l.b16 %v446
      %v970 = vunpack.c.l.b16 %v447
      %v971 = vunpack.c.l.b16 %v448
      %v972 = vunpack.c.l.b16 %v449
      %v973 = vunpack.c.l.b16 %v450
      %v974 = vunpack.c.l.b16 %v451
      %v975 = vunpack.c.l.b16 %v452
      %v976 = vunpack.c.l.b16 %v453
      %v977 = vunpack.c.l.b16 %v454
      %v978 = vunpack.c.l.b16 %v455
      %v979 = vunpack.c.l.b16 %v456
      %v980 = vunpack.c.l.b16 %v457
      %v981 = vunpack.c.l.b16 %v458
      %v982 = vunpack.c.l.b16 %v459
      %v983 = vunpack.c.l.b16 %v460
      %v984 = vunpack.c.l.b16 %v461
      %v985 = vunpack.c.l.b16 %v462
      %v986 = vunpack.c.l.b16 %v463
      %v987 = vunpack.c.l.b16 %v464
      %v988 = vunpack.c.l.b16 %v465
      %v989 = vunpack.c.l.b16 %v466
      %v990 = vunpack.c.l.b16 %v467
      %v991 = vunpack.c.l.b16 %v468
      %v992 = vunpack.c.l.b16 %v469
      %v993 = vunpack.c.l.b16 %v470
      %v994 = vunpack.c.l.b16 %v471
      %v995 = vunpack.c.l.b16 %v472
      %v996 = vunpack.c.l.b16 %v473
      %v997 = vunpack.c.l.b16 %v474
      %v998 = vunpack.c.l.b16 %v475
      %v999 = vunpack.c.l.b16 %v476
      %v1000 = vunpack.c.l.b16 %v477
      %v1001 = vunpack.c.l.b16 %v478
      %v1002 = vunpack.c.l.b16 %v479
      %v1003 = vunpack.c.l.b16 %v480
      %v1004 = vunpack.c.l.b16 %v481
      %v1005 = vunpack.c.l.b16 %v482
      %v1006 = vunpack.c.l.b16 %v483
      %v1007 = vunpack.c.l.b16 %v484
      %v1008 = vpack.c.b16 %v753, %v752
      %v1009 = vpack.c.b16 %v755, %v754
      %v1010 = vpack.c.b16 %v757, %v756
      %v1011 = vpack.c.b16 %v759, %v758
      %v1012 = vpack.c.b16 %v761, %v760
      %v1013 = vpack.c.b16 %v763, %v762
      %v1014 = vpack.c.b16 %v765, %v764
      %v1015 = vpack.c.b16 %v767, %v766
      %v1016 = vpack.c.b16 %v769, %v768
      %v1017 = vpack.c.b16 %v771, %v770
      %v1018 = vpack.c.b16 %v773, %v772
      %v1019 = vpack.c.b16 %v775, %v774
      %v1020 = vpack.c.b16 %v777, %v776
      %v1021 = vpack.c.b16 %v779, %v778
      %v1022 = vpack.c.b16 %v781, %v780
      %v1023 = vpack.c.b16 %v783, %v782
      %v1024 = vpack.c.b16 %v785, %v784
      %v1025 = vpack.c.b16 %v787, %v786
      %v1026 = vpack.c.b16 %v789, %v788
      %v1027 = vpack.c.b16 %v791, %v790
      %v1028 = vpack.c.b16 %v793, %v792
      %v1029 = vpack.c.b16 %v795, %v794
      %v1030 = vpack.c.b16 %v797, %v796
      %v1031 = vpack.c.b16 %v799, %v798
      %v1032 = vpack.c.b16 %v801, %v800
      %v1033 = vpack.c.b16 %v803, %v802
      %v1034 = vpack.c.b16 %v805, %v804
      %v1035 = vpack.c.b16 %v807, %v806
      %v1036 = vpack.c.b16 %v809, %v808
      %v1037 = vpack.c.b16 %v811, %v810
      %v1038 = vpack.c.b16 %v813, %v812
      %v1039 = vpack.c.b16 %v815, %v814
      %v1040 = vpack.c.b16 %v817, %v816
      %v1041 = vpack.c.b16 %v819, %v818
      %v1042 = vpack.c.b16 %v821, %v820
      %v1043 = vpack.c.b16 %v823, %v822
      %v1044 = vpack.c.b16 %v825, %v824
      %v1045 = vpack.c.b16 %v827, %v826
      %v1046 = vpack.c.b16 %v829, %v828
      %v1047 = vpack.c.b16 %v831, %v830
      %v1048 = vpack.c.b16 %v833, %v832
      %v1049 = vpack.c.b16 %v835, %v834
      %v1050 = vpack.c.b16 %v837, %v836
      %v1051 = vpack.c.b16 %v839, %v838
      %v1052 = vpack.c.b16 %v841, %v840
      %v1053 = vpack.c.b16 %v843, %v842
      %v1054 = vpack.c.b16 %v845, %v844
      %v1055 = vpack.c.b16 %v847, %v846
      %v1056 = vpack.c.b16 %v849, %v848
      %v1057 = vpack.c.b16 %v851, %v850
      %v1058 = vpack.c.b16 %v853, %v852
      %v1059 = vpack.c.b16 %v855, %v854
      %v1060 = vpack.c.b16 %v857, %v856
      %v1061 = vpack.c.b16 %v859, %v858
      %v1062 = vpack.c.b16 %v861, %v860
      %v1063 = vpack.c.b16 %v863, %v862
      %v1064 = vpack.c.b16 %v865, %v864
      %v1065 = vpack.c.b16 %v867, %v866
      %v1066 = vpack.c.b16 %v869, %v868
      %v1067 = vpack.c.b16 %v871, %v870
      %v1068 = vpack.c.b16 %v873, %v872
      %v1069 = vpack.c.b16 %v875, %v874
      %v1070 = vpack.c.b16 %v877, %v876
      %v1071 = vpack.c.b16 %v879, %v878
      %v1072 = vpack.c.b16 %v881, %v880
      %v1073 = vpack.c.b16 %v883, %v882
      %v1074 = vpack.c.b16 %v885, %v884
      %v1075 = vpack.c.b16 %v887, %v886
      %v1076 = vpack.c.b16 %v889, %v888
      %v1077 = vpack.c.b16 %v891, %v890
      %v1078 = vpack.c.b16 %v893, %v892
      %v1079 = vpack.c.b16 %v895, %v894
      %v1080 = vpack.c.b16 %v897, %v896
      %v1081 = vpack.c.b16 %v899, %v898
      %v1082 = vpack.c.b16 %v901, %v900
      %v1083 = vpack.c.b16 %v903, %v902
      %v1084 = vpack.c.b16 %v905, %v904
      %v1085 = vpack.c.b16 %v907, %v906
      %v1086 = vpack.c.b16 %v909, %v908
      %v1087 = vpack.c.b16 %v911, %v910
      %v1088 = vpack.c.b16 %v913, %v912
      %v1089 = vpack.c.b16 %v915, %v914
      %v1090 = vpack.c.b16 %v917, %v916
      %v1091 = vpack.c.b16 %v919, %v918
      %v1092 = vpack.c.b16 %v921, %v920
      %v1093 = vpack.c.b16 %v923, %v922
      %v1094 = vpack.c.b16 %v925, %v924
      %v1095 = vpack.c.b16 %v927, %v926
      %v1096 = vpack.c.b16 %v929, %v928
      %v1097 = vpack.c.b16 %v931, %v930
      %v1098 = vpack.c.b16 %v933, %v932
      %v1099 = vpack.c.b16 %v935, %v934
      %v1100 = vpack.c.b16 %v937, %v936
      %v1101 = vpack.c.b16 %v939, %v938
      %v1102 = vpack.c.b16 %v941, %v940
      %v1103 = vpack.c.b16 %v943, %v942
      %v1104 = vpack.c.b16 %v945, %v944
      %v1105 = vpack.c.b16 %v947, %v946
      %v1106 = vpack.c.b16 %v949, %v948
      %v1107 = vpack.c.b16 %v951, %v950
      %v1108 = vpack.c.b16 %v953, %v952
      %v1109 = vpack.c.b16 %v955, %v954
      %v1110 = vpack.c.b16 %v957, %v956
      %v1111 = vpack.c.b16 %v959, %v958
      %v1112 = vpack.c.b16 %v961, %v960
      %v1113 = vpack.c.b16 %v963, %v962
      %v1114 = vpack.c.b16 %v965, %v964
      %v1115 = vpack.c.b16 %v967, %v966
      %v1116 = vpack.c.b16 %v969, %v968
      %v1117 = vpack.c.b16 %v971, %v970
      %v1118 = vpack.c.b16 %v973, %v972
      %v1119 = vpack.c.b16 %v975, %v974
      %v1120 = vpack.c.b16 %v977, %v976
      %v1121 = vpack.c.b16 %v979, %v978
      %v1122 = vpack.c.b16 %v981, %v980
      %v1123 = vpack.c.b16 %v983, %v982
      %v1124 = vpack.c.b16 %v985, %v984
      %v1125 = vpack.c.b16 %v987, %v986
      %v1126 = vpack.c.b16 %v989, %v988
      %v1127 = vpack.c.b16 %v991, %v990
      %v1128 = vpack.c.b16 %v993, %v992
      %v1129 = vpack.c.b16 %v995, %v994
      %v1130 = vpack.c.b16 %v997, %v996
      %v1131 = vpack.c.b16 %v999, %v998
      %v1132 = vpack.c.b16 %v1001, %v1000
      %v1133 = vpack.c.b16 %v1003, %v1002
      %v1134 = vpack.c.b16 %v1005, %v1004
      %v1135 = vpack.c.b16 %v1007, %v1006
      %v1140 = vunpack.c.l.b16 %v485
      %v1141 = vunpack.c.l.b16 %v486
      %v1142 = vunpack.c.l.b16 %v487
      %v1143 = vunpack.c.l.b16 %v488
      %v1144 = vpack.c.b16 %v1141, %v1140
      %v1145 = vpack.c.b16 %v1143, %v1142
      %vm1148 = vcmask 261120
      %v1150 = vsel %vm1148, %v1008, 0
      %v1153 = vsel %vm1148, %v1009, 0
      %v1156 = vsel %vm1148, %v1010, 0
      %v1159 = vsel %vm1148, %v1011, 0
      %v1162 = vsel %vm1148, %v1012, 0
      %v1165 = vsel %vm1148, %v1013, 0
      %v1168 = vsel %vm1148, %v1014, 0
      %v1171 = vsel %vm1148, %v1015, 0
      %v1174 = vsel %vm1148, %v1016, 0
      %v1177 = vsel %vm1148, %v1017, 0
      %v1180 = vsel %vm1148, %v1018, 0
      %v1183 = vsel %vm1148, %v1019, 0
      %v1186 = vsel %vm1148, %v1020, 0
      %v1189 = vsel %vm1148, %v1021, 0
      %v1192 = vsel %vm1148, %v1022, 0
      %v1195 = vsel %vm1148, %v1023, 0
      %v1198 = vsel %vm1148, %v1024, 0
      %v1201 = vsel %vm1148, %v1025, 0
      %v1204 = vsel %vm1148, %v1026, 0
      %v1207 = vsel %vm1148, %v1027, 0
      %v1210 = vsel %vm1148, %v1028, 0
      %v1213 = vsel %vm1148, %v1029, 0
      %v1216 = vsel %vm1148, %v1030, 0
      %v1219 = vsel %vm1148, %v1031, 0
      %v1222 = vsel %vm1148, %v1032, 0
      %v1225 = vsel %vm1148, %v1033, 0
      %v1228 = vsel %vm1148, %v1034, 0
      %v1231 = vsel %vm1148, %v1035, 0
      %v1234 = vsel %vm1148, %v1036, 0
      %v1237 = vsel %vm1148, %v1037, 0
      %v1240 = vsel %vm1148, %v1038, 0
      %v1243 = vsel %vm1148, %v1039, 0
      %v1246 = vsel %vm1148, %v1040, 0
      %v1249 = vsel %vm1148, %v1041, 0
      %v1252 = vsel %vm1148, %v1042, 0
      %v1255 = vsel %vm1148, %v1043, 0
      %v1258 = vsel %vm1148, %v1044, 0
      %v1261 = vsel %vm1148, %v1045, 0
      %v1264 = vsel %vm1148, %v1046, 0
      %v1267 = vsel %vm1148, %v1047, 0
      %v1270 = vsel %vm1148, %v1048, 0
      %v1273 = vsel %vm1148, %v1049, 0
      %v1276 = vsel %vm1148, %v1050, 0
      %v1279 = vsel %vm1148, %v1051, 0
      %v1282 = vsel %vm1148, %v1052, 0
      %v1285 = vsel %vm1148, %v1053, 0
      %v1288 = vsel %vm1148, %v1054, 0
      %v1291 = vsel %vm1148, %v1055, 0
      %v1294 = vsel %vm1148, %v1056, 0
      %v1297 = vsel %vm1148, %v1057, 0
      %v1300 = vsel %vm1148, %v1058, 0
      %v1303 = vsel %vm1148, %v1059, 0
      %v1306 = vsel %vm1148, %v1060, 0
      %v1309 = vsel %vm1148, %v1061, 0
      %v1312 = vsel %vm1148, %v1062, 0
      %v1315 = vsel %vm1148, %v1063, 0
      %v1318 = vsel %vm1148, %v1064, 0
      %v1321 = vsel %vm1148, %v1065, 0
      %v1324 = vsel %vm1148, %v1066, 0
      %v1327 = vsel %vm1148, %v1067, 0
      %v1330 = vsel %vm1148, %v1068, 0
      %v1333 = vsel %vm1148, %v1069, 0
      %v1336 = vsel %vm1148, %v1070, 0
      %v1339 = vsel %vm1148, %v1071, 0
      %v1342 = vsel %vm1148, %v1072, 0
      %v1345 = vsel %vm1148, %v1073, 0
      %v1348 = vsel %vm1148, %v1074, 0
      %v1351 = vsel %vm1148, %v1075, 0
      %v1354 = vsel %vm1148, %v1076, 0
      %v1357 = vsel %vm1148, %v1077, 0
      %v1360 = vsel %vm1148, %v1078, 0
      %v1363 = vsel %vm1148, %v1079, 0
      %v1366 = vsel %vm1148, %v1080, 0
      %v1369 = vsel %vm1148, %v1081, 0
      %v1372 = vsel %vm1148, %v1082, 0
      %v1375 = vsel %vm1148, %v1083, 0
      %v1378 = vsel %vm1148, %v1084, 0
      %v1381 = vsel %vm1148, %v1085, 0
      %v1384 = vsel %vm1148, %v1086, 0
      %v1387 = vsel %vm1148, %v1087, 0
      %v1390 = vsel %vm1148, %v1088, 0
      %v1393 = vsel %vm1148, %v1089, 0
      %v1396 = vsel %vm1148, %v1090, 0
      %v1399 = vsel %vm1148, %v1091, 0
      %v1402 = vsel %vm1148, %v1092, 0
      %v1405 = vsel %vm1148, %v1093, 0
      %v1408 = vsel %vm1148, %v1094, 0
      %v1411 = vsel %vm1148, %v1095, 0
      %v1414 = vsel %vm1148, %v1096, 0
      %v1417 = vsel %vm1148, %v1097, 0
      %v1420 = vsel %vm1148, %v1098, 0
      %v1423 = vsel %vm1148, %v1099, 0
      %v1426 = vsel %vm1148, %v1100, 0
      %v1429 = vsel %vm1148, %v1101, 0
      %v1432 = vsel %vm1148, %v1102, 0
      %v1435 = vsel %vm1148, %v1103, 0
      %v1438 = vsel %vm1148, %v1104, 0
      %v1441 = vsel %vm1148, %v1105, 0
      %v1444 = vsel %vm1148, %v1106, 0
      %v1447 = vsel %vm1148, %v1107, 0
      %v1450 = vsel %vm1148, %v1108, 0
      %v1453 = vsel %vm1148, %v1109, 0
      %v1456 = vsel %vm1148, %v1110, 0
      %v1459 = vsel %vm1148, %v1111, 0
      %v1462 = vsel %vm1148, %v1112, 0
      %v1465 = vsel %vm1148, %v1113, 0
      %v1468 = vsel %vm1148, %v1114, 0
      %v1471 = vsel %vm1148, %v1115, 0
      %v1474 = vsel %vm1148, %v1116, 0
      %v1477 = vsel %vm1148, %v1117, 0
      %v1480 = vsel %vm1148, %v1118, 0
      %v1483 = vsel %vm1148, %v1119, 0
      %v1486 = vsel %vm1148, %v1120, 0
      %v1489 = vsel %vm1148, %v1121, 0
      %v1492 = vsel %vm1148, %v1122, 0
      %v1495 = vsel %vm1148, %v1123, 0
      %v1498 = vsel %vm1148, %v1124, 0
      %v1501 = vsel %vm1148, %v1125, 0
      %v1504 = vsel %vm1148, %v1126, 0
      %v1507 = vsel %vm1148, %v1127, 0
      %v1510 = vsel %vm1148, %v1128, 0
      %v1513 = vsel %vm1148, %v1129, 0
      %v1516 = vsel %vm1148, %v1130, 0
      %v1519 = vsel %vm1148, %v1131, 0
      %v1522 = vsel %vm1148, %v1132, 0
      %v1525 = vsel %vm1148, %v1133, 0
      %v1528 = vsel %vm1148, %v1134, 0
      %v1531 = vsel %vm1148, %v1135, 0
      %1533 = vmatprep.subr.bf16.mxu0 0
      %1534 = vmatpush1.bf16.msra.mxu0 0
      %1535 = vmatprep.subr.bf16.mxu0 0
      %1536 = vmatpush1.bf16.msra.mxu0 0
      %1537 = vmatprep.subr.bf16.mxu0 0
      %1538 = vmatpush1.bf16.msra.mxu0 0
      %1539 = vmatprep.subr.bf16.mxu0 0
      %1540 = vmatpush1.bf16.msra.mxu0 0
      %1541 = vmatprep.subr.bf16.mxu0 0
      %1542 = vmatpush1.bf16.msra.mxu0 0
      %1543 = vmatprep.subr.bf16.mxu0 0
      %1544 = vmatpush1.bf16.msra.mxu0 0
      %1545 = vmatprep.subr.bf16.mxu0 0
      %1546 = vmatpush1.bf16.msra.mxu0 %v1145
      %1547 = vmatprep.subr.bf16.mxu0 0
      %1548 = vmatpush1.bf16.msra.mxu0 %v1144
      %1549 = vmatprep.subr.bf16.mxu0 0
      %1550 = vmatpush2.bf16.msra.mxu0 0
      %1551 = vmatprep.subr.bf16.mxu0 0
      %1552 = vmatpush2.bf16.msra.mxu0 0
      %1553 = vmatprep.subr.bf16.mxu0 0
      %1554 = vmatpush2.bf16.msra.mxu0 0
      %1555 = vmatprep.subr.bf16.mxu0 0
      %1556 = vmatpush2.bf16.msra.mxu0 0
      %1557 = vmatprep.subr.bf16.mxu0 0
      %1558 = vmatpush2.bf16.msra.mxu0 0
      %1559 = vmatprep.subr.bf16.mxu0 0
      %1560 = vmatpush2.bf16.msra.mxu0 0
      %1561 = vmatprep.subr.bf16.mxu0 0
      %1562 = vmatpush2.bf16.msra.mxu0 0
      %1563 = vmatprep.subr.bf16.mxu0 0
      %1564 = vmatpush2.bf16.msra.mxu0 0
      %1565 = vmatprep.mubr.bf16.mxu0 0
      %1566 = vmatmul.mubr.bf16.gmra.mxu0 %v1150
      %v1567 = vpop.f32.mrf.mxu0
      %v1568 = vadd.f32 %v494, %v1567
      %v1569 = vpop.f32.mrf.mxu0
      %v1570 = vpop.f32.mrf.mxu0
      %v1571 = vadd.f32 %v494, %v1570
      %v1572 = vpop.f32.mrf.mxu0
      %1573 = vmatprep.mubr.bf16.mxu0 0
      %1574 = vmatmul.mubr.bf16.gmra.mxu0 %v1153
      %v1575 = vpop.f32.mrf.mxu0
      %v1576 = vadd.f32 %v494, %v1575
      %v1577 = vpop.f32.mrf.mxu0
      %v1578 = vpop.f32.mrf.mxu0
      %v1579 = vadd.f32 %v494, %v1578
      %v1580 = vpop.f32.mrf.mxu0
      %1581 = vmatprep.mubr.bf16.mxu0 0
      %1582 = vmatmul.mubr.bf16.gmra.mxu0 %v1156
      %v1583 = vpop.f32.mrf.mxu0
      %v1584 = vadd.f32 %v494, %v1583
      %v1585 = vpop.f32.mrf.mxu0
      %v1586 = vpop.f32.mrf.mxu0
      %v1587 = vadd.f32 %v494, %v1586
      %v1588 = vpop.f32.mrf.mxu0
      %1589 = vmatprep.mubr.bf16.mxu0 0
      %1590 = vmatmul.mubr.bf16.gmra.mxu0 %v1159
      %v1591 = vpop.f32.mrf.mxu0
      %v1592 = vadd.f32 %v494, %v1591
      %v1593 = vpop.f32.mrf.mxu0
      %v1594 = vpop.f32.mrf.mxu0
      %v1595 = vadd.f32 %v494, %v1594
      %v1596 = vpop.f32.mrf.mxu0
      %1597 = vmatprep.mubr.bf16.mxu0 0
      %1598 = vmatmul.mubr.bf16.gmra.mxu0 %v1162
      %v1599 = vpop.f32.mrf.mxu0
      %v1600 = vadd.f32 %v494, %v1599
      %v1601 = vpop.f32.mrf.mxu0
      %v1602 = vpop.f32.mrf.mxu0
      %v1603 = vadd.f32 %v494, %v1602
      %v1604 = vpop.f32.mrf.mxu0
      %1605 = vmatprep.mubr.bf16.mxu0 0
      %1606 = vmatmul.mubr.bf16.gmra.mxu0 %v1165
      %v1607 = vpop.f32.mrf.mxu0
      %v1608 = vadd.f32 %v494, %v1607
      %v1609 = vpop.f32.mrf.mxu0
      %v1610 = vpop.f32.mrf.mxu0
      %v1611 = vadd.f32 %v494, %v1610
      %v1612 = vpop.f32.mrf.mxu0
      %1613 = vmatprep.mubr.bf16.mxu0 0
      %1614 = vmatmul.mubr.bf16.gmra.mxu0 %v1168
      %v1615 = vpop.f32.mrf.mxu0
      %v1616 = vadd.f32 %v494, %v1615
      %v1617 = vpop.f32.mrf.mxu0
      %v1618 = vpop.f32.mrf.mxu0
      %v1619 = vadd.f32 %v494, %v1618
      %v1620 = vpop.f32.mrf.mxu0
      %1621 = vmatprep.mubr.bf16.mxu0 0
      %1622 = vmatmul.mubr.bf16.gmra.mxu0 %v1171
      %v1623 = vpop.f32.mrf.mxu0
      %v1624 = vadd.f32 %v494, %v1623
      %v1625 = vpop.f32.mrf.mxu0
      %v1626 = vpop.f32.mrf.mxu0
      %v1627 = vadd.f32 %v494, %v1626
      %v1628 = vpop.f32.mrf.mxu0
      %1629 = vmatprep.mubr.bf16.mxu0 0
      %1630 = vmatmul.mubr.bf16.gmra.mxu0 %v1174
      %v1631 = vpop.f32.mrf.mxu0
      %v1632 = vadd.f32 %v494, %v1631
      %v1633 = vpop.f32.mrf.mxu0
      %v1634 = vpop.f32.mrf.mxu0
      %v1635 = vadd.f32 %v494, %v1634
      %v1636 = vpop.f32.mrf.mxu0
      %1637 = vmatprep.mubr.bf16.mxu0 0
      %1638 = vmatmul.mubr.bf16.gmra.mxu0 %v1177
      %v1639 = vpop.f32.mrf.mxu0
      %v1640 = vadd.f32 %v494, %v1639
      %v1641 = vpop.f32.mrf.mxu0
      %v1642 = vpop.f32.mrf.mxu0
      %v1643 = vadd.f32 %v494, %v1642
      %v1644 = vpop.f32.mrf.mxu0
      %1645 = vmatprep.mubr.bf16.mxu0 0
      %1646 = vmatmul.mubr.bf16.gmra.mxu0 %v1180
      %v1647 = vpop.f32.mrf.mxu0
      %v1648 = vadd.f32 %v494, %v1647
      %v1649 = vpop.f32.mrf.mxu0
      %v1650 = vpop.f32.mrf.mxu0
      %v1651 = vadd.f32 %v494, %v1650
      %v1652 = vpop.f32.mrf.mxu0
      %1653 = vmatprep.mubr.bf16.mxu0 0
      %1654 = vmatmul.mubr.bf16.gmra.mxu0 %v1183
      %v1655 = vpop.f32.mrf.mxu0
      %v1656 = vadd.f32 %v494, %v1655
      %v1657 = vpop.f32.mrf.mxu0
      %v1658 = vpop.f32.mrf.mxu0
      %v1659 = vadd.f32 %v494, %v1658
      %v1660 = vpop.f32.mrf.mxu0
      %1661 = vmatprep.mubr.bf16.mxu0 0
      %1662 = vmatmul.mubr.bf16.gmra.mxu0 %v1186
      %v1663 = vpop.f32.mrf.mxu0
      %v1664 = vadd.f32 %v494, %v1663
      %v1665 = vpop.f32.mrf.mxu0
      %v1666 = vpop.f32.mrf.mxu0
      %v1667 = vadd.f32 %v494, %v1666
      %v1668 = vpop.f32.mrf.mxu0
      %1669 = vmatprep.mubr.bf16.mxu0 0
      %1670 = vmatmul.mubr.bf16.gmra.mxu0 %v1189
      %v1671 = vpop.f32.mrf.mxu0
      %v1672 = vadd.f32 %v494, %v1671
      %v1673 = vpop.f32.mrf.mxu0
      %v1674 = vpop.f32.mrf.mxu0
      %v1675 = vadd.f32 %v494, %v1674
      %v1676 = vpop.f32.mrf.mxu0
      %1677 = vmatprep.mubr.bf16.mxu0 0
      %1678 = vmatmul.mubr.bf16.gmra.mxu0 %v1192
      %v1679 = vpop.f32.mrf.mxu0
      %v1680 = vadd.f32 %v494, %v1679
      %v1681 = vpop.f32.mrf.mxu0
      %v1682 = vpop.f32.mrf.mxu0
      %v1683 = vadd.f32 %v494, %v1682
      %v1684 = vpop.f32.mrf.mxu0
      %1685 = vmatprep.mubr.bf16.mxu0 0
      %1686 = vmatmul.mubr.bf16.gmra.mxu0 %v1195
      %v1687 = vpop.f32.mrf.mxu0
      %v1688 = vadd.f32 %v494, %v1687
      %v1689 = vpop.f32.mrf.mxu0
      %v1690 = vpop.f32.mrf.mxu0
      %v1691 = vadd.f32 %v494, %v1690
      %v1692 = vpop.f32.mrf.mxu0
      %1693 = vmatprep.mubr.bf16.mxu0 0
      %1694 = vmatmul.mubr.bf16.gmra.mxu0 %v1198
      %v1695 = vpop.f32.mrf.mxu0
      %v1696 = vadd.f32 %v494, %v1695
      %v1697 = vpop.f32.mrf.mxu0
      %v1698 = vpop.f32.mrf.mxu0
      %v1699 = vadd.f32 %v494, %v1698
      %v1700 = vpop.f32.mrf.mxu0
      %1701 = vmatprep.mubr.bf16.mxu0 0
      %1702 = vmatmul.mubr.bf16.gmra.mxu0 %v1201
      %v1703 = vpop.f32.mrf.mxu0
      %v1704 = vadd.f32 %v494, %v1703
      %v1705 = vpop.f32.mrf.mxu0
      %v1706 = vpop.f32.mrf.mxu0
      %v1707 = vadd.f32 %v494, %v1706
      %v1708 = vpop.f32.mrf.mxu0
      %1709 = vmatprep.mubr.bf16.mxu0 0
      %1710 = vmatmul.mubr.bf16.gmra.mxu0 %v1204
      %v1711 = vpop.f32.mrf.mxu0
      %v1712 = vadd.f32 %v494, %v1711
      %v1713 = vpop.f32.mrf.mxu0
      %v1714 = vpop.f32.mrf.mxu0
      %v1715 = vadd.f32 %v494, %v1714
      %v1716 = vpop.f32.mrf.mxu0
      %1717 = vmatprep.mubr.bf16.mxu0 0
      %1718 = vmatmul.mubr.bf16.gmra.mxu0 %v1207
      %v1719 = vpop.f32.mrf.mxu0
      %v1720 = vadd.f32 %v494, %v1719
      %v1721 = vpop.f32.mrf.mxu0
      %v1722 = vpop.f32.mrf.mxu0
      %v1723 = vadd.f32 %v494, %v1722
      %v1724 = vpop.f32.mrf.mxu0
      %1725 = vmatprep.mubr.bf16.mxu0 0
      %1726 = vmatmul.mubr.bf16.gmra.mxu0 %v1210
      %v1727 = vpop.f32.mrf.mxu0
      %v1728 = vadd.f32 %v494, %v1727
      %v1729 = vpop.f32.mrf.mxu0
      %v1730 = vpop.f32.mrf.mxu0
      %v1731 = vadd.f32 %v494, %v1730
      %v1732 = vpop.f32.mrf.mxu0
      %1733 = vmatprep.mubr.bf16.mxu0 0
      %1734 = vmatmul.mubr.bf16.gmra.mxu0 %v1213
      %v1735 = vpop.f32.mrf.mxu0
      %v1736 = vadd.f32 %v494, %v1735
      %v1737 = vpop.f32.mrf.mxu0
      %v1738 = vpop.f32.mrf.mxu0
      %v1739 = vadd.f32 %v494, %v1738
      %v1740 = vpop.f32.mrf.mxu0
      %1741 = vmatprep.mubr.bf16.mxu0 0
      %1742 = vmatmul.mubr.bf16.gmra.mxu0 %v1216
      %v1743 = vpop.f32.mrf.mxu0
      %v1744 = vadd.f32 %v494, %v1743
      %v1745 = vpop.f32.mrf.mxu0
      %v1746 = vpop.f32.mrf.mxu0
      %v1747 = vadd.f32 %v494, %v1746
      %v1748 = vpop.f32.mrf.mxu0
      %1749 = vmatprep.mubr.bf16.mxu0 0
      %1750 = vmatmul.mubr.bf16.gmra.mxu0 %v1219
      %v1751 = vpop.f32.mrf.mxu0
      %v1752 = vadd.f32 %v494, %v1751
      %v1753 = vpop.f32.mrf.mxu0
      %v1754 = vpop.f32.mrf.mxu0
      %v1755 = vadd.f32 %v494, %v1754
      %v1756 = vpop.f32.mrf.mxu0
      %1757 = vmatprep.mubr.bf16.mxu0 0
      %1758 = vmatmul.mubr.bf16.gmra.mxu0 %v1222
      %v1759 = vpop.f32.mrf.mxu0
      %v1760 = vadd.f32 %v494, %v1759
      %v1761 = vpop.f32.mrf.mxu0
      %v1762 = vpop.f32.mrf.mxu0
      %v1763 = vadd.f32 %v494, %v1762
      %v1764 = vpop.f32.mrf.mxu0
      %1765 = vmatprep.mubr.bf16.mxu0 0
      %1766 = vmatmul.mubr.bf16.gmra.mxu0 %v1225
      %v1767 = vpop.f32.mrf.mxu0
      %v1768 = vadd.f32 %v494, %v1767
      %v1769 = vpop.f32.mrf.mxu0
      %v1770 = vpop.f32.mrf.mxu0
      %v1771 = vadd.f32 %v494, %v1770
      %v1772 = vpop.f32.mrf.mxu0
      %1773 = vmatprep.mubr.bf16.mxu0 0
      %1774 = vmatmul.mubr.bf16.gmra.mxu0 %v1228
      %v1775 = vpop.f32.mrf.mxu0
      %v1776 = vadd.f32 %v494, %v1775
      %v1777 = vpop.f32.mrf.mxu0
      %v1778 = vpop.f32.mrf.mxu0
      %v1779 = vadd.f32 %v494, %v1778
      %v1780 = vpop.f32.mrf.mxu0
      %1781 = vmatprep.mubr.bf16.mxu0 0
      %1782 = vmatmul.mubr.bf16.gmra.mxu0 %v1231
      %v1783 = vpop.f32.mrf.mxu0
      %v1784 = vadd.f32 %v494, %v1783
      %v1785 = vpop.f32.mrf.mxu0
      %v1786 = vpop.f32.mrf.mxu0
      %v1787 = vadd.f32 %v494, %v1786
      %v1788 = vpop.f32.mrf.mxu0
      %1789 = vmatprep.mubr.bf16.mxu0 0
      %1790 = vmatmul.mubr.bf16.gmra.mxu0 %v1234
      %v1791 = vpop.f32.mrf.mxu0
      %v1792 = vadd.f32 %v494, %v1791
      %v1793 = vpop.f32.mrf.mxu0
      %v1794 = vpop.f32.mrf.mxu0
      %v1795 = vadd.f32 %v494, %v1794
      %v1796 = vpop.f32.mrf.mxu0
      %1797 = vmatprep.mubr.bf16.mxu0 0
      %1798 = vmatmul.mubr.bf16.gmra.mxu0 %v1237
      %v1799 = vpop.f32.mrf.mxu0
      %v1800 = vadd.f32 %v494, %v1799
      %v1801 = vpop.f32.mrf.mxu0
      %v1802 = vpop.f32.mrf.mxu0
      %v1803 = vadd.f32 %v494, %v1802
      %v1804 = vpop.f32.mrf.mxu0
      %1805 = vmatprep.mubr.bf16.mxu0 0
      %1806 = vmatmul.mubr.bf16.gmra.mxu0 %v1240
      %v1807 = vpop.f32.mrf.mxu0
      %v1808 = vadd.f32 %v494, %v1807
      %v1809 = vpop.f32.mrf.mxu0
      %v1810 = vpop.f32.mrf.mxu0
      %v1811 = vadd.f32 %v494, %v1810
      %v1812 = vpop.f32.mrf.mxu0
      %1813 = vmatprep.mubr.bf16.mxu0 0
      %1814 = vmatmul.mubr.bf16.gmra.mxu0 %v1243
      %v1815 = vpop.f32.mrf.mxu0
      %v1816 = vadd.f32 %v494, %v1815
      %v1817 = vpop.f32.mrf.mxu0
      %v1818 = vpop.f32.mrf.mxu0
      %v1819 = vadd.f32 %v494, %v1818
      %v1820 = vpop.f32.mrf.mxu0
      %1821 = vmatprep.mubr.bf16.mxu0 0
      %1822 = vmatmul.mubr.bf16.gmra.mxu0 %v1246
      %v1823 = vpop.f32.mrf.mxu0
      %v1824 = vadd.f32 %v494, %v1823
      %v1825 = vpop.f32.mrf.mxu0
      %v1826 = vpop.f32.mrf.mxu0
      %v1827 = vadd.f32 %v494, %v1826
      %v1828 = vpop.f32.mrf.mxu0
      %1829 = vmatprep.mubr.bf16.mxu0 0
      %1830 = vmatmul.mubr.bf16.gmra.mxu0 %v1249
      %v1831 = vpop.f32.mrf.mxu0
      %v1832 = vadd.f32 %v494, %v1831
      %v1833 = vpop.f32.mrf.mxu0
      %v1834 = vpop.f32.mrf.mxu0
      %v1835 = vadd.f32 %v494, %v1834
      %v1836 = vpop.f32.mrf.mxu0
      %1837 = vmatprep.mubr.bf16.mxu0 0
      %1838 = vmatmul.mubr.bf16.gmra.mxu0 %v1252
      %v1839 = vpop.f32.mrf.mxu0
      %v1840 = vadd.f32 %v494, %v1839
      %v1841 = vpop.f32.mrf.mxu0
      %v1842 = vpop.f32.mrf.mxu0
      %v1843 = vadd.f32 %v494, %v1842
      %v1844 = vpop.f32.mrf.mxu0
      %1845 = vmatprep.mubr.bf16.mxu0 0
      %1846 = vmatmul.mubr.bf16.gmra.mxu0 %v1255
      %v1847 = vpop.f32.mrf.mxu0
      %v1848 = vadd.f32 %v494, %v1847
      %v1849 = vpop.f32.mrf.mxu0
      %v1850 = vpop.f32.mrf.mxu0
      %v1851 = vadd.f32 %v494, %v1850
      %v1852 = vpop.f32.mrf.mxu0
      %1853 = vmatprep.mubr.bf16.mxu0 0
      %1854 = vmatmul.mubr.bf16.gmra.mxu0 %v1258
      %v1855 = vpop.f32.mrf.mxu0
      %v1856 = vadd.f32 %v494, %v1855
      %v1857 = vpop.f32.mrf.mxu0
      %v1858 = vpop.f32.mrf.mxu0
      %v1859 = vadd.f32 %v494, %v1858
      %v1860 = vpop.f32.mrf.mxu0
      %1861 = vmatprep.mubr.bf16.mxu0 0
      %1862 = vmatmul.mubr.bf16.gmra.mxu0 %v1261
      %v1863 = vpop.f32.mrf.mxu0
      %v1864 = vadd.f32 %v494, %v1863
      %v1865 = vpop.f32.mrf.mxu0
      %v1866 = vpop.f32.mrf.mxu0
      %v1867 = vadd.f32 %v494, %v1866
      %v1868 = vpop.f32.mrf.mxu0
      %1869 = vmatprep.mubr.bf16.mxu0 0
      %1870 = vmatmul.mubr.bf16.gmra.mxu0 %v1264
      %v1871 = vpop.f32.mrf.mxu0
      %v1872 = vadd.f32 %v494, %v1871
      %v1873 = vpop.f32.mrf.mxu0
      %v1874 = vpop.f32.mrf.mxu0
      %v1875 = vadd.f32 %v494, %v1874
      %v1876 = vpop.f32.mrf.mxu0
      %1877 = vmatprep.mubr.bf16.mxu0 0
      %1878 = vmatmul.mubr.bf16.gmra.mxu0 %v1267
      %v1879 = vpop.f32.mrf.mxu0
      %v1880 = vadd.f32 %v494, %v1879
      %v1881 = vpop.f32.mrf.mxu0
      %v1882 = vpop.f32.mrf.mxu0
      %v1883 = vadd.f32 %v494, %v1882
      %v1884 = vpop.f32.mrf.mxu0
      %1885 = vmatprep.mubr.bf16.mxu0 0
      %1886 = vmatmul.mubr.bf16.gmra.mxu0 %v1270
      %v1887 = vpop.f32.mrf.mxu0
      %v1888 = vadd.f32 %v494, %v1887
      %v1889 = vpop.f32.mrf.mxu0
      %v1890 = vpop.f32.mrf.mxu0
      %v1891 = vadd.f32 %v494, %v1890
      %v1892 = vpop.f32.mrf.mxu0
      %1893 = vmatprep.mubr.bf16.mxu0 0
      %1894 = vmatmul.mubr.bf16.gmra.mxu0 %v1273
      %v1895 = vpop.f32.mrf.mxu0
      %v1896 = vadd.f32 %v494, %v1895
      %v1897 = vpop.f32.mrf.mxu0
      %v1898 = vpop.f32.mrf.mxu0
      %v1899 = vadd.f32 %v494, %v1898
      %v1900 = vpop.f32.mrf.mxu0
      %1901 = vmatprep.mubr.bf16.mxu0 0
      %1902 = vmatmul.mubr.bf16.gmra.mxu0 %v1276
      %v1903 = vpop.f32.mrf.mxu0
      %v1904 = vadd.f32 %v494, %v1903
      %v1905 = vpop.f32.mrf.mxu0
      %v1906 = vpop.f32.mrf.mxu0
      %v1907 = vadd.f32 %v494, %v1906
      %v1908 = vpop.f32.mrf.mxu0
      %1909 = vmatprep.mubr.bf16.mxu0 0
      %1910 = vmatmul.mubr.bf16.gmra.mxu0 %v1279
      %v1911 = vpop.f32.mrf.mxu0
      %v1912 = vadd.f32 %v494, %v1911
      %v1913 = vpop.f32.mrf.mxu0
      %v1914 = vpop.f32.mrf.mxu0
      %v1915 = vadd.f32 %v494, %v1914
      %v1916 = vpop.f32.mrf.mxu0
      %1917 = vmatprep.mubr.bf16.mxu0 0
      %1918 = vmatmul.mubr.bf16.gmra.mxu0 %v1282
      %v1919 = vpop.f32.mrf.mxu0
      %v1920 = vadd.f32 %v494, %v1919
      %v1921 = vpop.f32.mrf.mxu0
      %v1922 = vpop.f32.mrf.mxu0
      %v1923 = vadd.f32 %v494, %v1922
      %v1924 = vpop.f32.mrf.mxu0
      %1925 = vmatprep.mubr.bf16.mxu0 0
      %1926 = vmatmul.mubr.bf16.gmra.mxu0 %v1285
      %v1927 = vpop.f32.mrf.mxu0
      %v1928 = vadd.f32 %v494, %v1927
      %v1929 = vpop.f32.mrf.mxu0
      %v1930 = vpop.f32.mrf.mxu0
      %v1931 = vadd.f32 %v494, %v1930
      %v1932 = vpop.f32.mrf.mxu0
      %1933 = vmatprep.mubr.bf16.mxu0 0
      %1934 = vmatmul.mubr.bf16.gmra.mxu0 %v1288
      %v1935 = vpop.f32.mrf.mxu0
      %v1936 = vadd.f32 %v494, %v1935
      %v1937 = vpop.f32.mrf.mxu0
      %v1938 = vpop.f32.mrf.mxu0
      %v1939 = vadd.f32 %v494, %v1938
      %v1940 = vpop.f32.mrf.mxu0
      %1941 = vmatprep.mubr.bf16.mxu0 0
      %1942 = vmatmul.mubr.bf16.gmra.mxu0 %v1291
      %v1943 = vpop.f32.mrf.mxu0
      %v1944 = vadd.f32 %v494, %v1943
      %v1945 = vpop.f32.mrf.mxu0
      %v1946 = vpop.f32.mrf.mxu0
      %v1947 = vadd.f32 %v494, %v1946
      %v1948 = vpop.f32.mrf.mxu0
      %1949 = vmatprep.mubr.bf16.mxu0 0
      %1950 = vmatmul.mubr.bf16.gmra.mxu0 %v1294
      %v1951 = vpop.f32.mrf.mxu0
      %v1952 = vadd.f32 %v494, %v1951
      %v1953 = vpop.f32.mrf.mxu0
      %v1954 = vpop.f32.mrf.mxu0
      %v1955 = vadd.f32 %v494, %v1954
      %v1956 = vpop.f32.mrf.mxu0
      %1957 = vmatprep.mubr.bf16.mxu0 0
      %1958 = vmatmul.mubr.bf16.gmra.mxu0 %v1297
      %v1959 = vpop.f32.mrf.mxu0
      %v1960 = vadd.f32 %v494, %v1959
      %v1961 = vpop.f32.mrf.mxu0
      %v1962 = vpop.f32.mrf.mxu0
      %v1963 = vadd.f32 %v494, %v1962
      %v1964 = vpop.f32.mrf.mxu0
      %1965 = vmatprep.mubr.bf16.mxu0 0
      %1966 = vmatmul.mubr.bf16.gmra.mxu0 %v1300
      %v1967 = vpop.f32.mrf.mxu0
      %v1968 = vadd.f32 %v494, %v1967
      %v1969 = vpop.f32.mrf.mxu0
      %v1970 = vpop.f32.mrf.mxu0
      %v1971 = vadd.f32 %v494, %v1970
      %v1972 = vpop.f32.mrf.mxu0
      %1973 = vmatprep.mubr.bf16.mxu0 0
      %1974 = vmatmul.mubr.bf16.gmra.mxu0 %v1303
      %v1975 = vpop.f32.mrf.mxu0
      %v1976 = vadd.f32 %v494, %v1975
      %v1977 = vpop.f32.mrf.mxu0
      %v1978 = vpop.f32.mrf.mxu0
      %v1979 = vadd.f32 %v494, %v1978
      %v1980 = vpop.f32.mrf.mxu0
      %1981 = vmatprep.mubr.bf16.mxu0 0
      %1982 = vmatmul.mubr.bf16.gmra.mxu0 %v1306
      %v1983 = vpop.f32.mrf.mxu0
      %v1984 = vadd.f32 %v494, %v1983
      %v1985 = vpop.f32.mrf.mxu0
      %v1986 = vpop.f32.mrf.mxu0
      %v1987 = vadd.f32 %v494, %v1986
      %v1988 = vpop.f32.mrf.mxu0
      %1989 = vmatprep.mubr.bf16.mxu0 0
      %1990 = vmatmul.mubr.bf16.gmra.mxu0 %v1309
      %v1991 = vpop.f32.mrf.mxu0
      %v1992 = vadd.f32 %v494, %v1991
      %v1993 = vpop.f32.mrf.mxu0
      %v1994 = vpop.f32.mrf.mxu0
      %v1995 = vadd.f32 %v494, %v1994
      %v1996 = vpop.f32.mrf.mxu0
      %1997 = vmatprep.mubr.bf16.mxu0 0
      %1998 = vmatmul.mubr.bf16.gmra.mxu0 %v1312
      %v1999 = vpop.f32.mrf.mxu0
      %v2000 = vadd.f32 %v494, %v1999
      %v2001 = vpop.f32.mrf.mxu0
      %v2002 = vpop.f32.mrf.mxu0
      %v2003 = vadd.f32 %v494, %v2002
      %v2004 = vpop.f32.mrf.mxu0
      %2005 = vmatprep.mubr.bf16.mxu0 0
      %2006 = vmatmul.mubr.bf16.gmra.mxu0 %v1315
      %v2007 = vpop.f32.mrf.mxu0
      %v2008 = vadd.f32 %v494, %v2007
      %v2009 = vpop.f32.mrf.mxu0
      %v2010 = vpop.f32.mrf.mxu0
      %v2011 = vadd.f32 %v494, %v2010
      %v2012 = vpop.f32.mrf.mxu0
      %2013 = vmatprep.mubr.bf16.mxu0 0
      %2014 = vmatmul.mubr.bf16.gmra.mxu0 %v1318
      %v2015 = vpop.f32.mrf.mxu0
      %v2016 = vadd.f32 %v494, %v2015
      %v2017 = vpop.f32.mrf.mxu0
      %v2018 = vpop.f32.mrf.mxu0
      %v2019 = vadd.f32 %v494, %v2018
      %v2020 = vpop.f32.mrf.mxu0
      %2021 = vmatprep.mubr.bf16.mxu0 0
      %2022 = vmatmul.mubr.bf16.gmra.mxu0 %v1321
      %v2023 = vpop.f32.mrf.mxu0
      %v2024 = vadd.f32 %v494, %v2023
      %v2025 = vpop.f32.mrf.mxu0
      %v2026 = vpop.f32.mrf.mxu0
      %v2027 = vadd.f32 %v494, %v2026
      %v2028 = vpop.f32.mrf.mxu0
      %2029 = vmatprep.mubr.bf16.mxu0 0
      %2030 = vmatmul.mubr.bf16.gmra.mxu0 %v1324
      %v2031 = vpop.f32.mrf.mxu0
      %v2032 = vadd.f32 %v494, %v2031
      %v2033 = vpop.f32.mrf.mxu0
      %v2034 = vpop.f32.mrf.mxu0
      %v2035 = vadd.f32 %v494, %v2034
      %v2036 = vpop.f32.mrf.mxu0
      %2037 = vmatprep.mubr.bf16.mxu0 0
      %2038 = vmatmul.mubr.bf16.gmra.mxu0 %v1327
      %v2039 = vpop.f32.mrf.mxu0
      %v2040 = vadd.f32 %v494, %v2039
      %v2041 = vpop.f32.mrf.mxu0
      %v2042 = vpop.f32.mrf.mxu0
      %v2043 = vadd.f32 %v494, %v2042
      %v2044 = vpop.f32.mrf.mxu0
      %2045 = vmatprep.mubr.bf16.mxu0 0
      %2046 = vmatmul.mubr.bf16.gmra.mxu0 %v1330
      %v2047 = vpop.f32.mrf.mxu0
      %v2048 = vadd.f32 %v494, %v2047
      %v2049 = vpop.f32.mrf.mxu0
      %v2050 = vpop.f32.mrf.mxu0
      %v2051 = vadd.f32 %v494, %v2050
      %v2052 = vpop.f32.mrf.mxu0
      %2053 = vmatprep.mubr.bf16.mxu0 0
      %2054 = vmatmul.mubr.bf16.gmra.mxu0 %v1333
      %v2055 = vpop.f32.mrf.mxu0
      %v2056 = vadd.f32 %v494, %v2055
      %v2057 = vpop.f32.mrf.mxu0
      %v2058 = vpop.f32.mrf.mxu0
      %v2059 = vadd.f32 %v494, %v2058
      %v2060 = vpop.f32.mrf.mxu0
      %2061 = vmatprep.mubr.bf16.mxu0 0
      %2062 = vmatmul.mubr.bf16.gmra.mxu0 %v1336
      %v2063 = vpop.f32.mrf.mxu0
      %v2064 = vadd.f32 %v494, %v2063
      %v2065 = vpop.f32.mrf.mxu0
      %v2066 = vpop.f32.mrf.mxu0
      %v2067 = vadd.f32 %v494, %v2066
      %v2068 = vpop.f32.mrf.mxu0
      %2069 = vmatprep.mubr.bf16.mxu0 0
      %2070 = vmatmul.mubr.bf16.gmra.mxu0 %v1339
      %v2071 = vpop.f32.mrf.mxu0
      %v2072 = vadd.f32 %v494, %v2071
      %v2073 = vpop.f32.mrf.mxu0
      %v2074 = vpop.f32.mrf.mxu0
      %v2075 = vadd.f32 %v494, %v2074
      %v2076 = vpop.f32.mrf.mxu0
      %2077 = vmatprep.mubr.bf16.mxu0 0
      %2078 = vmatmul.mubr.bf16.gmra.mxu0 %v1342
      %v2079 = vpop.f32.mrf.mxu0
      %v2080 = vadd.f32 %v494, %v2079
      %v2081 = vpop.f32.mrf.mxu0
      %v2082 = vpop.f32.mrf.mxu0
      %v2083 = vadd.f32 %v494, %v2082
      %v2084 = vpop.f32.mrf.mxu0
      %2085 = vmatprep.mubr.bf16.mxu0 0
      %2086 = vmatmul.mubr.bf16.gmra.mxu0 %v1345
      %v2087 = vpop.f32.mrf.mxu0
      %v2088 = vadd.f32 %v494, %v2087
      %v2089 = vpop.f32.mrf.mxu0
      %v2090 = vpop.f32.mrf.mxu0
      %v2091 = vadd.f32 %v494, %v2090
      %v2092 = vpop.f32.mrf.mxu0
      %2093 = vmatprep.mubr.bf16.mxu0 0
      %2094 = vmatmul.mubr.bf16.gmra.mxu0 %v1348
      %v2095 = vpop.f32.mrf.mxu0
      %v2096 = vadd.f32 %v494, %v2095
      %v2097 = vpop.f32.mrf.mxu0
      %v2098 = vpop.f32.mrf.mxu0
      %v2099 = vadd.f32 %v494, %v2098
      %v2100 = vpop.f32.mrf.mxu0
      %2101 = vmatprep.mubr.bf16.mxu0 0
      %2102 = vmatmul.mubr.bf16.gmra.mxu0 %v1351
      %v2103 = vpop.f32.mrf.mxu0
      %v2104 = vadd.f32 %v494, %v2103
      %v2105 = vpop.f32.mrf.mxu0
      %v2106 = vpop.f32.mrf.mxu0
      %v2107 = vadd.f32 %v494, %v2106
      %v2108 = vpop.f32.mrf.mxu0
      %2109 = vmatprep.mubr.bf16.mxu0 0
      %2110 = vmatmul.mubr.bf16.gmra.mxu0 %v1354
      %v2111 = vpop.f32.mrf.mxu0
      %v2112 = vadd.f32 %v494, %v2111
      %v2113 = vpop.f32.mrf.mxu0
      %v2114 = vpop.f32.mrf.mxu0
      %v2115 = vadd.f32 %v494, %v2114
      %v2116 = vpop.f32.mrf.mxu0
      %2117 = vmatprep.mubr.bf16.mxu0 0
      %2118 = vmatmul.mubr.bf16.gmra.mxu0 %v1357
      %v2119 = vpop.f32.mrf.mxu0
      %v2120 = vadd.f32 %v494, %v2119
      %v2121 = vpop.f32.mrf.mxu0
      %v2122 = vpop.f32.mrf.mxu0
      %v2123 = vadd.f32 %v494, %v2122
      %v2124 = vpop.f32.mrf.mxu0
      %2125 = vmatprep.mubr.bf16.mxu0 0
      %2126 = vmatmul.mubr.bf16.gmra.mxu0 %v1360
      %v2127 = vpop.f32.mrf.mxu0
      %v2128 = vadd.f32 %v494, %v2127
      %v2129 = vpop.f32.mrf.mxu0
      %v2130 = vpop.f32.mrf.mxu0
      %v2131 = vadd.f32 %v494, %v2130
      %v2132 = vpop.f32.mrf.mxu0
      %2133 = vmatprep.mubr.bf16.mxu0 0
      %2134 = vmatmul.mubr.bf16.gmra.mxu0 %v1363
      %v2135 = vpop.f32.mrf.mxu0
      %v2136 = vadd.f32 %v494, %v2135
      %v2137 = vpop.f32.mrf.mxu0
      %v2138 = vpop.f32.mrf.mxu0
      %v2139 = vadd.f32 %v494, %v2138
      %v2140 = vpop.f32.mrf.mxu0
      %2141 = vmatprep.mubr.bf16.mxu0 0
      %2142 = vmatmul.mubr.bf16.gmra.mxu0 %v1366
      %v2143 = vpop.f32.mrf.mxu0
      %v2144 = vadd.f32 %v494, %v2143
      %v2145 = vpop.f32.mrf.mxu0
      %v2146 = vpop.f32.mrf.mxu0
      %v2147 = vadd.f32 %v494, %v2146
      %v2148 = vpop.f32.mrf.mxu0
      %2149 = vmatprep.mubr.bf16.mxu0 0
      %2150 = vmatmul.mubr.bf16.gmra.mxu0 %v1369
      %v2151 = vpop.f32.mrf.mxu0
      %v2152 = vadd.f32 %v494, %v2151
      %v2153 = vpop.f32.mrf.mxu0
      %v2154 = vpop.f32.mrf.mxu0
      %v2155 = vadd.f32 %v494, %v2154
      %v2156 = vpop.f32.mrf.mxu0
      %2157 = vmatprep.mubr.bf16.mxu0 0
      %2158 = vmatmul.mubr.bf16.gmra.mxu0 %v1372
      %v2159 = vpop.f32.mrf.mxu0
      %v2160 = vadd.f32 %v494, %v2159
      %v2161 = vpop.f32.mrf.mxu0
      %v2162 = vpop.f32.mrf.mxu0
      %v2163 = vadd.f32 %v494, %v2162
      %v2164 = vpop.f32.mrf.mxu0
      %2165 = vmatprep.mubr.bf16.mxu0 0
      %2166 = vmatmul.mubr.bf16.gmra.mxu0 %v1375
      %v2167 = vpop.f32.mrf.mxu0
      %v2168 = vadd.f32 %v494, %v2167
      %v2169 = vpop.f32.mrf.mxu0
      %v2170 = vpop.f32.mrf.mxu0
      %v2171 = vadd.f32 %v494, %v2170
      %v2172 = vpop.f32.mrf.mxu0
      %2173 = vmatprep.mubr.bf16.mxu0 0
      %2174 = vmatmul.mubr.bf16.gmra.mxu0 %v1378
      %v2175 = vpop.f32.mrf.mxu0
      %v2176 = vadd.f32 %v494, %v2175
      %v2177 = vpop.f32.mrf.mxu0
      %v2178 = vpop.f32.mrf.mxu0
      %v2179 = vadd.f32 %v494, %v2178
      %v2180 = vpop.f32.mrf.mxu0
      %2181 = vmatprep.mubr.bf16.mxu0 0
      %2182 = vmatmul.mubr.bf16.gmra.mxu0 %v1381
      %v2183 = vpop.f32.mrf.mxu0
      %v2184 = vadd.f32 %v494, %v2183
      %v2185 = vpop.f32.mrf.mxu0
      %v2186 = vpop.f32.mrf.mxu0
      %v2187 = vadd.f32 %v494, %v2186
      %v2188 = vpop.f32.mrf.mxu0
      %2189 = vmatprep.mubr.bf16.mxu0 0
      %2190 = vmatmul.mubr.bf16.gmra.mxu0 %v1384
      %v2191 = vpop.f32.mrf.mxu0
      %v2192 = vadd.f32 %v494, %v2191
      %v2193 = vpop.f32.mrf.mxu0
      %v2194 = vpop.f32.mrf.mxu0
      %v2195 = vadd.f32 %v494, %v2194
      %v2196 = vpop.f32.mrf.mxu0
      %2197 = vmatprep.mubr.bf16.mxu0 0
      %2198 = vmatmul.mubr.bf16.gmra.mxu0 %v1387
      %v2199 = vpop.f32.mrf.mxu0
      %v2200 = vadd.f32 %v494, %v2199
      %v2201 = vpop.f32.mrf.mxu0
      %v2202 = vpop.f32.mrf.mxu0
      %v2203 = vadd.f32 %v494, %v2202
      %v2204 = vpop.f32.mrf.mxu0
      %2205 = vmatprep.mubr.bf16.mxu0 0
      %2206 = vmatmul.mubr.bf16.gmra.mxu0 %v1390
      %v2207 = vpop.f32.mrf.mxu0
      %v2208 = vadd.f32 %v494, %v2207
      %v2209 = vpop.f32.mrf.mxu0
      %v2210 = vpop.f32.mrf.mxu0
      %v2211 = vadd.f32 %v494, %v2210
      %v2212 = vpop.f32.mrf.mxu0
      %2213 = vmatprep.mubr.bf16.mxu0 0
      %2214 = vmatmul.mubr.bf16.gmra.mxu0 %v1393
      %v2215 = vpop.f32.mrf.mxu0
      %v2216 = vadd.f32 %v494, %v2215
      %v2217 = vpop.f32.mrf.mxu0
      %v2218 = vpop.f32.mrf.mxu0
      %v2219 = vadd.f32 %v494, %v2218
      %v2220 = vpop.f32.mrf.mxu0
      %2221 = vmatprep.mubr.bf16.mxu0 0
      %2222 = vmatmul.mubr.bf16.gmra.mxu0 %v1396
      %v2223 = vpop.f32.mrf.mxu0
      %v2224 = vadd.f32 %v494, %v2223
      %v2225 = vpop.f32.mrf.mxu0
      %v2226 = vpop.f32.mrf.mxu0
      %v2227 = vadd.f32 %v494, %v2226
      %v2228 = vpop.f32.mrf.mxu0
      %2229 = vmatprep.mubr.bf16.mxu0 0
      %2230 = vmatmul.mubr.bf16.gmra.mxu0 %v1399
      %v2231 = vpop.f32.mrf.mxu0
      %v2232 = vadd.f32 %v494, %v2231
      %v2233 = vpop.f32.mrf.mxu0
      %v2234 = vpop.f32.mrf.mxu0
      %v2235 = vadd.f32 %v494, %v2234
      %v2236 = vpop.f32.mrf.mxu0
      %2237 = vmatprep.mubr.bf16.mxu0 0
      %2238 = vmatmul.mubr.bf16.gmra.mxu0 %v1402
      %v2239 = vpop.f32.mrf.mxu0
      %v2240 = vadd.f32 %v494, %v2239
      %v2241 = vpop.f32.mrf.mxu0
      %v2242 = vpop.f32.mrf.mxu0
      %v2243 = vadd.f32 %v494, %v2242
      %v2244 = vpop.f32.mrf.mxu0
      %2245 = vmatprep.mubr.bf16.mxu0 0
      %2246 = vmatmul.mubr.bf16.gmra.mxu0 %v1405
      %v2247 = vpop.f32.mrf.mxu0
      %v2248 = vadd.f32 %v494, %v2247
      %v2249 = vpop.f32.mrf.mxu0
      %v2250 = vpop.f32.mrf.mxu0
      %v2251 = vadd.f32 %v494, %v2250
      %v2252 = vpop.f32.mrf.mxu0
      %2253 = vmatprep.mubr.bf16.mxu0 0
      %2254 = vmatmul.mubr.bf16.gmra.mxu0 %v1408
      %v2255 = vpop.f32.mrf.mxu0
      %v2256 = vadd.f32 %v494, %v2255
      %v2257 = vpop.f32.mrf.mxu0
      %v2258 = vpop.f32.mrf.mxu0
      %v2259 = vadd.f32 %v494, %v2258
      %v2260 = vpop.f32.mrf.mxu0
      %2261 = vmatprep.mubr.bf16.mxu0 0
      %2262 = vmatmul.mubr.bf16.gmra.mxu0 %v1411
      %v2263 = vpop.f32.mrf.mxu0
      %v2264 = vadd.f32 %v494, %v2263
      %v2265 = vpop.f32.mrf.mxu0
      %v2266 = vpop.f32.mrf.mxu0
      %v2267 = vadd.f32 %v494, %v2266
      %v2268 = vpop.f32.mrf.mxu0
      %2269 = vmatprep.mubr.bf16.mxu0 0
      %2270 = vmatmul.mubr.bf16.gmra.mxu0 %v1414
      %v2271 = vpop.f32.mrf.mxu0
      %v2272 = vadd.f32 %v494, %v2271
      %v2273 = vpop.f32.mrf.mxu0
      %v2274 = vpop.f32.mrf.mxu0
      %v2275 = vadd.f32 %v494, %v2274
      %v2276 = vpop.f32.mrf.mxu0
      %2277 = vmatprep.mubr.bf16.mxu0 0
      %2278 = vmatmul.mubr.bf16.gmra.mxu0 %v1417
      %v2279 = vpop.f32.mrf.mxu0
      %v2280 = vadd.f32 %v494, %v2279
      %v2281 = vpop.f32.mrf.mxu0
      %v2282 = vpop.f32.mrf.mxu0
      %v2283 = vadd.f32 %v494, %v2282
      %v2284 = vpop.f32.mrf.mxu0
      %2285 = vmatprep.mubr.bf16.mxu0 0
      %2286 = vmatmul.mubr.bf16.gmra.mxu0 %v1420
      %v2287 = vpop.f32.mrf.mxu0
      %v2288 = vadd.f32 %v494, %v2287
      %v2289 = vpop.f32.mrf.mxu0
      %v2290 = vpop.f32.mrf.mxu0
      %v2291 = vadd.f32 %v494, %v2290
      %v2292 = vpop.f32.mrf.mxu0
      %2293 = vmatprep.mubr.bf16.mxu0 0
      %2294 = vmatmul.mubr.bf16.gmra.mxu0 %v1423
      %v2295 = vpop.f32.mrf.mxu0
      %v2296 = vadd.f32 %v494, %v2295
      %v2297 = vpop.f32.mrf.mxu0
      %v2298 = vpop.f32.mrf.mxu0
      %v2299 = vadd.f32 %v494, %v2298
      %v2300 = vpop.f32.mrf.mxu0
      %2301 = vmatprep.mubr.bf16.mxu0 0
      %2302 = vmatmul.mubr.bf16.gmra.mxu0 %v1426
      %v2303 = vpop.f32.mrf.mxu0
      %v2304 = vadd.f32 %v494, %v2303
      %v2305 = vpop.f32.mrf.mxu0
      %v2306 = vpop.f32.mrf.mxu0
      %v2307 = vadd.f32 %v494, %v2306
      %v2308 = vpop.f32.mrf.mxu0
      %2309 = vmatprep.mubr.bf16.mxu0 0
      %2310 = vmatmul.mubr.bf16.gmra.mxu0 %v1429
      %v2311 = vpop.f32.mrf.mxu0
      %v2312 = vadd.f32 %v494, %v2311
      %v2313 = vpop.f32.mrf.mxu0
      %v2314 = vpop.f32.mrf.mxu0
      %v2315 = vadd.f32 %v494, %v2314
      %v2316 = vpop.f32.mrf.mxu0
      %2317 = vmatprep.mubr.bf16.mxu0 0
      %2318 = vmatmul.mubr.bf16.gmra.mxu0 %v1432
      %v2319 = vpop.f32.mrf.mxu0
      %v2320 = vadd.f32 %v494, %v2319
      %v2321 = vpop.f32.mrf.mxu0
      %v2322 = vpop.f32.mrf.mxu0
      %v2323 = vadd.f32 %v494, %v2322
      %v2324 = vpop.f32.mrf.mxu0
      %2325 = vmatprep.mubr.bf16.mxu0 0
      %2326 = vmatmul.mubr.bf16.gmra.mxu0 %v1435
      %v2327 = vpop.f32.mrf.mxu0
      %v2328 = vadd.f32 %v494, %v2327
      %v2329 = vpop.f32.mrf.mxu0
      %v2330 = vpop.f32.mrf.mxu0
      %v2331 = vadd.f32 %v494, %v2330
      %v2332 = vpop.f32.mrf.mxu0
      %2333 = vmatprep.mubr.bf16.mxu0 0
      %2334 = vmatmul.mubr.bf16.gmra.mxu0 %v1438
      %v2335 = vpop.f32.mrf.mxu0
      %v2336 = vadd.f32 %v494, %v2335
      %v2337 = vpop.f32.mrf.mxu0
      %v2338 = vpop.f32.mrf.mxu0
      %v2339 = vadd.f32 %v494, %v2338
      %v2340 = vpop.f32.mrf.mxu0
      %2341 = vmatprep.mubr.bf16.mxu0 0
      %2342 = vmatmul.mubr.bf16.gmra.mxu0 %v1441
      %v2343 = vpop.f32.mrf.mxu0
      %v2344 = vadd.f32 %v494, %v2343
      %v2345 = vpop.f32.mrf.mxu0
      %v2346 = vpop.f32.mrf.mxu0
      %v2347 = vadd.f32 %v494, %v2346
      %v2348 = vpop.f32.mrf.mxu0
      %2349 = vmatprep.mubr.bf16.mxu0 0
      %2350 = vmatmul.mubr.bf16.gmra.mxu0 %v1444
      %v2351 = vpop.f32.mrf.mxu0
      %v2352 = vadd.f32 %v494, %v2351
      %v2353 = vpop.f32.mrf.mxu0
      %v2354 = vpop.f32.mrf.mxu0
      %v2355 = vadd.f32 %v494, %v2354
      %v2356 = vpop.f32.mrf.mxu0
      %2357 = vmatprep.mubr.bf16.mxu0 0
      %2358 = vmatmul.mubr.bf16.gmra.mxu0 %v1447
      %v2359 = vpop.f32.mrf.mxu0
      %v2360 = vadd.f32 %v494, %v2359
      %v2361 = vpop.f32.mrf.mxu0
      %v2362 = vpop.f32.mrf.mxu0
      %v2363 = vadd.f32 %v494, %v2362
      %v2364 = vpop.f32.mrf.mxu0
      %2365 = vmatprep.mubr.bf16.mxu0 0
      %2366 = vmatmul.mubr.bf16.gmra.mxu0 %v1450
      %v2367 = vpop.f32.mrf.mxu0
      %v2368 = vadd.f32 %v494, %v2367
      %v2369 = vpop.f32.mrf.mxu0
      %v2370 = vpop.f32.mrf.mxu0
      %v2371 = vadd.f32 %v494, %v2370
      %v2372 = vpop.f32.mrf.mxu0
      %2373 = vmatprep.mubr.bf16.mxu0 0
      %2374 = vmatmul.mubr.bf16.gmra.mxu0 %v1453
      %v2375 = vpop.f32.mrf.mxu0
      %v2376 = vadd.f32 %v494, %v2375
      %v2377 = vpop.f32.mrf.mxu0
      %v2378 = vpop.f32.mrf.mxu0
      %v2379 = vadd.f32 %v494, %v2378
      %v2380 = vpop.f32.mrf.mxu0
      %2381 = vmatprep.mubr.bf16.mxu0 0
      %2382 = vmatmul.mubr.bf16.gmra.mxu0 %v1456
      %v2383 = vpop.f32.mrf.mxu0
      %v2384 = vadd.f32 %v494, %v2383
      %v2385 = vpop.f32.mrf.mxu0
      %v2386 = vpop.f32.mrf.mxu0
      %v2387 = vadd.f32 %v494, %v2386
      %v2388 = vpop.f32.mrf.mxu0
      %2389 = vmatprep.mubr.bf16.mxu0 0
      %2390 = vmatmul.mubr.bf16.gmra.mxu0 %v1459
      %v2391 = vpop.f32.mrf.mxu0
      %v2392 = vadd.f32 %v494, %v2391
      %v2393 = vpop.f32.mrf.mxu0
      %v2394 = vpop.f32.mrf.mxu0
      %v2395 = vadd.f32 %v494, %v2394
      %v2396 = vpop.f32.mrf.mxu0
      %2397 = vmatprep.mubr.bf16.mxu0 0
      %2398 = vmatmul.mubr.bf16.gmra.mxu0 %v1462
      %v2399 = vpop.f32.mrf.mxu0
      %v2400 = vadd.f32 %v494, %v2399
      %v2401 = vpop.f32.mrf.mxu0
      %v2402 = vpop.f32.mrf.mxu0
      %v2403 = vadd.f32 %v494, %v2402
      %v2404 = vpop.f32.mrf.mxu0
      %2405 = vmatprep.mubr.bf16.mxu0 0
      %2406 = vmatmul.mubr.bf16.gmra.mxu0 %v1465
      %v2407 = vpop.f32.mrf.mxu0
      %v2408 = vadd.f32 %v494, %v2407
      %v2409 = vpop.f32.mrf.mxu0
      %v2410 = vpop.f32.mrf.mxu0
      %v2411 = vadd.f32 %v494, %v2410
      %v2412 = vpop.f32.mrf.mxu0
      %2413 = vmatprep.mubr.bf16.mxu0 0
      %2414 = vmatmul.mubr.bf16.gmra.mxu0 %v1468
      %v2415 = vpop.f32.mrf.mxu0
      %v2416 = vadd.f32 %v494, %v2415
      %v2417 = vpop.f32.mrf.mxu0
      %v2418 = vpop.f32.mrf.mxu0
      %v2419 = vadd.f32 %v494, %v2418
      %v2420 = vpop.f32.mrf.mxu0
      %2421 = vmatprep.mubr.bf16.mxu0 0
      %2422 = vmatmul.mubr.bf16.gmra.mxu0 %v1471
      %v2423 = vpop.f32.mrf.mxu0
      %v2424 = vadd.f32 %v494, %v2423
      %v2425 = vpop.f32.mrf.mxu0
      %v2426 = vpop.f32.mrf.mxu0
      %v2427 = vadd.f32 %v494, %v2426
      %v2428 = vpop.f32.mrf.mxu0
      %2429 = vmatprep.mubr.bf16.mxu0 0
      %2430 = vmatmul.mubr.bf16.gmra.mxu0 %v1474
      %v2431 = vpop.f32.mrf.mxu0
      %v2432 = vadd.f32 %v494, %v2431
      %v2433 = vpop.f32.mrf.mxu0
      %v2434 = vpop.f32.mrf.mxu0
      %v2435 = vadd.f32 %v494, %v2434
      %v2436 = vpop.f32.mrf.mxu0
      %2437 = vmatprep.mubr.bf16.mxu0 0
      %2438 = vmatmul.mubr.bf16.gmra.mxu0 %v1477
      %v2439 = vpop.f32.mrf.mxu0
      %v2440 = vadd.f32 %v494, %v2439
      %v2441 = vpop.f32.mrf.mxu0
      %v2442 = vpop.f32.mrf.mxu0
      %v2443 = vadd.f32 %v494, %v2442
      %v2444 = vpop.f32.mrf.mxu0
      %2445 = vmatprep.mubr.bf16.mxu0 0
      %2446 = vmatmul.mubr.bf16.gmra.mxu0 %v1480
      %v2447 = vpop.f32.mrf.mxu0
      %v2448 = vadd.f32 %v494, %v2447
      %v2449 = vpop.f32.mrf.mxu0
      %v2450 = vpop.f32.mrf.mxu0
      %v2451 = vadd.f32 %v494, %v2450
      %v2452 = vpop.f32.mrf.mxu0
      %2453 = vmatprep.mubr.bf16.mxu0 0
      %2454 = vmatmul.mubr.bf16.gmra.mxu0 %v1483
      %v2455 = vpop.f32.mrf.mxu0
      %v2456 = vadd.f32 %v494, %v2455
      %v2457 = vpop.f32.mrf.mxu0
      %v2458 = vpop.f32.mrf.mxu0
      %v2459 = vadd.f32 %v494, %v2458
      %v2460 = vpop.f32.mrf.mxu0
      %2461 = vmatprep.mubr.bf16.mxu0 0
      %2462 = vmatmul.mubr.bf16.gmra.mxu0 %v1486
      %v2463 = vpop.f32.mrf.mxu0
      %v2464 = vadd.f32 %v494, %v2463
      %v2465 = vpop.f32.mrf.mxu0
      %v2466 = vpop.f32.mrf.mxu0
      %v2467 = vadd.f32 %v494, %v2466
      %v2468 = vpop.f32.mrf.mxu0
      %2469 = vmatprep.mubr.bf16.mxu0 0
      %2470 = vmatmul.mubr.bf16.gmra.mxu0 %v1489
      %v2471 = vpop.f32.mrf.mxu0
      %v2472 = vadd.f32 %v494, %v2471
      %v2473 = vpop.f32.mrf.mxu0
      %v2474 = vpop.f32.mrf.mxu0
      %v2475 = vadd.f32 %v494, %v2474
      %v2476 = vpop.f32.mrf.mxu0
      %2477 = vmatprep.mubr.bf16.mxu0 0
      %2478 = vmatmul.mubr.bf16.gmra.mxu0 %v1492
      %v2479 = vpop.f32.mrf.mxu0
      %v2480 = vadd.f32 %v494, %v2479
      %v2481 = vpop.f32.mrf.mxu0
      %v2482 = vpop.f32.mrf.mxu0
      %v2483 = vadd.f32 %v494, %v2482
      %v2484 = vpop.f32.mrf.mxu0
      %2485 = vmatprep.mubr.bf16.mxu0 0
      %2486 = vmatmul.mubr.bf16.gmra.mxu0 %v1495
      %v2487 = vpop.f32.mrf.mxu0
      %v2488 = vadd.f32 %v494, %v2487
      %v2489 = vpop.f32.mrf.mxu0
      %v2490 = vpop.f32.mrf.mxu0
      %v2491 = vadd.f32 %v494, %v2490
      %v2492 = vpop.f32.mrf.mxu0
      %2493 = vmatprep.mubr.bf16.mxu0 0
      %2494 = vmatmul.mubr.bf16.gmra.mxu0 %v1498
      %v2495 = vpop.f32.mrf.mxu0
      %v2496 = vadd.f32 %v494, %v2495
      %v2497 = vpop.f32.mrf.mxu0
      %v2498 = vpop.f32.mrf.mxu0
      %v2499 = vadd.f32 %v494, %v2498
      %v2500 = vpop.f32.mrf.mxu0
      %2501 = vmatprep.mubr.bf16.mxu0 0
      %2502 = vmatmul.mubr.bf16.gmra.mxu0 %v1501
      %v2503 = vpop.f32.mrf.mxu0
      %v2504 = vadd.f32 %v494, %v2503
      %v2505 = vpop.f32.mrf.mxu0
      %v2506 = vpop.f32.mrf.mxu0
      %v2507 = vadd.f32 %v494, %v2506
      %v2508 = vpop.f32.mrf.mxu0
      %2509 = vmatprep.mubr.bf16.mxu0 0
      %2510 = vmatmul.mubr.bf16.gmra.mxu0 %v1504
      %v2511 = vpop.f32.mrf.mxu0
      %v2512 = vadd.f32 %v494, %v2511
      %v2513 = vpop.f32.mrf.mxu0
      %v2514 = vpop.f32.mrf.mxu0
      %v2515 = vadd.f32 %v494, %v2514
      %v2516 = vpop.f32.mrf.mxu0
      %2517 = vmatprep.mubr.bf16.mxu0 0
      %2518 = vmatmul.mubr.bf16.gmra.mxu0 %v1507
      %v2519 = vpop.f32.mrf.mxu0
      %v2520 = vadd.f32 %v494, %v2519
      %v2521 = vpop.f32.mrf.mxu0
      %v2522 = vpop.f32.mrf.mxu0
      %v2523 = vadd.f32 %v494, %v2522
      %v2524 = vpop.f32.mrf.mxu0
      %2525 = vmatprep.mubr.bf16.mxu0 0
      %2526 = vmatmul.mubr.bf16.gmra.mxu0 %v1510
      %v2527 = vpop.f32.mrf.mxu0
      %v2528 = vadd.f32 %v494, %v2527
      %v2529 = vpop.f32.mrf.mxu0
      %v2530 = vpop.f32.mrf.mxu0
      %v2531 = vadd.f32 %v494, %v2530
      %v2532 = vpop.f32.mrf.mxu0
      %2533 = vmatprep.mubr.bf16.mxu0 0
      %2534 = vmatmul.mubr.bf16.gmra.mxu0 %v1513
      %v2535 = vpop.f32.mrf.mxu0
      %v2536 = vadd.f32 %v494, %v2535
      %v2537 = vpop.f32.mrf.mxu0
      %v2538 = vpop.f32.mrf.mxu0
      %v2539 = vadd.f32 %v494, %v2538
      %v2540 = vpop.f32.mrf.mxu0
      %2541 = vmatprep.mubr.bf16.mxu0 0
      %2542 = vmatmul.mubr.bf16.gmra.mxu0 %v1516
      %v2543 = vpop.f32.mrf.mxu0
      %v2544 = vadd.f32 %v494, %v2543
      %v2545 = vpop.f32.mrf.mxu0
      %v2546 = vpop.f32.mrf.mxu0
      %v2547 = vadd.f32 %v494, %v2546
      %v2548 = vpop.f32.mrf.mxu0
      %2549 = vmatprep.mubr.bf16.mxu0 0
      %2550 = vmatmul.mubr.bf16.gmra.mxu0 %v1519
      %v2551 = vpop.f32.mrf.mxu0
      %v2552 = vadd.f32 %v494, %v2551
      %v2553 = vpop.f32.mrf.mxu0
      %v2554 = vpop.f32.mrf.mxu0
      %v2555 = vadd.f32 %v494, %v2554
      %v2556 = vpop.f32.mrf.mxu0
      %2557 = vmatprep.mubr.bf16.mxu0 0
      %2558 = vmatmul.mubr.bf16.gmra.mxu0 %v1522
      %v2559 = vpop.f32.mrf.mxu0
      %v2560 = vadd.f32 %v494, %v2559
      %v2561 = vpop.f32.mrf.mxu0
      %v2562 = vpop.f32.mrf.mxu0
      %v2563 = vadd.f32 %v494, %v2562
      %v2564 = vpop.f32.mrf.mxu0
      %2565 = vmatprep.mubr.bf16.mxu0 0
      %2566 = vmatmul.mubr.bf16.gmra.mxu0 %v1525
      %v2567 = vpop.f32.mrf.mxu0
      %v2568 = vadd.f32 %v494, %v2567
      %v2569 = vpop.f32.mrf.mxu0
      %v2570 = vpop.f32.mrf.mxu0
      %v2571 = vadd.f32 %v494, %v2570
      %v2572 = vpop.f32.mrf.mxu0
      %2573 = vmatprep.mubr.bf16.mxu0 0
      %2574 = vmatmul.mubr.bf16.gmra.mxu0 %v1528
      %v2575 = vpop.f32.mrf.mxu0
      %v2576 = vadd.f32 %v494, %v2575
      %v2577 = vpop.f32.mrf.mxu0
      %v2578 = vpop.f32.mrf.mxu0
      %v2579 = vadd.f32 %v494, %v2578
      %v2580 = vpop.f32.mrf.mxu0
      %2581 = vmatprep.mubr.bf16.mxu0 0
      %2582 = vmatmul.mubr.bf16.gmra.mxu0 %v1531
      %v2583 = vpop.f32.mrf.mxu0
      %v2584 = vadd.f32 %v494, %v2583
      %v2585 = vpop.f32.mrf.mxu0
      %v2586 = vpop.f32.mrf.mxu0
      %v2587 = vadd.f32 %v494, %v2586
      %v2588 = vpop.f32.mrf.mxu0
      %2589 = vdwg.mxu0
      %v2590 = vmax.f32 %v1568, 0.0
      %v2591 = vmax.f32 %v1571, 0.0
      %v2592 = vmax.f32 %v1576, 0.0
      %v2593 = vmax.f32 %v1579, 0.0
      %v2594 = vmax.f32 %v1584, 0.0
      %v2595 = vmax.f32 %v1587, 0.0
      %v2596 = vmax.f32 %v1592, 0.0
      %v2597 = vmax.f32 %v1595, 0.0
      %v2598 = vmax.f32 %v1600, 0.0
      %v2599 = vmax.f32 %v1603, 0.0
      %v2600 = vmax.f32 %v1608, 0.0
      %v2601 = vmax.f32 %v1611, 0.0
      %v2602 = vmax.f32 %v1616, 0.0
      %v2603 = vmax.f32 %v1619, 0.0
      %v2604 = vmax.f32 %v1624, 0.0
      %v2605 = vmax.f32 %v1627, 0.0
      %v2606 = vmax.f32 %v1632, 0.0
      %v2607 = vmax.f32 %v1635, 0.0
      %v2608 = vmax.f32 %v1640, 0.0
      %v2609 = vmax.f32 %v1643, 0.0
      %v2610 = vmax.f32 %v1648, 0.0
      %v2611 = vmax.f32 %v1651, 0.0
      %v2612 = vmax.f32 %v1656, 0.0
      %v2613 = vmax.f32 %v1659, 0.0
      %v2614 = vmax.f32 %v1664, 0.0
      %v2615 = vmax.f32 %v1667, 0.0
      %v2616 = vmax.f32 %v1672, 0.0
      %v2617 = vmax.f32 %v1675, 0.0
      %v2618 = vmax.f32 %v1680, 0.0
      %v2619 = vmax.f32 %v1683, 0.0
      %v2620 = vmax.f32 %v1688, 0.0
      %v2621 = vmax.f32 %v1691, 0.0
      %v2622 = vmax.f32 %v1696, 0.0
      %v2623 = vmax.f32 %v1699, 0.0
      %v2624 = vmax.f32 %v1704, 0.0
      %v2625 = vmax.f32 %v1707, 0.0
      %v2626 = vmax.f32 %v1712, 0.0
      %v2627 = vmax.f32 %v1715, 0.0
      %v2628 = vmax.f32 %v1720, 0.0
      %v2629 = vmax.f32 %v1723, 0.0
      %v2630 = vmax.f32 %v1728, 0.0
      %v2631 = vmax.f32 %v1731, 0.0
      %v2632 = vmax.f32 %v1736, 0.0
      %v2633 = vmax.f32 %v1739, 0.0
      %v2634 = vmax.f32 %v1744, 0.0
      %v2635 = vmax.f32 %v1747, 0.0
      %v2636 = vmax.f32 %v1752, 0.0
      %v2637 = vmax.f32 %v1755, 0.0
      %v2638 = vmax.f32 %v1760, 0.0
      %v2639 = vmax.f32 %v1763, 0.0
      %v2640 = vmax.f32 %v1768, 0.0
      %v2641 = vmax.f32 %v1771, 0.0
      %v2642 = vmax.f32 %v1776, 0.0
      %v2643 = vmax.f32 %v1779, 0.0
      %v2644 = vmax.f32 %v1784, 0.0
      %v2645 = vmax.f32 %v1787, 0.0
      %v2646 = vmax.f32 %v1792, 0.0
      %v2647 = vmax.f32 %v1795, 0.0
      %v2648 = vmax.f32 %v1800, 0.0
      %v2649 = vmax.f32 %v1803, 0.0
      %v2650 = vmax.f32 %v1808, 0.0
      %v2651 = vmax.f32 %v1811, 0.0
      %v2652 = vmax.f32 %v1816, 0.0
      %v2653 = vmax.f32 %v1819, 0.0
      %v2654 = vmax.f32 %v1824, 0.0
      %v2655 = vmax.f32 %v1827, 0.0
      %v2656 = vmax.f32 %v1832, 0.0
      %v2657 = vmax.f32 %v1835, 0.0
      %v2658 = vmax.f32 %v1840, 0.0
      %v2659 = vmax.f32 %v1843, 0.0
      %v2660 = vmax.f32 %v1848, 0.0
      %v2661 = vmax.f32 %v1851, 0.0
      %v2662 = vmax.f32 %v1856, 0.0
      %v2663 = vmax.f32 %v1859, 0.0
      %v2664 = vmax.f32 %v1864, 0.0
      %v2665 = vmax.f32 %v1867, 0.0
      %v2666 = vmax.f32 %v1872, 0.0
      %v2667 = vmax.f32 %v1875, 0.0
      %v2668 = vmax.f32 %v1880, 0.0
      %v2669 = vmax.f32 %v1883, 0.0
      %v2670 = vmax.f32 %v1888, 0.0
      %v2671 = vmax.f32 %v1891, 0.0
      %v2672 = vmax.f32 %v1896, 0.0
      %v2673 = vmax.f32 %v1899, 0.0
      %v2674 = vmax.f32 %v1904, 0.0
      %v2675 = vmax.f32 %v1907, 0.0
      %v2676 = vmax.f32 %v1912, 0.0
      %v2677 = vmax.f32 %v1915, 0.0
      %v2678 = vmax.f32 %v1920, 0.0
      %v2679 = vmax.f32 %v1923, 0.0
      %v2680 = vmax.f32 %v1928, 0.0
      %v2681 = vmax.f32 %v1931, 0.0
      %v2682 = vmax.f32 %v1936, 0.0
      %v2683 = vmax.f32 %v1939, 0.0
      %v2684 = vmax.f32 %v1944, 0.0
      %v2685 = vmax.f32 %v1947, 0.0
      %v2686 = vmax.f32 %v1952, 0.0
      %v2687 = vmax.f32 %v1955, 0.0
      %v2688 = vmax.f32 %v1960, 0.0
      %v2689 = vmax.f32 %v1963, 0.0
      %v2690 = vmax.f32 %v1968, 0.0
      %v2691 = vmax.f32 %v1971, 0.0
      %v2692 = vmax.f32 %v1976, 0.0
      %v2693 = vmax.f32 %v1979, 0.0
      %v2694 = vmax.f32 %v1984, 0.0
      %v2695 = vmax.f32 %v1987, 0.0
      %v2696 = vmax.f32 %v1992, 0.0
      %v2697 = vmax.f32 %v1995, 0.0
      %v2698 = vmax.f32 %v2000, 0.0
      %v2699 = vmax.f32 %v2003, 0.0
      %v2700 = vmax.f32 %v2008, 0.0
      %v2701 = vmax.f32 %v2011, 0.0
      %v2702 = vmax.f32 %v2016, 0.0
      %v2703 = vmax.f32 %v2019, 0.0
      %v2704 = vmax.f32 %v2024, 0.0
      %v2705 = vmax.f32 %v2027, 0.0
      %v2706 = vmax.f32 %v2032, 0.0
      %v2707 = vmax.f32 %v2035, 0.0
      %v2708 = vmax.f32 %v2040, 0.0
      %v2709 = vmax.f32 %v2043, 0.0
      %v2710 = vmax.f32 %v2048, 0.0
      %v2711 = vmax.f32 %v2051, 0.0
      %v2712 = vmax.f32 %v2056, 0.0
      %v2713 = vmax.f32 %v2059, 0.0
      %v2714 = vmax.f32 %v2064, 0.0
      %v2715 = vmax.f32 %v2067, 0.0
      %v2716 = vmax.f32 %v2072, 0.0
      %v2717 = vmax.f32 %v2075, 0.0
      %v2718 = vmax.f32 %v2080, 0.0
      %v2719 = vmax.f32 %v2083, 0.0
      %v2720 = vmax.f32 %v2088, 0.0
      %v2721 = vmax.f32 %v2091, 0.0
      %v2722 = vmax.f32 %v2096, 0.0
      %v2723 = vmax.f32 %v2099, 0.0
      %v2724 = vmax.f32 %v2104, 0.0
      %v2725 = vmax.f32 %v2107, 0.0
      %v2726 = vmax.f32 %v2112, 0.0
      %v2727 = vmax.f32 %v2115, 0.0
      %v2728 = vmax.f32 %v2120, 0.0
      %v2729 = vmax.f32 %v2123, 0.0
      %v2730 = vmax.f32 %v2128, 0.0
      %v2731 = vmax.f32 %v2131, 0.0
      %v2732 = vmax.f32 %v2136, 0.0
      %v2733 = vmax.f32 %v2139, 0.0
      %v2734 = vmax.f32 %v2144, 0.0
      %v2735 = vmax.f32 %v2147, 0.0
      %v2736 = vmax.f32 %v2152, 0.0
      %v2737 = vmax.f32 %v2155, 0.0
      %v2738 = vmax.f32 %v2160, 0.0
      %v2739 = vmax.f32 %v2163, 0.0
      %v2740 = vmax.f32 %v2168, 0.0
      %v2741 = vmax.f32 %v2171, 0.0
      %v2742 = vmax.f32 %v2176, 0.0
      %v2743 = vmax.f32 %v2179, 0.0
      %v2744 = vmax.f32 %v2184, 0.0
      %v2745 = vmax.f32 %v2187, 0.0
      %v2746 = vmax.f32 %v2192, 0.0
      %v2747 = vmax.f32 %v2195, 0.0
      %v2748 = vmax.f32 %v2200, 0.0
      %v2749 = vmax.f32 %v2203, 0.0
      %v2750 = vmax.f32 %v2208, 0.0
      %v2751 = vmax.f32 %v2211, 0.0
      %v2752 = vmax.f32 %v2216, 0.0
      %v2753 = vmax.f32 %v2219, 0.0
      %v2754 = vmax.f32 %v2224, 0.0
      %v2755 = vmax.f32 %v2227, 0.0
      %v2756 = vmax.f32 %v2232, 0.0
      %v2757 = vmax.f32 %v2235, 0.0
      %v2758 = vmax.f32 %v2240, 0.0
      %v2759 = vmax.f32 %v2243, 0.0
      %v2760 = vmax.f32 %v2248, 0.0
      %v2761 = vmax.f32 %v2251, 0.0
      %v2762 = vmax.f32 %v2256, 0.0
      %v2763 = vmax.f32 %v2259, 0.0
      %v2764 = vmax.f32 %v2264, 0.0
      %v2765 = vmax.f32 %v2267, 0.0
      %v2766 = vmax.f32 %v2272, 0.0
      %v2767 = vmax.f32 %v2275, 0.0
      %v2768 = vmax.f32 %v2280, 0.0
      %v2769 = vmax.f32 %v2283, 0.0
      %v2770 = vmax.f32 %v2288, 0.0
      %v2771 = vmax.f32 %v2291, 0.0
      %v2772 = vmax.f32 %v2296, 0.0
      %v2773 = vmax.f32 %v2299, 0.0
      %v2774 = vmax.f32 %v2304, 0.0
      %v2775 = vmax.f32 %v2307, 0.0
      %v2776 = vmax.f32 %v2312, 0.0
      %v2777 = vmax.f32 %v2315, 0.0
      %v2778 = vmax.f32 %v2320, 0.0
      %v2779 = vmax.f32 %v2323, 0.0
      %v2780 = vmax.f32 %v2328, 0.0
      %v2781 = vmax.f32 %v2331, 0.0
      %v2782 = vmax.f32 %v2336, 0.0
      %v2783 = vmax.f32 %v2339, 0.0
      %v2784 = vmax.f32 %v2344, 0.0
      %v2785 = vmax.f32 %v2347, 0.0
      %v2786 = vmax.f32 %v2352, 0.0
      %v2787 = vmax.f32 %v2355, 0.0
      %v2788 = vmax.f32 %v2360, 0.0
      %v2789 = vmax.f32 %v2363, 0.0
      %v2790 = vmax.f32 %v2368, 0.0
      %v2791 = vmax.f32 %v2371, 0.0
      %v2792 = vmax.f32 %v2376, 0.0
      %v2793 = vmax.f32 %v2379, 0.0
      %v2794 = vmax.f32 %v2384, 0.0
      %v2795 = vmax.f32 %v2387, 0.0
      %v2796 = vmax.f32 %v2392, 0.0
      %v2797 = vmax.f32 %v2395, 0.0
      %v2798 = vmax.f32 %v2400, 0.0
      %v2799 = vmax.f32 %v2403, 0.0
      %v2800 = vmax.f32 %v2408, 0.0
      %v2801 = vmax.f32 %v2411, 0.0
      %v2802 = vmax.f32 %v2416, 0.0
      %v2803 = vmax.f32 %v2419, 0.0
      %v2804 = vmax.f32 %v2424, 0.0
      %v2805 = vmax.f32 %v2427, 0.0
      %v2806 = vmax.f32 %v2432, 0.0
      %v2807 = vmax.f32 %v2435, 0.0
      %v2808 = vmax.f32 %v2440, 0.0
      %v2809 = vmax.f32 %v2443, 0.0
      %v2810 = vmax.f32 %v2448, 0.0
      %v2811 = vmax.f32 %v2451, 0.0
      %v2812 = vmax.f32 %v2456, 0.0
      %v2813 = vmax.f32 %v2459, 0.0
      %v2814 = vmax.f32 %v2464, 0.0
      %v2815 = vmax.f32 %v2467, 0.0
      %v2816 = vmax.f32 %v2472, 0.0
      %v2817 = vmax.f32 %v2475, 0.0
      %v2818 = vmax.f32 %v2480, 0.0
      %v2819 = vmax.f32 %v2483, 0.0
      %v2820 = vmax.f32 %v2488, 0.0
      %v2821 = vmax.f32 %v2491, 0.0
      %v2822 = vmax.f32 %v2496, 0.0
      %v2823 = vmax.f32 %v2499, 0.0
      %v2824 = vmax.f32 %v2504, 0.0
      %v2825 = vmax.f32 %v2507, 0.0
      %v2826 = vmax.f32 %v2512, 0.0
      %v2827 = vmax.f32 %v2515, 0.0
      %v2828 = vmax.f32 %v2520, 0.0
      %v2829 = vmax.f32 %v2523, 0.0
      %v2830 = vmax.f32 %v2528, 0.0
      %v2831 = vmax.f32 %v2531, 0.0
      %v2832 = vmax.f32 %v2536, 0.0
      %v2833 = vmax.f32 %v2539, 0.0
      %v2834 = vmax.f32 %v2544, 0.0
      %v2835 = vmax.f32 %v2547, 0.0
      %v2836 = vmax.f32 %v2552, 0.0
      %v2837 = vmax.f32 %v2555, 0.0
      %v2838 = vmax.f32 %v2560, 0.0
      %v2839 = vmax.f32 %v2563, 0.0
      %v2840 = vmax.f32 %v2568, 0.0
      %v2841 = vmax.f32 %v2571, 0.0
      %v2842 = vmax.f32 %v2576, 0.0
      %v2843 = vmax.f32 %v2579, 0.0
      %v2844 = vmax.f32 %v2584, 0.0
      %v2845 = vmax.f32 %v2587, 0.0
      %v2846 = vsel %vm1148, %v2590, 0.0
      %v2847 = vsel %vm1148, %v2591, 0.0
      %v2848 = vadd.f32 %v2846, %v2847
      %v2849 = vsel %vm1148, %v2592, 0.0
      %v2850 = vadd.f32 %v2848, %v2849
      %v2851 = vsel %vm1148, %v2593, 0.0
      %v2852 = vadd.f32 %v2850, %v2851
      %v2853 = vsel %vm1148, %v2594, 0.0
      %v2854 = vadd.f32 %v2852, %v2853
      %v2855 = vsel %vm1148, %v2595, 0.0
      %v2856 = vadd.f32 %v2854, %v2855
      %v2857 = vsel %vm1148, %v2596, 0.0
      %v2858 = vadd.f32 %v2856, %v2857
      %v2859 = vsel %vm1148, %v2597, 0.0
      %v2860 = vadd.f32 %v2858, %v2859
      %v2861 = vrot.slane %v2860, 4
      %v2862 = vadd.f32 %v2860, %v2861
      %v2863 = vrot.slane %v2862, 2
      %v2864 = vadd.f32 %v2862, %v2863
      %v2865 = vrot.slane %v2864, 1
      %v2866 = vadd.f32 %v2864, %v2865
      %v2867 = vsel %vm1148, %v2598, 0.0
      %v2868 = vsel %vm1148, %v2599, 0.0
      %v2869 = vadd.f32 %v2867, %v2868
      %v2870 = vsel %vm1148, %v2600, 0.0
      %v2871 = vadd.f32 %v2869, %v2870
      %v2872 = vsel %vm1148, %v2601, 0.0
      %v2873 = vadd.f32 %v2871, %v2872
      %v2874 = vsel %vm1148, %v2602, 0.0
      %v2875 = vadd.f32 %v2873, %v2874
      %v2876 = vsel %vm1148, %v2603, 0.0
      %v2877 = vadd.f32 %v2875, %v2876
      %v2878 = vsel %vm1148, %v2604, 0.0
      %v2879 = vadd.f32 %v2877, %v2878
      %v2880 = vsel %vm1148, %v2605, 0.0
      %v2881 = vadd.f32 %v2879, %v2880
      %v2882 = vrot.slane %v2881, 4
      %v2883 = vadd.f32 %v2881, %v2882
      %v2884 = vrot.slane %v2883, 2
      %v2885 = vadd.f32 %v2883, %v2884
      %v2886 = vrot.slane %v2885, 1
      %v2887 = vadd.f32 %v2885, %v2886
      %v2888 = vsel %vm1148, %v2606, 0.0
      %v2889 = vsel %vm1148, %v2607, 0.0
      %v2890 = vadd.f32 %v2888, %v2889
      %v2891 = vsel %vm1148, %v2608, 0.0
      %v2892 = vadd.f32 %v2890, %v2891
      %v2893 = vsel %vm1148, %v2609, 0.0
      %v2894 = vadd.f32 %v2892, %v2893
      %v2895 = vsel %vm1148, %v2610, 0.0
      %v2896 = vadd.f32 %v2894, %v2895
      %v2897 = vsel %vm1148, %v2611, 0.0
      %v2898 = vadd.f32 %v2896, %v2897
      %v2899 = vsel %vm1148, %v2612, 0.0
      %v2900 = vadd.f32 %v2898, %v2899
      %v2901 = vsel %vm1148, %v2613, 0.0
      %v2902 = vadd.f32 %v2900, %v2901
      %v2903 = vrot.slane %v2902, 4
      %v2904 = vadd.f32 %v2902, %v2903
      %v2905 = vrot.slane %v2904, 2
      %v2906 = vadd.f32 %v2904, %v2905
      %v2907 = vrot.slane %v2906, 1
      %v2908 = vadd.f32 %v2906, %v2907
      %v2909 = vsel %vm1148, %v2614, 0.0
      %v2910 = vsel %vm1148, %v2615, 0.0
      %v2911 = vadd.f32 %v2909, %v2910
      %v2912 = vsel %vm1148, %v2616, 0.0
      %v2913 = vadd.f32 %v2911, %v2912
      %v2914 = vsel %vm1148, %v2617, 0.0
      %v2915 = vadd.f32 %v2913, %v2914
      %v2916 = vsel %vm1148, %v2618, 0.0
      %v2917 = vadd.f32 %v2915, %v2916
      %v2918 = vsel %vm1148, %v2619, 0.0
      %v2919 = vadd.f32 %v2917, %v2918
      %v2920 = vsel %vm1148, %v2620, 0.0
      %v2921 = vadd.f32 %v2919, %v2920
      %v2922 = vsel %vm1148, %v2621, 0.0
      %v2923 = vadd.f32 %v2921, %v2922
      %v2924 = vrot.slane %v2923, 4
      %v2925 = vadd.f32 %v2923, %v2924
      %v2926 = vrot.slane %v2925, 2
      %v2927 = vadd.f32 %v2925, %v2926
      %v2928 = vrot.slane %v2927, 1
      %v2929 = vadd.f32 %v2927, %v2928
      %v2930 = vsel %vm1148, %v2622, 0.0
      %v2931 = vsel %vm1148, %v2623, 0.0
      %v2932 = vadd.f32 %v2930, %v2931
      %v2933 = vsel %vm1148, %v2624, 0.0
      %v2934 = vadd.f32 %v2932, %v2933
      %v2935 = vsel %vm1148, %v2625, 0.0
      %v2936 = vadd.f32 %v2934, %v2935
      %v2937 = vsel %vm1148, %v2626, 0.0
      %v2938 = vadd.f32 %v2936, %v2937
      %v2939 = vsel %vm1148, %v2627, 0.0
      %v2940 = vadd.f32 %v2938, %v2939
      %v2941 = vsel %vm1148, %v2628, 0.0
      %v2942 = vadd.f32 %v2940, %v2941
      %v2943 = vsel %vm1148, %v2629, 0.0
      %v2944 = vadd.f32 %v2942, %v2943
      %v2945 = vrot.slane %v2944, 4
      %v2946 = vadd.f32 %v2944, %v2945
      %v2947 = vrot.slane %v2946, 2
      %v2948 = vadd.f32 %v2946, %v2947
      %v2949 = vrot.slane %v2948, 1
      %v2950 = vadd.f32 %v2948, %v2949
      %v2951 = vsel %vm1148, %v2630, 0.0
      %v2952 = vsel %vm1148, %v2631, 0.0
      %v2953 = vadd.f32 %v2951, %v2952
      %v2954 = vsel %vm1148, %v2632, 0.0
      %v2955 = vadd.f32 %v2953, %v2954
      %v2956 = vsel %vm1148, %v2633, 0.0
      %v2957 = vadd.f32 %v2955, %v2956
      %v2958 = vsel %vm1148, %v2634, 0.0
      %v2959 = vadd.f32 %v2957, %v2958
      %v2960 = vsel %vm1148, %v2635, 0.0
      %v2961 = vadd.f32 %v2959, %v2960
      %v2962 = vsel %vm1148, %v2636, 0.0
      %v2963 = vadd.f32 %v2961, %v2962
      %v2964 = vsel %vm1148, %v2637, 0.0
      %v2965 = vadd.f32 %v2963, %v2964
      %v2966 = vrot.slane %v2965, 4
      %v2967 = vadd.f32 %v2965, %v2966
      %v2968 = vrot.slane %v2967, 2
      %v2969 = vadd.f32 %v2967, %v2968
      %v2970 = vrot.slane %v2969, 1
      %v2971 = vadd.f32 %v2969, %v2970
      %v2972 = vsel %vm1148, %v2638, 0.0
      %v2973 = vsel %vm1148, %v2639, 0.0
      %v2974 = vadd.f32 %v2972, %v2973
      %v2975 = vsel %vm1148, %v2640, 0.0
      %v2976 = vadd.f32 %v2974, %v2975
      %v2977 = vsel %vm1148, %v2641, 0.0
      %v2978 = vadd.f32 %v2976, %v2977
      %v2979 = vsel %vm1148, %v2642, 0.0
      %v2980 = vadd.f32 %v2978, %v2979
      %v2981 = vsel %vm1148, %v2643, 0.0
      %v2982 = vadd.f32 %v2980, %v2981
      %v2983 = vsel %vm1148, %v2644, 0.0
      %v2984 = vadd.f32 %v2982, %v2983
      %v2985 = vsel %vm1148, %v2645, 0.0
      %v2986 = vadd.f32 %v2984, %v2985
      %v2987 = vrot.slane %v2986, 4
      %v2988 = vadd.f32 %v2986, %v2987
      %v2989 = vrot.slane %v2988, 2
      %v2990 = vadd.f32 %v2988, %v2989
      %v2991 = vrot.slane %v2990, 1
      %v2992 = vadd.f32 %v2990, %v2991
      %v2993 = vsel %vm1148, %v2646, 0.0
      %v2994 = vsel %vm1148, %v2647, 0.0
      %v2995 = vadd.f32 %v2993, %v2994
      %v2996 = vsel %vm1148, %v2648, 0.0
      %v2997 = vadd.f32 %v2995, %v2996
      %v2998 = vsel %vm1148, %v2649, 0.0
      %v2999 = vadd.f32 %v2997, %v2998
      %v3000 = vsel %vm1148, %v2650, 0.0
      %v3001 = vadd.f32 %v2999, %v3000
      %v3002 = vsel %vm1148, %v2651, 0.0
      %v3003 = vadd.f32 %v3001, %v3002
      %v3004 = vsel %vm1148, %v2652, 0.0
      %v3005 = vadd.f32 %v3003, %v3004
      %v3006 = vsel %vm1148, %v2653, 0.0
      %v3007 = vadd.f32 %v3005, %v3006
      %v3008 = vrot.slane %v3007, 4
      %v3009 = vadd.f32 %v3007, %v3008
      %v3010 = vrot.slane %v3009, 2
      %v3011 = vadd.f32 %v3009, %v3010
      %v3012 = vrot.slane %v3011, 1
      %v3013 = vadd.f32 %v3011, %v3012
      %v3014 = vsel %vm1148, %v2654, 0.0
      %v3015 = vsel %vm1148, %v2655, 0.0
      %v3016 = vadd.f32 %v3014, %v3015
      %v3017 = vsel %vm1148, %v2656, 0.0
      %v3018 = vadd.f32 %v3016, %v3017
      %v3019 = vsel %vm1148, %v2657, 0.0
      %v3020 = vadd.f32 %v3018, %v3019
      %v3021 = vsel %vm1148, %v2658, 0.0
      %v3022 = vadd.f32 %v3020, %v3021
      %v3023 = vsel %vm1148, %v2659, 0.0
      %v3024 = vadd.f32 %v3022, %v3023
      %v3025 = vsel %vm1148, %v2660, 0.0
      %v3026 = vadd.f32 %v3024, %v3025
      %v3027 = vsel %vm1148, %v2661, 0.0
      %v3028 = vadd.f32 %v3026, %v3027
      %v3029 = vrot.slane %v3028, 4
      %v3030 = vadd.f32 %v3028, %v3029
      %v3031 = vrot.slane %v3030, 2
      %v3032 = vadd.f32 %v3030, %v3031
      %v3033 = vrot.slane %v3032, 1
      %v3034 = vadd.f32 %v3032, %v3033
      %v3035 = vsel %vm1148, %v2662, 0.0
      %v3036 = vsel %vm1148, %v2663, 0.0
      %v3037 = vadd.f32 %v3035, %v3036
      %v3038 = vsel %vm1148, %v2664, 0.0
      %v3039 = vadd.f32 %v3037, %v3038
      %v3040 = vsel %vm1148, %v2665, 0.0
      %v3041 = vadd.f32 %v3039, %v3040
      %v3042 = vsel %vm1148, %v2666, 0.0
      %v3043 = vadd.f32 %v3041, %v3042
      %v3044 = vsel %vm1148, %v2667, 0.0
      %v3045 = vadd.f32 %v3043, %v3044
      %v3046 = vsel %vm1148, %v2668, 0.0
      %v3047 = vadd.f32 %v3045, %v3046
      %v3048 = vsel %vm1148, %v2669, 0.0
      %v3049 = vadd.f32 %v3047, %v3048
      %v3050 = vrot.slane %v3049, 4
      %v3051 = vadd.f32 %v3049, %v3050
      %v3052 = vrot.slane %v3051, 2
      %v3053 = vadd.f32 %v3051, %v3052
      %v3054 = vrot.slane %v3053, 1
      %v3055 = vadd.f32 %v3053, %v3054
      %v3056 = vsel %vm1148, %v2670, 0.0
      %v3057 = vsel %vm1148, %v2671, 0.0
      %v3058 = vadd.f32 %v3056, %v3057
      %v3059 = vsel %vm1148, %v2672, 0.0
      %v3060 = vadd.f32 %v3058, %v3059
      %v3061 = vsel %vm1148, %v2673, 0.0
      %v3062 = vadd.f32 %v3060, %v3061
      %v3063 = vsel %vm1148, %v2674, 0.0
      %v3064 = vadd.f32 %v3062, %v3063
      %v3065 = vsel %vm1148, %v2675, 0.0
      %v3066 = vadd.f32 %v3064, %v3065
      %v3067 = vsel %vm1148, %v2676, 0.0
      %v3068 = vadd.f32 %v3066, %v3067
      %v3069 = vsel %vm1148, %v2677, 0.0
      %v3070 = vadd.f32 %v3068, %v3069
      %v3071 = vrot.slane %v3070, 4
      %v3072 = vadd.f32 %v3070, %v3071
      %v3073 = vrot.slane %v3072, 2
      %v3074 = vadd.f32 %v3072, %v3073
      %v3075 = vrot.slane %v3074, 1
      %v3076 = vadd.f32 %v3074, %v3075
      %v3077 = vsel %vm1148, %v2678, 0.0
      %v3078 = vsel %vm1148, %v2679, 0.0
      %v3079 = vadd.f32 %v3077, %v3078
      %v3080 = vsel %vm1148, %v2680, 0.0
      %v3081 = vadd.f32 %v3079, %v3080
      %v3082 = vsel %vm1148, %v2681, 0.0
      %v3083 = vadd.f32 %v3081, %v3082
      %v3084 = vsel %vm1148, %v2682, 0.0
      %v3085 = vadd.f32 %v3083, %v3084
      %v3086 = vsel %vm1148, %v2683, 0.0
      %v3087 = vadd.f32 %v3085, %v3086
      %v3088 = vsel %vm1148, %v2684, 0.0
      %v3089 = vadd.f32 %v3087, %v3088
      %v3090 = vsel %vm1148, %v2685, 0.0
      %v3091 = vadd.f32 %v3089, %v3090
      %v3092 = vrot.slane %v3091, 4
      %v3093 = vadd.f32 %v3091, %v3092
      %v3094 = vrot.slane %v3093, 2
      %v3095 = vadd.f32 %v3093, %v3094
      %v3096 = vrot.slane %v3095, 1
      %v3097 = vadd.f32 %v3095, %v3096
      %v3098 = vsel %vm1148, %v2686, 0.0
      %v3099 = vsel %vm1148, %v2687, 0.0
      %v3100 = vadd.f32 %v3098, %v3099
      %v3101 = vsel %vm1148, %v2688, 0.0
      %v3102 = vadd.f32 %v3100, %v3101
      %v3103 = vsel %vm1148, %v2689, 0.0
      %v3104 = vadd.f32 %v3102, %v3103
      %v3105 = vsel %vm1148, %v2690, 0.0
      %v3106 = vadd.f32 %v3104, %v3105
      %v3107 = vsel %vm1148, %v2691, 0.0
      %v3108 = vadd.f32 %v3106, %v3107
      %v3109 = vsel %vm1148, %v2692, 0.0
      %v3110 = vadd.f32 %v3108, %v3109
      %v3111 = vsel %vm1148, %v2693, 0.0
      %v3112 = vadd.f32 %v3110, %v3111
      %v3113 = vrot.slane %v3112, 4
      %v3114 = vadd.f32 %v3112, %v3113
      %v3115 = vrot.slane %v3114, 2
      %v3116 = vadd.f32 %v3114, %v3115
      %v3117 = vrot.slane %v3116, 1
      %v3118 = vadd.f32 %v3116, %v3117
      %v3119 = vsel %vm1148, %v2694, 0.0
      %v3120 = vsel %vm1148, %v2695, 0.0
      %v3121 = vadd.f32 %v3119, %v3120
      %v3122 = vsel %vm1148, %v2696, 0.0
      %v3123 = vadd.f32 %v3121, %v3122
      %v3124 = vsel %vm1148, %v2697, 0.0
      %v3125 = vadd.f32 %v3123, %v3124
      %v3126 = vsel %vm1148, %v2698, 0.0
      %v3127 = vadd.f32 %v3125, %v3126
      %v3128 = vsel %vm1148, %v2699, 0.0
      %v3129 = vadd.f32 %v3127, %v3128
      %v3130 = vsel %vm1148, %v2700, 0.0
      %v3131 = vadd.f32 %v3129, %v3130
      %v3132 = vsel %vm1148, %v2701, 0.0
      %v3133 = vadd.f32 %v3131, %v3132
      %v3134 = vrot.slane %v3133, 4
      %v3135 = vadd.f32 %v3133, %v3134
      %v3136 = vrot.slane %v3135, 2
      %v3137 = vadd.f32 %v3135, %v3136
      %v3138 = vrot.slane %v3137, 1
      %v3139 = vadd.f32 %v3137, %v3138
      %v3140 = vsel %vm1148, %v2702, 0.0
      %v3141 = vsel %vm1148, %v2703, 0.0
      %v3142 = vadd.f32 %v3140, %v3141
      %v3143 = vsel %vm1148, %v2704, 0.0
      %v3144 = vadd.f32 %v3142, %v3143
      %v3145 = vsel %vm1148, %v2705, 0.0
      %v3146 = vadd.f32 %v3144, %v3145
      %v3147 = vsel %vm1148, %v2706, 0.0
      %v3148 = vadd.f32 %v3146, %v3147
      %v3149 = vsel %vm1148, %v2707, 0.0
      %v3150 = vadd.f32 %v3148, %v3149
      %v3151 = vsel %vm1148, %v2708, 0.0
      %v3152 = vadd.f32 %v3150, %v3151
      %v3153 = vsel %vm1148, %v2709, 0.0
      %v3154 = vadd.f32 %v3152, %v3153
      %v3155 = vrot.slane %v3154, 4
      %v3156 = vadd.f32 %v3154, %v3155
      %v3157 = vrot.slane %v3156, 2
      %v3158 = vadd.f32 %v3156, %v3157
      %v3159 = vrot.slane %v3158, 1
      %v3160 = vadd.f32 %v3158, %v3159
      %v3161 = vsel %vm1148, %v2710, 0.0
      %v3162 = vsel %vm1148, %v2711, 0.0
      %v3163 = vadd.f32 %v3161, %v3162
      %v3164 = vsel %vm1148, %v2712, 0.0
      %v3165 = vadd.f32 %v3163, %v3164
      %v3166 = vsel %vm1148, %v2713, 0.0
      %v3167 = vadd.f32 %v3165, %v3166
      %v3168 = vsel %vm1148, %v2714, 0.0
      %v3169 = vadd.f32 %v3167, %v3168
      %v3170 = vsel %vm1148, %v2715, 0.0
      %v3171 = vadd.f32 %v3169, %v3170
      %v3172 = vsel %vm1148, %v2716, 0.0
      %v3173 = vadd.f32 %v3171, %v3172
      %v3174 = vsel %vm1148, %v2717, 0.0
      %v3175 = vadd.f32 %v3173, %v3174
      %v3176 = vrot.slane %v3175, 4
      %v3177 = vadd.f32 %v3175, %v3176
      %v3178 = vrot.slane %v3177, 2
      %v3179 = vadd.f32 %v3177, %v3178
      %v3180 = vrot.slane %v3179, 1
      %v3181 = vadd.f32 %v3179, %v3180
      %v3182 = vsel %vm1148, %v2718, 0.0
      %v3183 = vsel %vm1148, %v2719, 0.0
      %v3184 = vadd.f32 %v3182, %v3183
      %v3185 = vsel %vm1148, %v2720, 0.0
      %v3186 = vadd.f32 %v3184, %v3185
      %v3187 = vsel %vm1148, %v2721, 0.0
      %v3188 = vadd.f32 %v3186, %v3187
      %v3189 = vsel %vm1148, %v2722, 0.0
      %v3190 = vadd.f32 %v3188, %v3189
      %v3191 = vsel %vm1148, %v2723, 0.0
      %v3192 = vadd.f32 %v3190, %v3191
      %v3193 = vsel %vm1148, %v2724, 0.0
      %v3194 = vadd.f32 %v3192, %v3193
      %v3195 = vsel %vm1148, %v2725, 0.0
      %v3196 = vadd.f32 %v3194, %v3195
      %v3197 = vrot.slane %v3196, 4
      %v3198 = vadd.f32 %v3196, %v3197
      %v3199 = vrot.slane %v3198, 2
      %v3200 = vadd.f32 %v3198, %v3199
      %v3201 = vrot.slane %v3200, 1
      %v3202 = vadd.f32 %v3200, %v3201
      %v3203 = vsel %vm1148, %v2726, 0.0
      %v3204 = vsel %vm1148, %v2727, 0.0
      %v3205 = vadd.f32 %v3203, %v3204
      %v3206 = vsel %vm1148, %v2728, 0.0
      %v3207 = vadd.f32 %v3205, %v3206
      %v3208 = vsel %vm1148, %v2729, 0.0
      %v3209 = vadd.f32 %v3207, %v3208
      %v3210 = vsel %vm1148, %v2730, 0.0
      %v3211 = vadd.f32 %v3209, %v3210
      %v3212 = vsel %vm1148, %v2731, 0.0
      %v3213 = vadd.f32 %v3211, %v3212
      %v3214 = vsel %vm1148, %v2732, 0.0
      %v3215 = vadd.f32 %v3213, %v3214
      %v3216 = vsel %vm1148, %v2733, 0.0
      %v3217 = vadd.f32 %v3215, %v3216
      %v3218 = vrot.slane %v3217, 4
      %v3219 = vadd.f32 %v3217, %v3218
      %v3220 = vrot.slane %v3219, 2
      %v3221 = vadd.f32 %v3219, %v3220
      %v3222 = vrot.slane %v3221, 1
      %v3223 = vadd.f32 %v3221, %v3222
      %v3224 = vsel %vm1148, %v2734, 0.0
      %v3225 = vsel %vm1148, %v2735, 0.0
      %v3226 = vadd.f32 %v3224, %v3225
      %v3227 = vsel %vm1148, %v2736, 0.0
      %v3228 = vadd.f32 %v3226, %v3227
      %v3229 = vsel %vm1148, %v2737, 0.0
      %v3230 = vadd.f32 %v3228, %v3229
      %v3231 = vsel %vm1148, %v2738, 0.0
      %v3232 = vadd.f32 %v3230, %v3231
      %v3233 = vsel %vm1148, %v2739, 0.0
      %v3234 = vadd.f32 %v3232, %v3233
      %v3235 = vsel %vm1148, %v2740, 0.0
      %v3236 = vadd.f32 %v3234, %v3235
      %v3237 = vsel %vm1148, %v2741, 0.0
      %v3238 = vadd.f32 %v3236, %v3237
      %v3239 = vrot.slane %v3238, 4
      %v3240 = vadd.f32 %v3238, %v3239
      %v3241 = vrot.slane %v3240, 2
      %v3242 = vadd.f32 %v3240, %v3241
      %v3243 = vrot.slane %v3242, 1
      %v3244 = vadd.f32 %v3242, %v3243
      %v3245 = vsel %vm1148, %v2742, 0.0
      %v3246 = vsel %vm1148, %v2743, 0.0
      %v3247 = vadd.f32 %v3245, %v3246
      %v3248 = vsel %vm1148, %v2744, 0.0
      %v3249 = vadd.f32 %v3247, %v3248
      %v3250 = vsel %vm1148, %v2745, 0.0
      %v3251 = vadd.f32 %v3249, %v3250
      %v3252 = vsel %vm1148, %v2746, 0.0
      %v3253 = vadd.f32 %v3251, %v3252
      %v3254 = vsel %vm1148, %v2747, 0.0
      %v3255 = vadd.f32 %v3253, %v3254
      %v3256 = vsel %vm1148, %v2748, 0.0
      %v3257 = vadd.f32 %v3255, %v3256
      %v3258 = vsel %vm1148, %v2749, 0.0
      %v3259 = vadd.f32 %v3257, %v3258
      %v3260 = vrot.slane %v3259, 4
      %v3261 = vadd.f32 %v3259, %v3260
      %v3262 = vrot.slane %v3261, 2
      %v3263 = vadd.f32 %v3261, %v3262
      %v3264 = vrot.slane %v3263, 1
      %v3265 = vadd.f32 %v3263, %v3264
      %v3266 = vsel %vm1148, %v2750, 0.0
      %v3267 = vsel %vm1148, %v2751, 0.0
      %v3268 = vadd.f32 %v3266, %v3267
      %v3269 = vsel %vm1148, %v2752, 0.0
      %v3270 = vadd.f32 %v3268, %v3269
      %v3271 = vsel %vm1148, %v2753, 0.0
      %v3272 = vadd.f32 %v3270, %v3271
      %v3273 = vsel %vm1148, %v2754, 0.0
      %v3274 = vadd.f32 %v3272, %v3273
      %v3275 = vsel %vm1148, %v2755, 0.0
      %v3276 = vadd.f32 %v3274, %v3275
      %v3277 = vsel %vm1148, %v2756, 0.0
      %v3278 = vadd.f32 %v3276, %v3277
      %v3279 = vsel %vm1148, %v2757, 0.0
      %v3280 = vadd.f32 %v3278, %v3279
      %v3281 = vrot.slane %v3280, 4
      %v3282 = vadd.f32 %v3280, %v3281
      %v3283 = vrot.slane %v3282, 2
      %v3284 = vadd.f32 %v3282, %v3283
      %v3285 = vrot.slane %v3284, 1
      %v3286 = vadd.f32 %v3284, %v3285
      %v3287 = vsel %vm1148, %v2758, 0.0
      %v3288 = vsel %vm1148, %v2759, 0.0
      %v3289 = vadd.f32 %v3287, %v3288
      %v3290 = vsel %vm1148, %v2760, 0.0
      %v3291 = vadd.f32 %v3289, %v3290
      %v3292 = vsel %vm1148, %v2761, 0.0
      %v3293 = vadd.f32 %v3291, %v3292
      %v3294 = vsel %vm1148, %v2762, 0.0
      %v3295 = vadd.f32 %v3293, %v3294
      %v3296 = vsel %vm1148, %v2763, 0.0
      %v3297 = vadd.f32 %v3295, %v3296
      %v3298 = vsel %vm1148, %v2764, 0.0
      %v3299 = vadd.f32 %v3297, %v3298
      %v3300 = vsel %vm1148, %v2765, 0.0
      %v3301 = vadd.f32 %v3299, %v3300
      %v3302 = vrot.slane %v3301, 4
      %v3303 = vadd.f32 %v3301, %v3302
      %v3304 = vrot.slane %v3303, 2
      %v3305 = vadd.f32 %v3303, %v3304
      %v3306 = vrot.slane %v3305, 1
      %v3307 = vadd.f32 %v3305, %v3306
      %v3308 = vsel %vm1148, %v2766, 0.0
      %v3309 = vsel %vm1148, %v2767, 0.0
      %v3310 = vadd.f32 %v3308, %v3309
      %v3311 = vsel %vm1148, %v2768, 0.0
      %v3312 = vadd.f32 %v3310, %v3311
      %v3313 = vsel %vm1148, %v2769, 0.0
      %v3314 = vadd.f32 %v3312, %v3313
      %v3315 = vsel %vm1148, %v2770, 0.0
      %v3316 = vadd.f32 %v3314, %v3315
      %v3317 = vsel %vm1148, %v2771, 0.0
      %v3318 = vadd.f32 %v3316, %v3317
      %v3319 = vsel %vm1148, %v2772, 0.0
      %v3320 = vadd.f32 %v3318, %v3319
      %v3321 = vsel %vm1148, %v2773, 0.0
      %v3322 = vadd.f32 %v3320, %v3321
      %v3323 = vrot.slane %v3322, 4
      %v3324 = vadd.f32 %v3322, %v3323
      %v3325 = vrot.slane %v3324, 2
      %v3326 = vadd.f32 %v3324, %v3325
      %v3327 = vrot.slane %v3326, 1
      %v3328 = vadd.f32 %v3326, %v3327
      %v3329 = vsel %vm1148, %v2774, 0.0
      %v3330 = vsel %vm1148, %v2775, 0.0
      %v3331 = vadd.f32 %v3329, %v3330
      %v3332 = vsel %vm1148, %v2776, 0.0
      %v3333 = vadd.f32 %v3331, %v3332
      %v3334 = vsel %vm1148, %v2777, 0.0
      %v3335 = vadd.f32 %v3333, %v3334
      %v3336 = vsel %vm1148, %v2778, 0.0
      %v3337 = vadd.f32 %v3335, %v3336
      %v3338 = vsel %vm1148, %v2779, 0.0
      %v3339 = vadd.f32 %v3337, %v3338
      %v3340 = vsel %vm1148, %v2780, 0.0
      %v3341 = vadd.f32 %v3339, %v3340
      %v3342 = vsel %vm1148, %v2781, 0.0
      %v3343 = vadd.f32 %v3341, %v3342
      %v3344 = vrot.slane %v3343, 4
      %v3345 = vadd.f32 %v3343, %v3344
      %v3346 = vrot.slane %v3345, 2
      %v3347 = vadd.f32 %v3345, %v3346
      %v3348 = vrot.slane %v3347, 1
      %v3349 = vadd.f32 %v3347, %v3348
      %v3350 = vsel %vm1148, %v2782, 0.0
      %v3351 = vsel %vm1148, %v2783, 0.0
      %v3352 = vadd.f32 %v3350, %v3351
      %v3353 = vsel %vm1148, %v2784, 0.0
      %v3354 = vadd.f32 %v3352, %v3353
      %v3355 = vsel %vm1148, %v2785, 0.0
      %v3356 = vadd.f32 %v3354, %v3355
      %v3357 = vsel %vm1148, %v2786, 0.0
      %v3358 = vadd.f32 %v3356, %v3357
      %v3359 = vsel %vm1148, %v2787, 0.0
      %v3360 = vadd.f32 %v3358, %v3359
      %v3361 = vsel %vm1148, %v2788, 0.0
      %v3362 = vadd.f32 %v3360, %v3361
      %v3363 = vsel %vm1148, %v2789, 0.0
      %v3364 = vadd.f32 %v3362, %v3363
      %v3365 = vrot.slane %v3364, 4
      %v3366 = vadd.f32 %v3364, %v3365
      %v3367 = vrot.slane %v3366, 2
      %v3368 = vadd.f32 %v3366, %v3367
      %v3369 = vrot.slane %v3368, 1
      %v3370 = vadd.f32 %v3368, %v3369
      %v3371 = vsel %vm1148, %v2790, 0.0
      %v3372 = vsel %vm1148, %v2791, 0.0
      %v3373 = vadd.f32 %v3371, %v3372
      %v3374 = vsel %vm1148, %v2792, 0.0
      %v3375 = vadd.f32 %v3373, %v3374
      %v3376 = vsel %vm1148, %v2793, 0.0
      %v3377 = vadd.f32 %v3375, %v3376
      %v3378 = vsel %vm1148, %v2794, 0.0
      %v3379 = vadd.f32 %v3377, %v3378
      %v3380 = vsel %vm1148, %v2795, 0.0
      %v3381 = vadd.f32 %v3379, %v3380
      %v3382 = vsel %vm1148, %v2796, 0.0
      %v3383 = vadd.f32 %v3381, %v3382
      %v3384 = vsel %vm1148, %v2797, 0.0
      %v3385 = vadd.f32 %v3383, %v3384
      %v3386 = vrot.slane %v3385, 4
      %v3387 = vadd.f32 %v3385, %v3386
      %v3388 = vrot.slane %v3387, 2
      %v3389 = vadd.f32 %v3387, %v3388
      %v3390 = vrot.slane %v3389, 1
      %v3391 = vadd.f32 %v3389, %v3390
      %v3392 = vsel %vm1148, %v2798, 0.0
      %v3393 = vsel %vm1148, %v2799, 0.0
      %v3394 = vadd.f32 %v3392, %v3393
      %v3395 = vsel %vm1148, %v2800, 0.0
      %v3396 = vadd.f32 %v3394, %v3395
      %v3397 = vsel %vm1148, %v2801, 0.0
      %v3398 = vadd.f32 %v3396, %v3397
      %v3399 = vsel %vm1148, %v2802, 0.0
      %v3400 = vadd.f32 %v3398, %v3399
      %v3401 = vsel %vm1148, %v2803, 0.0
      %v3402 = vadd.f32 %v3400, %v3401
      %v3403 = vsel %vm1148, %v2804, 0.0
      %v3404 = vadd.f32 %v3402, %v3403
      %v3405 = vsel %vm1148, %v2805, 0.0
      %v3406 = vadd.f32 %v3404, %v3405
      %v3407 = vrot.slane %v3406, 4
      %v3408 = vadd.f32 %v3406, %v3407
      %v3409 = vrot.slane %v3408, 2
      %v3410 = vadd.f32 %v3408, %v3409
      %v3411 = vrot.slane %v3410, 1
      %v3412 = vadd.f32 %v3410, %v3411
      %v3413 = vsel %vm1148, %v2806, 0.0
      %v3414 = vsel %vm1148, %v2807, 0.0
      %v3415 = vadd.f32 %v3413, %v3414
      %v3416 = vsel %vm1148, %v2808, 0.0
      %v3417 = vadd.f32 %v3415, %v3416
      %v3418 = vsel %vm1148, %v2809, 0.0
      %v3419 = vadd.f32 %v3417, %v3418
      %v3420 = vsel %vm1148, %v2810, 0.0
      %v3421 = vadd.f32 %v3419, %v3420
      %v3422 = vsel %vm1148, %v2811, 0.0
      %v3423 = vadd.f32 %v3421, %v3422
      %v3424 = vsel %vm1148, %v2812, 0.0
      %v3425 = vadd.f32 %v3423, %v3424
      %v3426 = vsel %vm1148, %v2813, 0.0
      %v3427 = vadd.f32 %v3425, %v3426
      %v3428 = vrot.slane %v3427, 4
      %v3429 = vadd.f32 %v3427, %v3428
      %v3430 = vrot.slane %v3429, 2
      %v3431 = vadd.f32 %v3429, %v3430
      %v3432 = vrot.slane %v3431, 1
      %v3433 = vadd.f32 %v3431, %v3432
      %v3434 = vsel %vm1148, %v2814, 0.0
      %v3435 = vsel %vm1148, %v2815, 0.0
      %v3436 = vadd.f32 %v3434, %v3435
      %v3437 = vsel %vm1148, %v2816, 0.0
      %v3438 = vadd.f32 %v3436, %v3437
      %v3439 = vsel %vm1148, %v2817, 0.0
      %v3440 = vadd.f32 %v3438, %v3439
      %v3441 = vsel %vm1148, %v2818, 0.0
      %v3442 = vadd.f32 %v3440, %v3441
      %v3443 = vsel %vm1148, %v2819, 0.0
      %v3444 = vadd.f32 %v3442, %v3443
      %v3445 = vsel %vm1148, %v2820, 0.0
      %v3446 = vadd.f32 %v3444, %v3445
      %v3447 = vsel %vm1148, %v2821, 0.0
      %v3448 = vadd.f32 %v3446, %v3447
      %v3449 = vrot.slane %v3448, 4
      %v3450 = vadd.f32 %v3448, %v3449
      %v3451 = vrot.slane %v3450, 2
      %v3452 = vadd.f32 %v3450, %v3451
      %v3453 = vrot.slane %v3452, 1
      %v3454 = vadd.f32 %v3452, %v3453
      %v3455 = vsel %vm1148, %v2822, 0.0
      %v3456 = vsel %vm1148, %v2823, 0.0
      %v3457 = vadd.f32 %v3455, %v3456
      %v3458 = vsel %vm1148, %v2824, 0.0
      %v3459 = vadd.f32 %v3457, %v3458
      %v3460 = vsel %vm1148, %v2825, 0.0
      %v3461 = vadd.f32 %v3459, %v3460
      %v3462 = vsel %vm1148, %v2826, 0.0
      %v3463 = vadd.f32 %v3461, %v3462
      %v3464 = vsel %vm1148, %v2827, 0.0
      %v3465 = vadd.f32 %v3463, %v3464
      %v3466 = vsel %vm1148, %v2828, 0.0
      %v3467 = vadd.f32 %v3465, %v3466
      %v3468 = vsel %vm1148, %v2829, 0.0
      %v3469 = vadd.f32 %v3467, %v3468
      %v3470 = vrot.slane %v3469, 4
      %v3471 = vadd.f32 %v3469, %v3470
      %v3472 = vrot.slane %v3471, 2
      %v3473 = vadd.f32 %v3471, %v3472
      %v3474 = vrot.slane %v3473, 1
      %v3475 = vadd.f32 %v3473, %v3474
      %v3476 = vsel %vm1148, %v2830, 0.0
      %v3477 = vsel %vm1148, %v2831, 0.0
      %v3478 = vadd.f32 %v3476, %v3477
      %v3479 = vsel %vm1148, %v2832, 0.0
      %v3480 = vadd.f32 %v3478, %v3479
      %v3481 = vsel %vm1148, %v2833, 0.0
      %v3482 = vadd.f32 %v3480, %v3481
      %v3483 = vsel %vm1148, %v2834, 0.0
      %v3484 = vadd.f32 %v3482, %v3483
      %v3485 = vsel %vm1148, %v2835, 0.0
      %v3486 = vadd.f32 %v3484, %v3485
      %v3487 = vsel %vm1148, %v2836, 0.0
      %v3488 = vadd.f32 %v3486, %v3487
      %v3489 = vsel %vm1148, %v2837, 0.0
      %v3490 = vadd.f32 %v3488, %v3489
      %v3491 = vrot.slane %v3490, 4
      %v3492 = vadd.f32 %v3490, %v3491
      %v3493 = vrot.slane %v3492, 2
      %v3494 = vadd.f32 %v3492, %v3493
      %v3495 = vrot.slane %v3494, 1
      %v3496 = vadd.f32 %v3494, %v3495
      %v3497 = vsel %vm1148, %v2838, 0.0
      %v3498 = vsel %vm1148, %v2839, 0.0
      %v3499 = vadd.f32 %v3497, %v3498
      %v3500 = vsel %vm1148, %v2840, 0.0
      %v3501 = vadd.f32 %v3499, %v3500
      %v3502 = vsel %vm1148, %v2841, 0.0
      %v3503 = vadd.f32 %v3501, %v3502
      %v3504 = vsel %vm1148, %v2842, 0.0
      %v3505 = vadd.f32 %v3503, %v3504
      %v3506 = vsel %vm1148, %v2843, 0.0
      %v3507 = vadd.f32 %v3505, %v3506
      %v3508 = vsel %vm1148, %v2844, 0.0
      %v3509 = vadd.f32 %v3507, %v3508
      %v3510 = vsel %vm1148, %v2845, 0.0
      %v3511 = vadd.f32 %v3509, %v3510
      %v3512 = vrot.slane %v3511, 4
      %v3513 = vadd.f32 %v3511, %v3512
      %v3514 = vrot.slane %v3513, 2
      %v3515 = vadd.f32 %v3513, %v3514
      %v3516 = vrot.slane %v3515, 1
      %v3517 = vadd.f32 %v3515, %v3516
      %v3518 = vrcp.pop 64.0
      %v3519 = vmul.f32 %v2866, %v3518
      %v3520 = vmul.f32 %v2887, %v3518
      %v3521 = vmul.f32 %v2908, %v3518
      %v3522 = vmul.f32 %v2929, %v3518
      %v3523 = vmul.f32 %v2950, %v3518
      %v3524 = vmul.f32 %v2971, %v3518
      %v3525 = vmul.f32 %v2992, %v3518
      %v3526 = vmul.f32 %v3013, %v3518
      %v3527 = vmul.f32 %v3034, %v3518
      %v3528 = vmul.f32 %v3055, %v3518
      %v3529 = vmul.f32 %v3076, %v3518
      %v3530 = vmul.f32 %v3097, %v3518
      %v3531 = vmul.f32 %v3118, %v3518
      %v3532 = vmul.f32 %v3139, %v3518
      %v3533 = vmul.f32 %v3160, %v3518
      %v3534 = vmul.f32 %v3181, %v3518
      %v3535 = vmul.f32 %v3202, %v3518
      %v3536 = vmul.f32 %v3223, %v3518
      %v3537 = vmul.f32 %v3244, %v3518
      %v3538 = vmul.f32 %v3265, %v3518
      %v3539 = vmul.f32 %v3286, %v3518
      %v3540 = vmul.f32 %v3307, %v3518
      %v3541 = vmul.f32 %v3328, %v3518
      %v3542 = vmul.f32 %v3349, %v3518
      %v3543 = vmul.f32 %v3370, %v3518
      %v3544 = vmul.f32 %v3391, %v3518
      %v3545 = vmul.f32 %v3412, %v3518
      %v3546 = vmul.f32 %v3433, %v3518
      %v3547 = vmul.f32 %v3454, %v3518
      %v3548 = vmul.f32 %v3475, %v3518
      %v3549 = vmul.f32 %v3496, %v3518
      %v3550 = vmul.f32 %v3517, %v3518
      %v3551 = vpack.c.bf16 %v3519, %v3519
      %v3552 = vpack.c.bf16 %v3520, %v3520
      %v3553 = vpack.c.bf16 %v3521, %v3521
      %v3554 = vpack.c.bf16 %v3522, %v3522
      %v3555 = vpack.c.bf16 %v3523, %v3523
      %v3556 = vpack.c.bf16 %v3524, %v3524
      %v3557 = vpack.c.bf16 %v3525, %v3525
      %v3558 = vpack.c.bf16 %v3526, %v3526
      %v3559 = vpack.c.bf16 %v3527, %v3527
      %v3560 = vpack.c.bf16 %v3528, %v3528
      %v3561 = vpack.c.bf16 %v3529, %v3529
      %v3562 = vpack.c.bf16 %v3530, %v3530
      %v3563 = vpack.c.bf16 %v3531, %v3531
      %v3564 = vpack.c.bf16 %v3532, %v3532
      %v3565 = vpack.c.bf16 %v3533, %v3533
      %v3566 = vpack.c.bf16 %v3534, %v3534
      %v3567 = vpack.c.bf16 %v3535, %v3535
      %v3568 = vpack.c.bf16 %v3536, %v3536
      %v3569 = vpack.c.bf16 %v3537, %v3537
      %v3570 = vpack.c.bf16 %v3538, %v3538
      %v3571 = vpack.c.bf16 %v3539, %v3539
      %v3572 = vpack.c.bf16 %v3540, %v3540
      %v3573 = vpack.c.bf16 %v3541, %v3541
      %v3574 = vpack.c.bf16 %v3542, %v3542
      %v3575 = vpack.c.bf16 %v3543, %v3543
      %v3576 = vpack.c.bf16 %v3544, %v3544
      %v3577 = vpack.c.bf16 %v3545, %v3545
      %v3578 = vpack.c.bf16 %v3546, %v3546
      %v3579 = vpack.c.bf16 %v3547, %v3547
      %v3580 = vpack.c.bf16 %v3548, %v3548
      %v3581 = vpack.c.bf16 %v3549, %v3549
      %v3582 = vpack.c.bf16 %v3550, %v3550
      %v3583 = vld [vmem:[%s3] sm:$0xf]
      %v3584 = vld [vmem:[%s3 + $0x4] sm:$0xf]
      %v3585 = vld [vmem:[%s3 + $0x8] sm:$0xf]
      %v3586 = vld [vmem:[%s3 + $0xc] sm:$0xf]
      %v3587 = vld [vmem:[%s4] sm:$0x1]
      %v3589 = vlaneseq
      %v3590 = vshrl.u32 %v3589, 7
      %v3591 = vsub.s32 0, %v3590
      %v3592 = vrot.slane %v3587, %v3591
      %v3626 = vunpack.c.l.b16 %v3551
      %v3627 = vunpack.c.l.b16 %v3552
      %v3628 = vunpack.c.l.b16 %v3553
      %v3629 = vunpack.c.l.b16 %v3554
      %v3630 = vunpack.c.l.b16 %v3555
      %v3631 = vunpack.c.l.b16 %v3556
      %v3632 = vunpack.c.l.b16 %v3557
      %v3633 = vunpack.c.l.b16 %v3558
      %v3634 = vunpack.c.l.b16 %v3559
      %v3635 = vunpack.c.l.b16 %v3560
      %v3636 = vunpack.c.l.b16 %v3561
      %v3637 = vunpack.c.l.b16 %v3562
      %v3638 = vunpack.c.l.b16 %v3563
      %v3639 = vunpack.c.l.b16 %v3564
      %v3640 = vunpack.c.l.b16 %v3565
      %v3641 = vunpack.c.l.b16 %v3566
      %v3642 = vunpack.c.l.b16 %v3567
      %v3643 = vunpack.c.l.b16 %v3568
      %v3644 = vunpack.c.l.b16 %v3569
      %v3645 = vunpack.c.l.b16 %v3570
      %v3646 = vunpack.c.l.b16 %v3571
      %v3647 = vunpack.c.l.b16 %v3572
      %v3648 = vunpack.c.l.b16 %v3573
      %v3649 = vunpack.c.l.b16 %v3574
      %v3650 = vunpack.c.l.b16 %v3575
      %v3651 = vunpack.c.l.b16 %v3576
      %v3652 = vunpack.c.l.b16 %v3577
      %v3653 = vunpack.c.l.b16 %v3578
      %v3654 = vunpack.c.l.b16 %v3579
      %v3655 = vunpack.c.l.b16 %v3580
      %v3656 = vunpack.c.l.b16 %v3581
      %v3657 = vunpack.c.l.b16 %v3582
      %vm3658 = vcmask 1041409
      %v3659 = vsel %vm3658, %v3627, %v3626
      %vm3660 = vcmask 1042434
      %v3661 = vsel %vm3660, %v3628, %v3659
      %vm3662 = vcmask 1043459
      %v3663 = vsel %vm3662, %v3629, %v3661
      %vm3664 = vcmask 1044484
      %v3665 = vsel %vm3664, %v3630, %v3663
      %vm3666 = vcmask 1045509
      %v3667 = vsel %vm3666, %v3631, %v3665
      %vm3668 = vcmask 1046534
      %v3669 = vsel %vm3668, %v3632, %v3667
      %vm3670 = vcmask 1047559
      %v3671 = vsel %vm3670, %v3633, %v3669
      %v3672 = vsel %vm3658, %v3635, %v3634
      %v3673 = vsel %vm3660, %v3636, %v3672
      %v3674 = vsel %vm3662, %v3637, %v3673
      %v3675 = vsel %vm3664, %v3638, %v3674
      %v3676 = vsel %vm3666, %v3639, %v3675
      %v3677 = vsel %vm3668, %v3640, %v3676
      %v3678 = vsel %vm3670, %v3641, %v3677
      %v3679 = vsel %vm3658, %v3643, %v3642
      %v3680 = vsel %vm3660, %v3644, %v3679
      %v3681 = vsel %vm3662, %v3645, %v3680
      %v3682 = vsel %vm3664, %v3646, %v3681
      %v3683 = vsel %vm3666, %v3647, %v3682
      %v3684 = vsel %vm3668, %v3648, %v3683
      %v3685 = vsel %vm3670, %v3649, %v3684
      %v3686 = vsel %vm3658, %v3651, %v3650
      %v3687 = vsel %vm3660, %v3652, %v3686
      %v3688 = vsel %vm3662, %v3653, %v3687
      %v3689 = vsel %vm3664, %v3654, %v3688
      %v3690 = vsel %vm3666, %v3655, %v3689
      %v3691 = vsel %vm3668, %v3656, %v3690
      %v3692 = vsel %vm3670, %v3657, %v3691
      %v3693 = vpack.c.b16 %v3678, %v3671
      %v3694 = vpack.c.b16 %v3692, %v3685
      %v3699 = vunpack.c.l.b16 %v3583
      %v3700 = vunpack.c.l.b16 %v3584
      %v3701 = vunpack.c.l.b16 %v3585
      %v3702 = vunpack.c.l.b16 %v3586
      %v3703 = vpack.c.b16 %v3700, %v3699
      %v3704 = vpack.c.b16 %v3702, %v3701
      %v3708 = vsel %vm1148, %v3693, 0
      %v3711 = vsel %vm1148, %v3694, 0
      %3713 = vmatprep.subr.bf16.mxu0 0
      %3714 = vmatpush1.bf16.msra.mxu0 0
      %3715 = vmatprep.subr.bf16.mxu0 0
      %3716 = vmatpush1.bf16.msra.mxu0 0
      %3717 = vmatprep.subr.bf16.mxu0 0
      %3718 = vmatpush1.bf16.msra.mxu0 0
      %3719 = vmatprep.subr.bf16.mxu0 0
      %3720 = vmatpush1.bf16.msra.mxu0 0
      %3721 = vmatprep.subr.bf16.mxu0 0
      %3722 = vmatpush1.bf16.msra.mxu0 0
      %3723 = vmatprep.subr.bf16.mxu0 0
      %3724 = vmatpush1.bf16.msra.mxu0 0
      %3725 = vmatprep.subr.bf16.mxu0 0
      %3726 = vmatpush1.bf16.msra.mxu0 %v3704
      %3727 = vmatprep.subr.bf16.mxu0 0
      %3728 = vmatpush1.bf16.msra.mxu0 %v3703
      %3729 = vmatprep.subr.bf16.mxu0 0
      %3730 = vmatpush2.bf16.msra.mxu0 0
      %3731 = vmatprep.subr.bf16.mxu0 0
      %3732 = vmatpush2.bf16.msra.mxu0 0
      %3733 = vmatprep.subr.bf16.mxu0 0
      %3734 = vmatpush2.bf16.msra.mxu0 0
      %3735 = vmatprep.subr.bf16.mxu0 0
      %3736 = vmatpush2.bf16.msra.mxu0 0
      %3737 = vmatprep.subr.bf16.mxu0 0
      %3738 = vmatpush2.bf16.msra.mxu0 0
      %3739 = vmatprep.subr.bf16.mxu0 0
      %3740 = vmatpush2.bf16.msra.mxu0 0
      %3741 = vmatprep.subr.bf16.mxu0 0
      %3742 = vmatpush2.bf16.msra.mxu0 0
      %3743 = vmatprep.subr.bf16.mxu0 0
      %3744 = vmatpush2.bf16.msra.mxu0 0
      %3745 = vmatprep.mubr.bf16.mxu0 0
      %3746 = vmatmul.mubr.bf16.gmra.mxu0 %v3708
      %v3747 = vpop.f32.mrf.mxu0
      %v3748 = vadd.f32 %v3592, %v3747
      %v3749 = vpop.f32.mrf.mxu0
      %v3750 = vpop.f32.mrf.mxu0
      %v3751 = vadd.f32 %v3592, %v3750
      %v3752 = vpop.f32.mrf.mxu0
      %3753 = vmatprep.mubr.bf16.mxu0 0
      %3754 = vmatmul.mubr.bf16.gmra.mxu0 %v3711
      %v3755 = vpop.f32.mrf.mxu0
      %v3756 = vadd.f32 %v3592, %v3755
      %v3757 = vpop.f32.mrf.mxu0
      %v3758 = vpop.f32.mrf.mxu0
      %v3759 = vadd.f32 %v3592, %v3758
      %v3760 = vpop.f32.mrf.mxu0
      %3761 = vdwg.mxu0
      %v3762 = vmul.f32 %v3748, %v3748
      %v3763 = vmul.f32 %v3751, %v3751
      %v3764 = vmul.f32 %v3756, %v3756
      %v3765 = vmul.f32 %v3759, %v3759
      %vm3766 = vcmask 523264
      %v3767 = vsel %vm3766, %v3762, 0.0
      %3768 = vadd.xlane.f32.xlu0 %v3767
      %v3769 = vpop.xlane.xlu0 %3768
      %v3770 = vsel %vm3766, %v3763, 0.0
      %3771 = vadd.xlane.f32.xlu0 %v3770
      %v3772 = vpop.xlane.xlu0 %3771
      %v3773 = vsel %vm3766, %v3764, 0.0
      %3774 = vadd.xlane.f32.xlu0 %v3773
      %v3775 = vpop.xlane.xlu0 %3774
      %v3776 = vsel %vm3766, %v3765, 0.0
      %3777 = vadd.xlane.f32.xlu0 %v3776
      %v3778 = vpop.xlane.xlu0 %3777
      %v3779 = vmax.f32 %v3769, 1e-24
      %v3780 = vmax.f32 %v3772, 1e-24
      %v3781 = vmax.f32 %v3775, 1e-24
      %v3782 = vmax.f32 %v3778, 1e-24
      %v3783 = vrsqrt.pop %v3779
      %v3784 = vrsqrt.pop %v3780
      %v3785 = vrsqrt.pop %v3781
      %v3786 = vrsqrt.pop %v3782
      %v3787 = vmul.f32 %v3748, %v3783
      %v3788 = vmul.f32 %v3751, %v3784
      %v3789 = vmul.f32 %v3756, %v3785
      %v3790 = vmul.f32 %v3759, %v3786
      %3791 = vst.msk [vmem:[%s226] sm:$0xff] %vm3766, %v3787
      %3792 = vst.msk [vmem:[%s226 + $0x8] sm:$0xff] %vm3766, %v3788
      %3793 = vst.msk [vmem:[%s226 + $0x10] sm:$0xff] %vm3766, %v3789
      %3794 = vst.msk [vmem:[%s226 + $0x18] sm:$0xff] %vm3766, %v3790
      %s3795 = smul.u32 4, %s16
      %p3796 = scmp.lt.s32.totalorder %s3795, 7
      %s3797 = scalar_select %p3796, %s3795, 7
      %s3798 = smul.addr %s3797, 8
      %s3799 = scalar_lea.vmem %s5, %s3798
      // Predicated region
      $region41: #{crw_forward.2} parent=39 // pred_check
        %p3800 = pneg %p144
      $region42: #{crw_forward.2} parent=39 // pred_check_branch
        %3802 = sbr.rel (%p3800) target = $region44
      $region43: #{crw_forward.2} parent=39 // pred_region
        %s3803 = smul.u32 4, %s16
      $region44: #{crw_forward.2} parent=39 // pred_fallthru
        _
    $region40: #{crw_forward.2} parent=5 // pred_fallthru
      _
    %p3804 = scmp.le.s32.totalorder 2, %s11
    // Predicated region
    $region45: #{crw_forward.2} parent=5 // pred_check
      %p3805 = pneg %p3804
    $region46: #{crw_forward.2} parent=5 // pred_check_branch
      %3807 = sbr.rel (%p3805) target = $region48
    $region47: #{crw_forward.2} parent=5 // pred_region
      %s3808 = ssub.s32 %s11, 2
      // Predicated region
      $region49: #{crw_forward.2} parent=47 // pred_check
        %p3809 = pneg %p150
      $region50: #{crw_forward.2} parent=47 // pred_check_branch
        %3811 = sbr.rel (%p3809) target = $region52
      $region51: #{crw_forward.2} parent=47 // pred_region
        %s3812 = smul.u32 4, %s17
        %p3813 = scmp.lt.s32.totalorder %s3812, 7
        %s3814 = scalar_select %p3813, %s3812, 7
        %s3815 = smul.addr %s3814, 8
        %s3816 = scalar_lea.vmem %s5, %s3815
      $region52: #{crw_forward.2} parent=47 // pred_fallthru
        _
    $region48: #{crw_forward.2} parent=5 // pred_fallthru
      _
  $region6: #{crw_forward.2} parent=0 // loop_footer
    %s15 = sadd.s32 1, %s11
  $region7: #{crw_forward.2} parent=0 // loop_footer_branch
    %10 = sbr.rel target = $region3
  $region8: #{crw_forward.2} parent=0 // loop_exit
    _

</llo_original>
